<compile_context>
chip_gen: v7x
topology: tpu7x:2x2x1
jax: 0.10.0
libtpu: 0.0.40
codegen_flags: <defaults>
</compile_context>

<pallas_src>
import functools

import jax
import jax.numpy as jnp
from jax.experimental import pallas as pl
from jax.experimental.pallas import tpu as pltpu

_EPS = 1e-5
_LANE = 128             # lane padding for filterset/channel dims (256 fully fills v6e/v7x MXU N)
_TILE_M_MATMUL = 512    # rows per grid step for matmul passes
_TILE_M_ELTWISE = 1024  # rows per grid step for pure elementwise epilogues


def _round_up(x, m):
    return (x + m - 1) // m * m


def _pick_tile_m(m, tile_m):
    return min(tile_m, _round_up(m, 8))


@functools.lru_cache(maxsize=None)
def _vmem_limit_bytes():
    # Per-generation scoped-VMEM budget: ~3/4 of capacity clamped to [32, 96] MiB
    # (v5e/v6e: 128 MiB physical -> 96 MiB; v7x: 64 MiB per TC -> 48 MiB).
    try:
        get_info = getattr(pltpu, "get_tpu_info", None)
        cap = int(getattr(get_info(), "vmem_capacity_bytes", 0)) if get_info else 0
    except Exception:
        cap = 0
    if cap <= 0:
        return 32 * 1024 * 1024
    return max(32 * 1024 * 1024, min(cap * 3 // 4, 96 * 1024 * 1024))


def _cparams(semantics):
    return pltpu.CompilerParams(dimension_semantics=semantics,
                                vmem_limit_bytes=_vmem_limit_bytes())


# ----------------------------- kernels -------------------------------------

def _conv_stats_kernel(x_ref, w_ref, u_ref, stats_ref, *, m_total):
    """u = x @ w (bf16 in, bf16 out) + per-block partial per-channel sum / sum-of-squares."""
    i = pl.program_id(0)
    u = jnp.dot(x_ref[...], w_ref[...], preferred_element_type=jnp.float32)
    u_ref[...] = u.astype(u_ref.dtype)

    # Mask rows past the true M (grid padding) so batch statistics stay exact.
    tm = u.shape[0]
    row = i * tm + jax.lax.broadcasted_iota(jnp.int32, u.shape, 0)
    um = jnp.where(row < m_total, u, 0.0)
    stats_ref[0, 0:1, :] = jnp.sum(um, axis=0, keepdims=True)
    stats_ref[0, 1:2, :] = jnp.sum(um * um, axis=0, keepdims=True)


def _conv3x3_img_kernel(x_ref, bn_ref, w_ref, u_ref, stats_ref, pad_ref,
                        *, ho, wo, apply_bn_relu):
    """In-kernel stride-1 3x3 conv over one image: (optional fused BN+ReLU of the
    previous layer's raw conv output) -> zero-padded VMEM slab -> 9 tap matmuls."""
    cin = x_ref.shape[3]
    fs = w_ref.shape[1]

    xin = x_ref[0].astype(jnp.float32)                       # (ho, wo, cin)
    if apply_bn_relu:
        xin = jnp.maximum(xin * bn_ref[0:1, :] + bn_ref[1:2, :], 0.0)

    pad_ref[...] = jnp.zeros_like(pad_ref)
    pad_ref[1:ho + 1, 1:wo + 1, :] = xin.astype(pad_ref.dtype)

    acc = jnp.zeros((ho * wo, fs), jnp.float32)
    for dy in range(3):
        for dx in range(3):
            tap = dy * 3 + dx
            patch = pad_ref[dy:dy + ho, dx:dx + wo, :].reshape(ho * wo, cin)
            acc = acc + jnp.dot(patch, w_ref[tap * cin:(tap + 1) * cin, :],
                                preferred_element_type=jnp.float32)

    u_ref[0] = acc.astype(u_ref.dtype)
    stats_ref[0, 0:1, :] = jnp.sum(acc, axis=0, keepdims=True)
    stats_ref[0, 1:2, :] = jnp.sum(acc * acc, axis=0, keepdims=True)


def _bn_topk_conv_kernel(u_ref, bn1_ref, w2_ref, v_ref, stats_ref, l1_ref,
                         *, k, m_total, fs_real):
    """BN1 apply (precomputed scale/shift), top-k sparsify, 1x1 conv; per-block partial
    per-channel stats of the conv output and per-channel L1 of the sparse codes."""
    i = pl.program_id(0)
    un = u_ref[...].astype(jnp.float32) * bn1_ref[0:1, :] + bn1_ref[1:2, :]
    tm, fs_pad = un.shape

    row = i * tm + jax.lax.broadcasted_iota(jnp.int32, un.shape, 0)
    col = jax.lax.broadcasted_iota(jnp.int32, un.shape, 1)
    valid = (row < m_total) & (col < fs_real)                 # drop pad rows / pad filters
    un_m = jnp.where(valid, un, -jnp.inf)

    # k-th largest per row: peel off exactly one (lowest-index) maximum (k-1) times.
    # Values tied with the k-th value are all kept (torch.topk keeps exactly k).
    # TODO(synk): for large k replace with a fixed-iteration threshold search.
    work = un_m
    for _ in range(k - 1):
        row_max = jnp.max(work, axis=-1, keepdims=True)
        first = jnp.min(jnp.where(work == row_max, col, fs_pad),
                        axis=-1, keepdims=True)
        work = jnp.where(col == first, -jnp.inf, work)
    kth = jnp.max(work, axis=-1, keepdims=True)
    keep = valid & (un_m >= kth)
    s = jnp.where(keep, un, 0.0)

    l1_ref[0] = jnp.sum(jnp.abs(s), axis=0, keepdims=True)    # per-channel |s| partials

    v = jnp.dot(s.astype(jnp.bfloat16), w2_ref[...],
                preferred_element_type=jnp.float32)
    v_ref[...] = v.astype(v_ref.dtype)
    stats_ref[0, 0:1, :] = jnp.sum(v, axis=0, keepdims=True)  # padded rows are exactly 0
    stats_ref[0, 1:2, :] = jnp.sum(v * v, axis=0, keepdims=True)


def _bn_add_relu_kernel(v_ref, bn_ref, x_ref, o_ref):
    y = v_ref[...].astype(jnp.float32) * bn_ref[0:1, :] + bn_ref[1:2, :]
    o_ref[...] = jnp.maximum(y + x_ref[...].astype(jnp.float32), 0.0).astype(o_ref.dtype)


def _bn_bn_add_relu_kernel(v_ref, bn_ref, sc_ref, bnsc_ref, o_ref):
    y = v_ref[...].astype(jnp.float32) * bn_ref[0:1, :] + bn_ref[1:2, :]
    s = sc_ref[...].astype(jnp.float32) * bnsc_ref[0:1, :] + bnsc_ref[1:2, :]
    o_ref[...] = jnp.maximum(y + s, 0.0).astype(o_ref.dtype)


# --------------------------- pallas_call wrappers ---------------------------

def _conv_with_stats(x2d, w, *, tile_m):
    """Row-tiled matmul (im2col 3x3 or 1x1 conv) + exact per-channel batch stats."""
    m, kd = x2d.shape
    c = w.shape[1]
    tm = _pick_tile_m(m, tile_m)
    g = pl.cdiv(m, tm)
    u, st = pl.pallas_call(
        functools.partial(_conv_stats_kernel, m_total=m),
        grid=(g,),
        in_specs=[pl.BlockSpec((tm, kd), lambda i: (i, 0)),
                  pl.BlockSpec((kd, c), lambda i: (0, 0))],
        out_specs=(pl.BlockSpec((tm, c), lambda i: (i, 0)),
                   pl.BlockSpec((1, 2, c), lambda i: (i, 0, 0))),
        out_shape=(jax.ShapeDtypeStruct((m, c), jnp.bfloat16),
                   jax.ShapeDtypeStruct((g, 2, c), jnp.float32)),
        compiler_params=_cparams(("parallel",)),
    )(x2d, w)
    return u, jnp.sum(st, axis=0)


def _conv3x3_img(x_img, prev_bn, w1flat, *, apply_bn_relu):
    """Per-image in-kernel stride-1 3x3 conv (pad=1) with exact per-channel batch stats.
    TODO(synk): tile over output-row blocks (halo DMA) for large images instead of whole-image."""
    n, h, w, cin = x_img.shape
    fs = w1flat.shape[1]
    ho, wo = h, w
    u3, st = pl.pallas_call(
        functools.partial(_conv3x3_img_kernel, ho=ho, wo=wo,
                          apply_bn_relu=apply_bn_relu),
        grid=(n,),
        in_specs=[pl.BlockSpec((1, h, w, cin), lambda i: (i, 0, 0, 0)),
                  pl.BlockSpec((2, cin), lambda i: (0, 0)),
                  pl.BlockSpec((9 * cin, fs), lambda i: (0, 0))],
        out_specs=(pl.BlockSpec((1, ho * wo, fs), lambda i: (i, 0, 0)),
                   pl.BlockSpec((1, 2, fs), lambda i: (i, 0, 0))),
        out_shape=(jax.ShapeDtypeStruct((n, ho * wo, fs), jnp.bfloat16),
                   jax.ShapeDtypeStruct((n, 2, fs), jnp.float32)),
        scratch_shapes=[pltpu.VMEM((h + 2, w + 2, cin), jnp.bfloat16)],
        compiler_params=_cparams(("parallel",)),
    )(x_img, prev_bn, w1flat)
    return u3.reshape(n * ho * wo, fs), jnp.sum(st, axis=0), ho, wo


def _bn_topk_conv(u, bn1, w2, *, k, fs_real, tile_m):
    m, fs = u.shape
    c = w2.shape[1]
    tm = _pick_tile_m(m, tile_m)
    g = pl.cdiv(m, tm)
    v, st, l1 = pl.pallas_call(
        functools.partial(_bn_topk_conv_kernel, k=k, m_total=m, fs_real=fs_real),
        grid=(g,),
        in_specs=[pl.BlockSpec((tm, fs), lambda i: (i, 0)),
                  pl.BlockSpec((2, fs), lambda i: (0, 0)),
                  pl.BlockSpec((fs, c), lambda i: (0, 0))],
        out_specs=(pl.BlockSpec((tm, c), lambda i: (i, 0)),
                   pl.BlockSpec((1, 2, c), lambda i: (i, 0, 0)),
                   pl.BlockSpec((1, 1, fs), lambda i: (i, 0, 0))),
        out_shape=(jax.ShapeDtypeStruct((m, c), jnp.bfloat16),
                   jax.ShapeDtypeStruct((g, 2, c), jnp.float32),
                   jax.ShapeDtypeStruct((g, 1, fs), jnp.float32)),
        compiler_params=_cparams(("parallel",)),
    )(u, bn1, w2)
    return v, jnp.sum(st, axis=0), jnp.sum(l1, axis=0)


def _run_rowwise(kernel, arrays, tiled, out_dtype, out_cols, *, tile_m):
    """Elementwise epilogue passes: row-tiled arrays + small whole-array BN params."""
    m = arrays[0].shape[0]
    tm = _pick_tile_m(m, tile_m)
    grid = (pl.cdiv(m, tm),)
    in_specs = []
    for a, t in zip(arrays, tiled):
        if t:
            in_specs.append(pl.BlockSpec((tm, a.shape[1]), lambda i: (i, 0)))
        else:
            in_specs.append(pl.BlockSpec(tuple(a.shape), lambda i: (0, 0)))  # 2D params
    return pl.pallas_call(
        kernel,
        grid=grid,
        in_specs=in_specs,
        out_specs=pl.BlockSpec((tm, out_cols), lambda i: (i, 0)),
        out_shape=jax.ShapeDtypeStruct((m, out_cols), out_dtype),
        compiler_params=_cparams(("parallel",)),
    )(*arrays)


# ------------------------------ glue ----------------------------------------

def _im2col_3x3(x_nhwc, stride, pad=1):
    # Only used for stride != 1 convs (see TODO at top of file).
    n, h, w, c = x_nhwc.shape
    xp = jnp.pad(x_nhwc, ((0, 0), (pad, pad), (pad, pad), (0, 0)))
    ho = (h + 2 * pad - 3) // stride + 1
    wo = (w + 2 * pad - 3) // stride + 1
    cols = []
    for dy in range(3):
        for dx in range(3):
            cols.append(xp[:, dy:dy + stride * (ho - 1) + 1:stride,
                           dx:dx + stride * (wo - 1) + 1:stride, :])
    patches = jnp.concatenate(cols, axis=-1)                 # (N, Ho, Wo, 9*C)
    return patches.reshape(n * ho * wo, 9 * c), ho, wo


def _pad_vec(v, n):
    return jnp.pad(v, (0, n - v.shape[0])).astype(jnp.float32)


def _prep_sparse_params(p, *, cin_real, cin_pad):
    """Lane-pad a SparseCodingLayer's parameters to multiples of _LANE (zeros keep padded
    channels exactly 0 through conv/BN, and they are masked out of the top-k)."""
    fs_real = p["w1"].shape[1]
    cout_real = p["w2"].shape[1]
    fs_pad = _round_up(fs_real, _LANE)
    cout_pad = _round_up(cout_real, _LANE)
    w1 = p["w1"].reshape(3, 3, cin_real, fs_real)
    w1 = jnp.pad(w1, ((0, 0), (0, 0), (0, cin_pad - cin_real), (0, fs_pad - fs_real)))
    w1 = w1.reshape(9 * cin_pad, fs_pad).astype(jnp.bfloat16)
    w2 = jnp.pad(p["w2"], ((0, fs_pad - fs_real), (0, cout_pad - cout_real))
                 ).astype(jnp.bfloat16)
    return dict(
        w1=w1, w2=w2,
        g1=_pad_vec(p["g1"], fs_pad), b1=_pad_vec(p["b1"], fs_pad),
        g2=_pad_vec(p["g2"], cout_pad), b2=_pad_vec(p["b2"], cout_pad),
        fs_real=fs_real,
    )


def _bn_scale_shift(stats, count, gamma, beta):
    # TODO(synk): E[x^2]-E[x]^2 in f32 can cancel for very large, non-centered batches.
    mean = stats[0] / count
    var = jnp.maximum(stats[1] / count - mean * mean, 0.0)
    scale = gamma * jax.lax.rsqrt(var + _EPS)
    shift = beta - mean * scale
    return jnp.stack([scale, shift]).astype(jnp.float32)     # (2, C)


def _sparse_coding_layer(x_img, p, *, stride, k, prev_bn=None, tile_m=_TILE_M_MATMUL):
    """x_img: NHWC image.  If prev_bn is given, x_img is the previous layer's *raw* conv
    output and prev_bn's scale/shift + ReLU are fused into this layer's conv prologue.
    Returns (v_raw, bn2_scale_shift, aux_loss, (ho, wo)); BN2+ReLU is applied by the
    caller so the residual/shortcut epilogue fuses into one final pass."""
    n = x_img.shape[0]
    fs_real = p["fs_real"]

    if stride == 1:
        cin = x_img.shape[-1]
        bn_in = prev_bn if prev_bn is not None else jnp.concatenate(
            [jnp.ones((1, cin), jnp.float32), jnp.zeros((1, cin), jnp.float32)], axis=0)
        u, st1, ho, wo = _conv3x3_img(x_img.astype(jnp.bfloat16), bn_in, p["w1"],
                                      apply_bn_relu=prev_bn is not None)
    else:
        assert prev_bn is None
        patches, ho, wo = _im2col_3x3(x_img.astype(jnp.bfloat16), stride)
        u, st1 = _conv_with_stats(patches, p["w1"], tile_m=tile_m)

    m = n * ho * wo
    bn1 = _bn_scale_shift(st1, m, p["g1"], p["b1"])
    v, st2, l1 = _bn_topk_conv(u, bn1, p["w2"], k=k, fs_real=fs_real, tile_m=tile_m)
    bn2 = _bn_scale_shift(st2, m, p["g2"], p["b2"])
    aux = jnp.sum(l1) / (m * fs_real)
    return v, bn2, aux, (ho, wo)


def basic_block_sparse_forward(x_nchw, params, *, stride, k):
    x = jnp.transpose(x_nchw, (0, 2, 3, 1)).astype(jnp.float32)   # NCHW -> NHWC
    n, h, w, cin = x.shape

    c0_real = params["rf0"]["w2"].shape[1]
    c1_real = params["rf1"]["w2"].shape[1]
    rf0 = _prep_sparse_params(params["rf0"], cin_real=cin, cin_pad=cin)
    c0_pad = rf0["w2"].shape[1]
    rf1 = _prep_sparse_params(params["rf1"], cin_real=c0_real, cin_pad=c0_pad)
    c1_pad = rf1["w2"].shape[1]

    # residual_function_0: conv3x3(stride)+BN+topk+conv1x1; its BN+ReLU epilogue is
    # fused into residual_function_1's conv prologue (no out0 HBM round trip).
    v0, bn0, aux0, (ho, wo) = _sparse_coding_layer(x, rf0, stride=stride, k=k)
    v0_img = v0.reshape(n, ho, wo, c0_pad)
    v1, bn1f, aux1, _ = _sparse_coding_layer(v0_img, rf1, stride=1, k=k, prev_bn=bn0)

    m = n * ho * wo
    if "shortcut" in params:
        ps = params["shortcut"]
        w_sc = jnp.pad(ps["w"], ((0, 0), (0, c1_pad - c1_real))).astype(jnp.bfloat16)
        xs = x[:, ::stride, ::stride, :].reshape(m, cin).astype(jnp.bfloat16)
        sc, st_sc = _conv_with_stats(xs, w_sc, tile_m=_TILE_M_MATMUL)
        bnsc = _bn_scale_shift(st_sc, m, _pad_vec(ps["g"], c1_pad),
                               _pad_vec(ps["b"], c1_pad))
        out = _run_rowwise(_bn_bn_add_relu_kernel, [v1, bn1f, sc, bnsc],
                           [True, False, True, False], jnp.float32, c1_pad,
                           tile_m=_TILE_M_ELTWISE)
    else:
        xs = jnp.pad(x.reshape(m, cin), ((0, 0), (0, c1_pad - cin)))
        out = _run_rowwise(_bn_add_relu_kernel, [v1, bn1f, xs],
                           [True, False, True], jnp.float32, c1_pad,
                           tile_m=_TILE_M_ELTWISE)

    out = out.reshape(n, ho, wo, c1_pad)[..., :c1_real]
    out = jnp.transpose(out, (0, 3, 1, 2))                        # NHWC -> NCHW
    return out, [aux0, aux1]


def init_params(key, in_channels, out_channels, filter_set_mult, k_div, stride):
    expansion = 1  # BasicBlock.expansion
    fs0 = round(int(out_channels * filter_set_mult))
    fs1 = round(int(out_channels * expansion * filter_set_mult))
    k0, k1, k2 = jax.random.split(key, 3)

    def layer(kk, cin, cout, fs):
        ka, kb = jax.random.split(kk)
        return dict(
            # HWIO (3,3,cin,fs) flattened to (9*cin, fs) — (dy,dx,cin)-major patch order
            w1=jax.random.normal(ka, (9 * cin, fs), jnp.float32) * 0.1,
            g1=jnp.ones((fs,), jnp.float32),
            b1=jnp.zeros((fs,), jnp.float32),
            w2=jax.random.normal(kb, (fs, cout), jnp.float32) * 0.1,
            g2=jnp.ones((cout,), jnp.float32),
            b2=jnp.zeros((cout,), jnp.float32),
        )

    params = dict(
        rf0=layer(k0, in_channels, out_channels, fs0),
        rf1=layer(k1, out_channels, out_channels * expansion, fs1),
    )
    if stride != 1 or in_channels != expansion * out_channels:
        cout = out_channels * expansion
        params["shortcut"] = dict(
            w=jax.random.normal(k2, (in_channels, cout), jnp.float32) * 0.1,
            g=jnp.ones((cout,), jnp.float32),
            b=jnp.zeros((cout,), jnp.float32),
        )
    return params


if __name__ == "__main__":
    key = jax.random.PRNGKey(0)

    def run(in_channels, out_channels, stride, hw=16, batch=2):
        filter_set_mult, k_div = 2.0, 2.0
        k = round(int(out_channels / k_div))
        pkey, xkey = jax.random.split(jax.random.fold_in(key, stride))
        params = init_params(pkey, in_channels, out_channels,
                             filter_set_mult, k_div, stride)
        x = jax.random.normal(xkey, (batch, in_channels, hw, hw), jnp.float32)
        fwd = jax.jit(functools.partial(basic_block_sparse_forward,
                                        stride=stride, k=k))
        out, aux = fwd(x, params)
        jax.block_until_ready(out)
        jax.block_until_ready(aux)
        assert out.shape == (batch, out_channels, hw // stride, hw // stride), out.shape
        assert len(aux) == 2
        return out

    run(4, 8, 2)   # strided block + projection shortcut (im2col conv path for rf0)
    run(8, 8, 1)   # stride-1 block + identity shortcut (in-kernel 3x3 conv path for rf0)
    print("KERNEL_OK")
</pallas_src>

<mosaic_0001>
module attributes {stable_mosaic.version = 11 : i64} {
  func.func @_conv_stats_kernel(%arg0: i32, %arg1: memref<128x36xbf16, #tpu.memory_space<vmem>>, %arg2: memref<36x128xbf16, #tpu.memory_space<vmem>>, %arg3: memref<128x128xbf16, #tpu.memory_space<vmem>>, %arg4: memref<1x2x128xf32, #tpu.memory_space<vmem>>) attributes {dimension_semantics = [#tpu.dimension_semantics<parallel>], iteration_bounds = array<i64: 1>, scalar_prefetch = 0 : i64, scratch_operands = 0 : i64, tpu.core_type = #tpu.core_type<tc>, window_params = [{transform_indices = @transform_0, window_bounds = array<i64: 128, 36>}, {pipeline_mode = #tpu.pipeline_mode<synchronous>, transform_indices = @transform_1, window_bounds = array<i64: 36, 128>}, {transform_indices = @transform_2, window_bounds = array<i64: 128, 128>}, {transform_indices = @transform_3, window_bounds = array<i64: 1, 2, 128>}]} {
    %c0 = arith.constant 0 : index
    %c0_0 = arith.constant 0 : index
    %0 = vector.load %arg1[%c0, %c0_0] : memref<128x36xbf16, #tpu.memory_space<vmem>>, vector<128x36xbf16>
    %c0_1 = arith.constant 0 : index
    %c0_2 = arith.constant 0 : index
    %1 = vector.load %arg2[%c0_1, %c0_2] : memref<36x128xbf16, #tpu.memory_space<vmem>>, vector<36x128xbf16>
    %cst = arith.constant dense<0.000000e+00> : vector<128x128xf32>
    %2 = tpu.matmul %0, %1, %cst {dimension_numbers = #tpu.dot_dimension_numbers<[1], [0], [0], [1], [0, 0, 1, 1], [], []>} : vector<128x36xbf16>, vector<36x128xbf16>, vector<128x128xf32> -> vector<128x128xf32>
    %3 = arith.truncf %2 : vector<128x128xf32> to vector<128x128xbf16>
    %c0_3 = arith.constant 0 : index
    %c0_4 = arith.constant 0 : index
    %4 = vector.load %arg3[%c0_3, %c0_4] : memref<128x128xbf16, #tpu.memory_space<vmem>>, vector<128x128xbf16>
    tpu.vector_store %arg3[%c0_3, %c0_4], %3 {strides = array<i32>} : memref<128x128xbf16, #tpu.memory_space<vmem>>, vector<128x128xbf16>,
    %c128_i32 = arith.constant 128 : i32
    %5 = arith.muli %arg0, %c128_i32 : i32
    %6 = tpu.iota {dimensions = array<i32: 0>} : vector<128x128xi32>
    %7 = vector.broadcast %5 : i32 to vector<128x128xi32>
    %8 = arith.addi %7, %6 : vector<128x128xi32>
    %c128_i32_5 = arith.constant 128 : i32
    %9 = vector.broadcast %c128_i32_5 : i32 to vector<128x128xi32>
    %10 = arith.cmpi slt, %8, %9 : vector<128x128xi32>
    %cst_6 = arith.constant 0.000000e+00 : f32
    %11 = vector.broadcast %cst_6 : f32 to vector<128x128xf32>
    %12 = arith.select %10, %2, %11 : vector<128x128xi1>, vector<128x128xf32>
    %cst_7 = arith.constant dense<0.000000e+00> : vector<128xf32>
    %13 = vector.multi_reduction <add>, %12, %cst_7 [0] : vector<128x128xf32> to vector<128xf32>
    %14 = vector.shape_cast %13 : vector<128xf32> to vector<1x128xf32>
    %c0_8 = arith.constant 0 : index
    %c0_9 = arith.constant 0 : index
    %c0_10 = arith.constant 0 : index
    %15 = vector.load %arg4[%c0_8, %c0_9, %c0_10] : memref<1x2x128xf32, #tpu.memory_space<vmem>>, vector<1x1x128xf32>
    %16 = vector.shape_cast %15 : vector<1x1x128xf32> to vector<1x128xf32>
    %17 = vector.shape_cast %14 : vector<1x128xf32> to vector<1x1x128xf32>
    tpu.vector_store %arg4[%c0_8, %c0_9, %c0_10], %17 {strides = array<i32>} : memref<1x2x128xf32, #tpu.memory_space<vmem>>, vector<1x1x128xf32>,
    %18 = arith.mulf %12, %12 : vector<128x128xf32>
    %cst_11 = arith.constant dense<0.000000e+00> : vector<128xf32>
    %19 = vector.multi_reduction <add>, %18, %cst_11 [0] : vector<128x128xf32> to vector<128xf32>
    %20 = vector.shape_cast %19 : vector<128xf32> to vector<1x128xf32>
    %c0_12 = arith.constant 0 : index
    %c1 = arith.constant 1 : index
    %c0_13 = arith.constant 0 : index
    %21 = vector.load %arg4[%c0_12, %c1, %c0_13] : memref<1x2x128xf32, #tpu.memory_space<vmem>>, vector<1x1x128xf32>
    %22 = vector.shape_cast %21 : vector<1x1x128xf32> to vector<1x128xf32>
    %23 = vector.shape_cast %20 : vector<1x128xf32> to vector<1x1x128xf32>
    tpu.vector_store %arg4[%c0_12, %c1, %c0_13], %23 {strides = array<i32>} : memref<1x2x128xf32, #tpu.memory_space<vmem>>, vector<1x1x128xf32>,
    return
  }
  func.func @transform_0(%arg0: i32) -> (i32, i32) {
    %c0_i32 = arith.constant 0 : i32
    %c0_i32_0 = arith.constant 0 : i32
    return %arg0, %c0_i32 : i32, i32
  }
  func.func @transform_1(%arg0: i32) -> (i32, i32) {
    %c0_i32 = arith.constant 0 : i32
    %c0_i32_0 = arith.constant 0 : i32
    %c0_i32_1 = arith.constant 0 : i32
    return %c0_i32, %c0_i32_0 : i32, i32
  }
  func.func @transform_2(%arg0: i32) -> (i32, i32) {
    %c0_i32 = arith.constant 0 : i32
    %c0_i32_0 = arith.constant 0 : i32
    return %arg0, %c0_i32 : i32, i32
  }
  func.func @transform_3(%arg0: i32) -> (i32, i32, i32) {
    %c0_i32 = arith.constant 0 : i32
    %c0_i32_0 = arith.constant 0 : i32
    %c0_i32_1 = arith.constant 0 : i32
    return %arg0, %c0_i32, %c0_i32_0 : i32, i32, i32
  }
}

module attributes {stable_mosaic.version = 11 : i64} {
  func.func @_bn_topk_conv_kernel(%arg0: i32, %arg1: memref<128x128xbf16, #tpu.memory_space<vmem>>, %arg2: memref<2x128xf32, #tpu.memory_space<vmem>>, %arg3: memref<128x128xbf16, #tpu.memory_space<vmem>>, %arg4: memref<128x128xbf16, #tpu.memory_space<vmem>>, %arg5: memref<1x2x128xf32, #tpu.memory_space<vmem>>, %arg6: memref<1x1x128xf32, #tpu.memory_space<vmem>>) attributes {dimension_semantics = [#tpu.dimension_semantics<parallel>], iteration_bounds = array<i64: 1>, scalar_prefetch = 0 : i64, scratch_operands = 0 : i64, tpu.core_type = #tpu.core_type<tc>, window_params = [{transform_indices = @transform_0, window_bounds = array<i64: 128, 128>}, {pipeline_mode = #tpu.pipeline_mode<synchronous>, transform_indices = @transform_1, window_bounds = array<i64: 2, 128>}, {pipeline_mode = #tpu.pipeline_mode<synchronous>, transform_indices = @transform_2, window_bounds = array<i64: 128, 128>}, {transform_indices = @transform_3, window_bounds = array<i64: 128, 128>}, {transform_indices = @transform_4, window_bounds = array<i64: 1, 2, 128>}, {transform_indices = @transform_5, window_bounds = array<i64: 1, 1, 128>}]} {
    %c0 = arith.constant 0 : index
    %c0_0 = arith.constant 0 : index
    %0 = vector.load %arg1[%c0, %c0_0] : memref<128x128xbf16, #tpu.memory_space<vmem>>, vector<128x128xbf16>
    %1 = arith.extf %0 : vector<128x128xbf16> to vector<128x128xf32>
    %c0_1 = arith.constant 0 : index
    %c0_2 = arith.constant 0 : index
    %2 = vector.load %arg2[%c0_1, %c0_2] : memref<2x128xf32, #tpu.memory_space<vmem>>, vector<1x128xf32>
    %3 = vector.broadcast %2 : vector<1x128xf32> to vector<128x128xf32>
    %4 = arith.mulf %1, %3 : vector<128x128xf32>
    %c1 = arith.constant 1 : index
    %c0_3 = arith.constant 0 : index
    %5 = vector.load %arg2[%c1, %c0_3] : memref<2x128xf32, #tpu.memory_space<vmem>>, vector<1x128xf32>
    %6 = vector.broadcast %5 : vector<1x128xf32> to vector<128x128xf32>
    %7 = arith.addf %4, %6 : vector<128x128xf32>
    %c128_i32 = arith.constant 128 : i32
    %8 = arith.muli %arg0, %c128_i32 : i32
    %9 = tpu.iota {dimensions = array<i32: 0>} : vector<128x128xi32>
    %10 = vector.broadcast %8 : i32 to vector<128x128xi32>
    %11 = arith.addi %10, %9 : vector<128x128xi32>
    %12 = tpu.iota {dimensions = array<i32: 1>} : vector<128x128xi32>
    %c128_i32_4 = arith.constant 128 : i32
    %13 = vector.broadcast %c128_i32_4 : i32 to vector<128x128xi32>
    %14 = arith.cmpi slt, %11, %13 : vector<128x128xi32>
    %c16_i32 = arith.constant 16 : i32
    %15 = vector.broadcast %c16_i32 : i32 to vector<128x128xi32>
    %16 = arith.cmpi slt, %12, %15 : vector<128x128xi32>
    %17 = arith.andi %14, %16 : vector<128x128xi1>
    %cst = arith.constant 0xFF800000 : f32
    %18 = vector.broadcast %cst : f32 to vector<128x128xf32>
    %19 = arith.select %17, %7, %18 : vector<128x128xi1>, vector<128x128xf32>
    %cst_5 = arith.constant dense<0xFF800000> : vector<128xf32>
    %20 = vector.multi_reduction <maximumf>, %19, %cst_5 [1] : vector<128x128xf32> to vector<128xf32>
    %21 = vector.shape_cast %20 : vector<128xf32> to vector<128x1xf32>
    %22 = vector.broadcast %21 : vector<128x1xf32> to vector<128x128xf32>
    %23 = arith.cmpf oeq, %19, %22 : vector<128x128xf32>
    %c128_i32_6 = arith.constant 128 : i32
    %24 = vector.broadcast %c128_i32_6 : i32 to vector<128x128xi32>
    %25 = arith.select %23, %12, %24 : vector<128x128xi1>, vector<128x128xi32>
    %cst_7 = arith.constant dense<2147483647> : vector<128xi32>
    %26 = vector.multi_reduction <minsi>, %25, %cst_7 [1] : vector<128x128xi32> to vector<128xi32>
    %27 = vector.shape_cast %26 : vector<128xi32> to vector<128x1xi32>
    %28 = vector.broadcast %27 : vector<128x1xi32> to vector<128x128xi32>
    %29 = arith.cmpi eq, %12, %28 : vector<128x128xi32>
    %cst_8 = arith.constant 0xFF800000 : f32
    %30 = vector.broadcast %cst_8 : f32 to vector<128x128xf32>
    %31 = arith.select %29, %30, %19 : vector<128x128xi1>, vector<128x128xf32>
    %cst_9 = arith.constant dense<0xFF800000> : vector<128xf32>
    %32 = vector.multi_reduction <maximumf>, %31, %cst_9 [1] : vector<128x128xf32> to vector<128xf32>
    %33 = vector.shape_cast %32 : vector<128xf32> to vector<128x1xf32>
    %34 = vector.broadcast %33 : vector<128x1xf32> to vector<128x128xf32>
    %35 = arith.cmpf oeq, %31, %34 : vector<128x128xf32>
    %c128_i32_10 = arith.constant 128 : i32
    %36 = vector.broadcast %c128_i32_10 : i32 to vector<128x128xi32>
    %37 = arith.select %35, %12, %36 : vector<128x128xi1>, vector<128x128xi32>
    %cst_11 = arith.constant dense<2147483647> : vector<128xi32>
    %38 = vector.multi_reduction <minsi>, %37, %cst_11 [1] : vector<128x128xi32> to vector<128xi32>
    %39 = vector.shape_cast %38 : vector<128xi32> to vector<128x1xi32>
    %40 = vector.broadcast %39 : vector<128x1xi32> to vector<128x128xi32>
    %41 = arith.cmpi eq, %12, %40 : vector<128x128xi32>
    %cst_12 = arith.constant 0xFF800000 : f32
    %42 = vector.broadcast %cst_12 : f32 to vector<128x128xf32>
    %43 = arith.select %41, %42, %31 : vector<128x128xi1>, vector<128x128xf32>
    %cst_13 = arith.constant dense<0xFF800000> : vector<128xf32>
    %44 = vector.multi_reduction <maximumf>, %43, %cst_13 [1] : vector<128x128xf32> to vector<128xf32>
    %45 = vector.shape_cast %44 : vector<128xf32> to vector<128x1xf32>
    %46 = vector.broadcast %45 : vector<128x1xf32> to vector<128x128xf32>
    %47 = arith.cmpf oeq, %43, %46 : vector<128x128xf32>
    %c128_i32_14 = arith.constant 128 : i32
    %48 = vector.broadcast %c128_i32_14 : i32 to vector<128x128xi32>
    %49 = arith.select %47, %12, %48 : vector<128x128xi1>, vector<128x128xi32>
    %cst_15 = arith.constant dense<2147483647> : vector<128xi32>
    %50 = vector.multi_reduction <minsi>, %49, %cst_15 [1] : vector<128x128xi32> to vector<128xi32>
    %51 = vector.shape_cast %50 : vector<128xi32> to vector<128x1xi32>
    %52 = vector.broadcast %51 : vector<128x1xi32> to vector<128x128xi32>
    %53 = arith.cmpi eq, %12, %52 : vector<128x128xi32>
    %cst_16 = arith.constant 0xFF800000 : f32
    %54 = vector.broadcast %cst_16 : f32 to vector<128x128xf32>
    %55 = arith.select %53, %54, %43 : vector<128x128xi1>, vector<128x128xf32>
    %cst_17 = arith.constant dense<0xFF800000> : vector<128xf32>
    %56 = vector.multi_reduction <maximumf>, %55, %cst_17 [1] : vector<128x128xf32> to vector<128xf32>
    %57 = vector.shape_cast %56 : vector<128xf32> to vector<128x1xf32>
    %58 = vector.broadcast %57 : vector<128x1xf32> to vector<128x128xf32>
    %59 = arith.cmpf oge, %19, %58 : vector<128x128xf32>
    %60 = arith.andi %17, %59 : vector<128x128xi1>
    %cst_18 = arith.constant 0.000000e+00 : f32
    %61 = vector.broadcast %cst_18 : f32 to vector<128x128xf32>
    %62 = arith.select %60, %7, %61 : vector<128x128xi1>, vector<128x128xf32>
    %63 = math.absf %62 : vector<128x128xf32>
    %cst_19 = arith.constant dense<0.000000e+00> : vector<128xf32>
    %64 = vector.multi_reduction <add>, %63, %cst_19 [0] : vector<128x128xf32> to vector<128xf32>
    %65 = vector.shape_cast %64 : vector<128xf32> to vector<1x128xf32>
    %c0_20 = arith.constant 0 : index
    %c0_21 = arith.constant 0 : index
    %c0_22 = arith.constant 0 : index
    %66 = vector.load %arg6[%c0_20, %c0_21, %c0_22] : memref<1x1x128xf32, #tpu.memory_space<vmem>>, vector<1x1x128xf32>
    %67 = vector.shape_cast %66 : vector<1x1x128xf32> to vector<1x128xf32>
    %68 = vector.shape_cast %65 : vector<1x128xf32> to vector<1x1x128xf32>
    tpu.vector_store %arg6[%c0_20, %c0_21, %c0_22], %68 {strides = array<i32>} : memref<1x1x128xf32, #tpu.memory_space<vmem>>, vector<1x1x128xf32>,
    %69 = arith.truncf %62 : vector<128x128xf32> to vector<128x128xbf16>
    %c0_23 = arith.constant 0 : index
    %c0_24 = arith.constant 0 : index
    %70 = vector.load %arg3[%c0_23, %c0_24] : memref<128x128xbf16, #tpu.memory_space<vmem>>, vector<128x128xbf16>
    %cst_25 = arith.constant dense<0.000000e+00> : vector<128x128xf32>
    %71 = tpu.matmul %69, %70, %cst_25 {dimension_numbers = #tpu.dot_dimension_numbers<[1], [0], [0], [1], [0, 0, 1, 1], [], []>} : vector<128x128xbf16>, vector<128x128xbf16>, vector<128x128xf32> -> vector<128x128xf32>
    %72 = arith.truncf %71 : vector<128x128xf32> to vector<128x128xbf16>
    %c0_26 = arith.constant 0 : index
    %c0_27 = arith.constant 0 : index
    %73 = vector.load %arg4[%c0_26, %c0_27] : memref<128x128xbf16, #tpu.memory_space<vmem>>, vector<128x128xbf16>
    tpu.vector_store %arg4[%c0_26, %c0_27], %72 {strides = array<i32>} : memref<128x128xbf16, #tpu.memory_space<vmem>>, vector<128x128xbf16>,
    %cst_28 = arith.constant dense<0.000000e+00> : vector<128xf32>
    %74 = vector.multi_reduction <add>, %71, %cst_28 [0] : vector<128x128xf32> to vector<128xf32>
    %75 = vector.shape_cast %74 : vector<128xf32> to vector<1x128xf32>
    %c0_29 = arith.constant 0 : index
    %c0_30 = arith.constant 0 : index
    %c0_31 = arith.constant 0 : index
    %76 = vector.load %arg5[%c0_29, %c0_30, %c0_31] : memref<1x2x128xf32, #tpu.memory_space<vmem>>, vector<1x1x128xf32>
    %77 = vector.shape_cast %76 : vector<1x1x128xf32> to vector<1x128xf32>
    %78 = vector.shape_cast %75 : vector<1x128xf32> to vector<1x1x128xf32>
    tpu.vector_store %arg5[%c0_29, %c0_30, %c0_31], %78 {strides = array<i32>} : memref<1x2x128xf32, #tpu.memory_space<vmem>>, vector<1x1x128xf32>,
    %79 = arith.mulf %71, %71 : vector<128x128xf32>
    %cst_32 = arith.constant dense<0.000000e+00> : vector<128xf32>
    %80 = vector.multi_reduction <add>, %79, %cst_32 [0] : vector<128x128xf32> to vector<128xf32>
    %81 = vector.shape_cast %80 : vector<128xf32> to vector<1x128xf32>
    %c0_33 = arith.constant 0 : index
    %c1_34 = arith.constant 1 : index
    %c0_35 = arith.constant 0 : index
    %82 = vector.load %arg5[%c0_33, %c1_34, %c0_35] : memref<1x2x128xf32, #tpu.memory_space<vmem>>, vector<1x1x128xf32>
    %83 = vector.shape_cast %82 : vector<1x1x128xf32> to vector<1x128xf32>
    %84 = vector.shape_cast %81 : vector<1x128xf32> to vector<1x1x128xf32>
    tpu.vector_store %arg5[%c0_33, %c1_34, %c0_35], %84 {strides = array<i32>} : memref<1x2x128xf32, #tpu.memory_space<vmem>>, vector<1x1x128xf32>,
    return
  }
  func.func @transform_0(%arg0: i32) -> (i32, i32) {
    %c0_i32 = arith.constant 0 : i32
    %c0_i32_0 = arith.constant 0 : i32
    return %arg0, %c0_i32 : i32, i32
  }
  func.func @transform_1(%arg0: i32) -> (i32, i32) {
    %c0_i32 = arith.constant 0 : i32
    %c0_i32_0 = arith.constant 0 : i32
    %c0_i32_1 = arith.constant 0 : i32
    return %c0_i32, %c0_i32_0 : i32, i32
  }
  func.func @transform_2(%arg0: i32) -> (i32, i32) {
    %c0_i32 = arith.constant 0 : i32
    %c0_i32_0 = arith.constant 0 : i32
    %c0_i32_1 = arith.constant 0 : i32
    return %c0_i32, %c0_i32_0 : i32, i32
  }
  func.func @transform_3(%arg0: i32) -> (i32, i32) {
    %c0_i32 = arith.constant 0 : i32
    %c0_i32_0 = arith.constant 0 : i32
    return %arg0, %c0_i32 : i32, i32
  }
  func.func @transform_4(%arg0: i32) -> (i32, i32, i32) {
    %c0_i32 = arith.constant 0 : i32
    %c0_i32_0 = arith.constant 0 : i32
    %c0_i32_1 = arith.constant 0 : i32
    return %arg0, %c0_i32, %c0_i32_0 : i32, i32, i32
  }
  func.func @transform_5(%arg0: i32) -> (i32, i32, i32) {
    %c0_i32 = arith.constant 0 : i32
    %c0_i32_0 = arith.constant 0 : i32
    %c0_i32_1 = arith.constant 0 : i32
    return %arg0, %c0_i32, %c0_i32_0 : i32, i32, i32
  }
}

module attributes {stable_mosaic.version = 11 : i64} {
  func.func @_conv3x3_img_kernel(%arg0: i32, %arg1: memref<1x8x8x128xbf16, #tpu.memory_space<vmem>>, %arg2: memref<2x128xf32, #tpu.memory_space<vmem>>, %arg3: memref<1152x128xbf16, #tpu.memory_space<vmem>>, %arg4: memref<1x64x128xbf16, #tpu.memory_space<vmem>>, %arg5: memref<1x2x128xf32, #tpu.memory_space<vmem>>, %arg6: memref<10x10x128xbf16, #tpu.memory_space<vmem>>) attributes {dimension_semantics = [#tpu.dimension_semantics<parallel>], iteration_bounds = array<i64: 2>, scalar_prefetch = 0 : i64, scratch_operands = 1 : i64, tpu.core_type = #tpu.core_type<tc>, window_params = [{transform_indices = @transform_0, window_bounds = array<i64: 1, 8, 8, 128>}, {pipeline_mode = #tpu.pipeline_mode<synchronous>, transform_indices = @transform_1, window_bounds = array<i64: 2, 128>}, {pipeline_mode = #tpu.pipeline_mode<synchronous>, transform_indices = @transform_2, window_bounds = array<i64: 1152, 128>}, {transform_indices = @transform_3, window_bounds = array<i64: 1, 64, 128>}, {transform_indices = @transform_4, window_bounds = array<i64: 1, 2, 128>}]} {
    %c0 = arith.constant 0 : index
    %c0_0 = arith.constant 0 : index
    %c0_1 = arith.constant 0 : index
    %c0_2 = arith.constant 0 : index
    %0 = vector.load %arg1[%c0, %c0_0, %c0_1, %c0_2] : memref<1x8x8x128xbf16, #tpu.memory_space<vmem>>, vector<1x8x8x128xbf16>
    %1 = vector.shape_cast %0 : vector<1x8x8x128xbf16> to vector<8x8x128xbf16>
    %2 = arith.extf %1 : vector<8x8x128xbf16> to vector<8x8x128xf32>
    %c0_3 = arith.constant 0 : index
    %c0_4 = arith.constant 0 : index
    %3 = vector.load %arg2[%c0_3, %c0_4] : memref<2x128xf32, #tpu.memory_space<vmem>>, vector<1x128xf32>
    %4 = vector.shape_cast %3 : vector<1x128xf32> to vector<1x1x128xf32>
    %5 = vector.broadcast %4 : vector<1x1x128xf32> to vector<8x8x128xf32>
    %6 = arith.mulf %2, %5 : vector<8x8x128xf32>
    %c1 = arith.constant 1 : index
    %c0_5 = arith.constant 0 : index
    %7 = vector.load %arg2[%c1, %c0_5] : memref<2x128xf32, #tpu.memory_space<vmem>>, vector<1x128xf32>
    %8 = vector.shape_cast %7 : vector<1x128xf32> to vector<1x1x128xf32>
    %9 = vector.broadcast %8 : vector<1x1x128xf32> to vector<8x8x128xf32>
    %10 = arith.addf %6, %9 : vector<8x8x128xf32>
    %cst = arith.constant 0.000000e+00 : f32
    %11 = vector.broadcast %cst : f32 to vector<8x8x128xf32>
    %12 = arith.maximumf %10, %11 : vector<8x8x128xf32>
    %cst_6 = arith.constant 0.000000e+00 : bf16
    %13 = vector.broadcast %cst_6 : bf16 to vector<10x10x128xbf16>
    %c0_7 = arith.constant 0 : index
    %c0_8 = arith.constant 0 : index
    %c0_9 = arith.constant 0 : index
    %14 = vector.load %arg6[%c0_7, %c0_8, %c0_9] : memref<10x10x128xbf16, #tpu.memory_space<vmem>>, vector<10x10x128xbf16>
    tpu.vector_store %arg6[%c0_7, %c0_8, %c0_9], %13 {strides = array<i32>} : memref<10x10x128xbf16, #tpu.memory_space<vmem>>, vector<10x10x128xbf16>,
    %15 = arith.truncf %12 : vector<8x8x128xf32> to vector<8x8x128xbf16>
    %c1_10 = arith.constant 1 : index
    %c1_11 = arith.constant 1 : index
    %c0_12 = arith.constant 0 : index
    %16 = vector.load %arg6[%c1_10, %c1_11, %c0_12] : memref<10x10x128xbf16, #tpu.memory_space<vmem>>, vector<8x8x128xbf16>
    tpu.vector_store %arg6[%c1_10, %c1_11, %c0_12], %15 {strides = array<i32>} : memref<10x10x128xbf16, #tpu.memory_space<vmem>>, vector<8x8x128xbf16>,
    %cst_13 = arith.constant 0.000000e+00 : f32
    %17 = vector.broadcast %cst_13 : f32 to vector<64x128xf32>
    %c0_14 = arith.constant 0 : index
    %c0_15 = arith.constant 0 : index
    %c0_16 = arith.constant 0 : index
    %18 = vector.load %arg6[%c0_14, %c0_15, %c0_16] : memref<10x10x128xbf16, #tpu.memory_space<vmem>>, vector<8x8x128xbf16>
    %19 = vector.shape_cast %18 : vector<8x8x128xbf16> to vector<64x128xbf16>
    %c0_17 = arith.constant 0 : index
    %c0_18 = arith.constant 0 : index
    %20 = vector.load %arg3[%c0_17, %c0_18] : memref<1152x128xbf16, #tpu.memory_space<vmem>>, vector<128x128xbf16>
    %cst_19 = arith.constant dense<0.000000e+00> : vector<64x128xf32>
    %21 = tpu.matmul %19, %20, %cst_19 {dimension_numbers = #tpu.dot_dimension_numbers<[1], [0], [0], [1], [0, 0, 1, 1], [], []>} : vector<64x128xbf16>, vector<128x128xbf16>, vector<64x128xf32> -> vector<64x128xf32>
    %22 = arith.addf %17, %21 : vector<64x128xf32>
    %c0_20 = arith.constant 0 : index
    %c1_21 = arith.constant 1 : index
    %c0_22 = arith.constant 0 : index
    %23 = vector.load %arg6[%c0_20, %c1_21, %c0_22] : memref<10x10x128xbf16, #tpu.memory_space<vmem>>, vector<8x8x128xbf16>
    %24 = vector.shape_cast %23 : vector<8x8x128xbf16> to vector<64x128xbf16>
    %c128 = arith.constant 128 : index
    %c0_23 = arith.constant 0 : index
    %25 = vector.load %arg3[%c128, %c0_23] : memref<1152x128xbf16, #tpu.memory_space<vmem>>, vector<128x128xbf16>
    %cst_24 = arith.constant dense<0.000000e+00> : vector<64x128xf32>
    %26 = tpu.matmul %24, %25, %cst_24 {dimension_numbers = #tpu.dot_dimension_numbers<[1], [0], [0], [1], [0, 0, 1, 1], [], []>} : vector<64x128xbf16>, vector<128x128xbf16>, vector<64x128xf32> -> vector<64x128xf32>
    %27 = arith.addf %22, %26 : vector<64x128xf32>
    %c0_25 = arith.constant 0 : index
    %c2 = arith.constant 2 : index
    %c0_26 = arith.constant 0 : index
    %28 = vector.load %arg6[%c0_25, %c2, %c0_26] : memref<10x10x128xbf16, #tpu.memory_space<vmem>>, vector<8x8x128xbf16>
    %29 = vector.shape_cast %28 : vector<8x8x128xbf16> to vector<64x128xbf16>
    %c256 = arith.constant 256 : index
    %c0_27 = arith.constant 0 : index
    %30 = vector.load %arg3[%c256, %c0_27] : memref<1152x128xbf16, #tpu.memory_space<vmem>>, vector<128x128xbf16>
    %cst_28 = arith.constant dense<0.000000e+00> : vector<64x128xf32>
    %31 = tpu.matmul %29, %30, %cst_28 {dimension_numbers = #tpu.dot_dimension_numbers<[1], [0], [0], [1], [0, 0, 1, 1], [], []>} : vector<64x128xbf16>, vector<128x128xbf16>, vector<64x128xf32> -> vector<64x128xf32>
    %32 = arith.addf %27, %31 : vector<64x128xf32>
    %c1_29 = arith.constant 1 : index
    %c0_30 = arith.constant 0 : index
    %c0_31 = arith.constant 0 : index
    %33 = vector.load %arg6[%c1_29, %c0_30, %c0_31] : memref<10x10x128xbf16, #tpu.memory_space<vmem>>, vector<8x8x128xbf16>
    %34 = vector.shape_cast %33 : vector<8x8x128xbf16> to vector<64x128xbf16>
    %c384 = arith.constant 384 : index
    %c0_32 = arith.constant 0 : index
    %35 = vector.load %arg3[%c384, %c0_32] : memref<1152x128xbf16, #tpu.memory_space<vmem>>, vector<128x128xbf16>
    %cst_33 = arith.constant dense<0.000000e+00> : vector<64x128xf32>
    %36 = tpu.matmul %34, %35, %cst_33 {dimension_numbers = #tpu.dot_dimension_numbers<[1], [0], [0], [1], [0, 0, 1, 1], [], []>} : vector<64x128xbf16>, vector<128x128xbf16>, vector<64x128xf32> -> vector<64x128xf32>
    %37 = arith.addf %32, %36 : vector<64x128xf32>
    %c1_34 = arith.constant 1 : index
    %c1_35 = arith.constant 1 : index
    %c0_36 = arith.constant 0 : index
    %38 = vector.load %arg6[%c1_34, %c1_35, %c0_36] : memref<10x10x128xbf16, #tpu.memory_space<vmem>>, vector<8x8x128xbf16>
    %39 = vector.shape_cast %38 : vector<8x8x128xbf16> to vector<64x128xbf16>
    %c512 = arith.constant 512 : index
    %c0_37 = arith.constant 0 : index
    %40 = vector.load %arg3[%c512, %c0_37] : memref<1152x128xbf16, #tpu.memory_space<vmem>>, vector<128x128xbf16>
    %cst_38 = arith.constant dense<0.000000e+00> : vector<64x128xf32>
    %41 = tpu.matmul %39, %40, %cst_38 {dimension_numbers = #tpu.dot_dimension_numbers<[1], [0], [0], [1], [0, 0, 1, 1], [], []>} : vector<64x128xbf16>, vector<128x128xbf16>, vector<64x128xf32> -> vector<64x128xf32>
    %42 = arith.addf %37, %41 : vector<64x128xf32>
    %c1_39 = arith.constant 1 : index
    %c2_40 = arith.constant 2 : index
    %c0_41 = arith.constant 0 : index
    %43 = vector.load %arg6[%c1_39, %c2_40, %c0_41] : memref<10x10x128xbf16, #tpu.memory_space<vmem>>, vector<8x8x128xbf16>
    %44 = vector.shape_cast %43 : vector<8x8x128xbf16> to vector<64x128xbf16>
    %c640 = arith.constant 640 : index
    %c0_42 = arith.constant 0 : index
    %45 = vector.load %arg3[%c640, %c0_42] : memref<1152x128xbf16, #tpu.memory_space<vmem>>, vector<128x128xbf16>
    %cst_43 = arith.constant dense<0.000000e+00> : vector<64x128xf32>
    %46 = tpu.matmul %44, %45, %cst_43 {dimension_numbers = #tpu.dot_dimension_numbers<[1], [0], [0], [1], [0, 0, 1, 1], [], []>} : vector<64x128xbf16>, vector<128x128xbf16>, vector<64x128xf32> -> vector<64x128xf32>
    %47 = arith.addf %42, %46 : vector<64x128xf32>
    %c2_44 = arith.constant 2 : index
    %c0_45 = arith.constant 0 : index
    %c0_46 = arith.constant 0 : index
    %48 = vector.load %arg6[%c2_44, %c0_45, %c0_46] : memref<10x10x128xbf16, #tpu.memory_space<vmem>>, vector<8x8x128xbf16>
    %49 = vector.shape_cast %48 : vector<8x8x128xbf16> to vector<64x128xbf16>
    %c768 = arith.constant 768 : index
    %c0_47 = arith.constant 0 : index
    %50 = vector.load %arg3[%c768, %c0_47] : memref<1152x128xbf16, #tpu.memory_space<vmem>>, vector<128x128xbf16>
    %cst_48 = arith.constant dense<0.000000e+00> : vector<64x128xf32>
    %51 = tpu.matmul %49, %50, %cst_48 {dimension_numbers = #tpu.dot_dimension_numbers<[1], [0], [0], [1], [0, 0, 1, 1], [], []>} : vector<64x128xbf16>, vector<128x128xbf16>, vector<64x128xf32> -> vector<64x128xf32>
    %52 = arith.addf %47, %51 : vector<64x128xf32>
    %c2_49 = arith.constant 2 : index
    %c1_50 = arith.constant 1 : index
    %c0_51 = arith.constant 0 : index
    %53 = vector.load %arg6[%c2_49, %c1_50, %c0_51] : memref<10x10x128xbf16, #tpu.memory_space<vmem>>, vector<8x8x128xbf16>
    %54 = vector.shape_cast %53 : vector<8x8x128xbf16> to vector<64x128xbf16>
    %c896 = arith.constant 896 : index
    %c0_52 = arith.constant 0 : index
    %55 = vector.load %arg3[%c896, %c0_52] : memref<1152x128xbf16, #tpu.memory_space<vmem>>, vector<128x128xbf16>
    %cst_53 = arith.constant dense<0.000000e+00> : vector<64x128xf32>
    %56 = tpu.matmul %54, %55, %cst_53 {dimension_numbers = #tpu.dot_dimension_numbers<[1], [0], [0], [1], [0, 0, 1, 1], [], []>} : vector<64x128xbf16>, vector<128x128xbf16>, vector<64x128xf32> -> vector<64x128xf32>
    %57 = arith.addf %52, %56 : vector<64x128xf32>
    %c2_54 = arith.constant 2 : index
    %c2_55 = arith.constant 2 : index
    %c0_56 = arith.constant 0 : index
    %58 = vector.load %arg6[%c2_54, %c2_55, %c0_56] : memref<10x10x128xbf16, #tpu.memory_space<vmem>>, vector<8x8x128xbf16>
    %59 = vector.shape_cast %58 : vector<8x8x128xbf16> to vector<64x128xbf16>
    %c1024 = arith.constant 1024 : index
    %c0_57 = arith.constant 0 : index
    %60 = vector.load %arg3[%c1024, %c0_57] : memref<1152x128xbf16, #tpu.memory_space<vmem>>, vector<128x128xbf16>
    %cst_58 = arith.constant dense<0.000000e+00> : vector<64x128xf32>
    %61 = tpu.matmul %59, %60, %cst_58 {dimension_numbers = #tpu.dot_dimension_numbers<[1], [0], [0], [1], [0, 0, 1, 1], [], []>} : vector<64x128xbf16>, vector<128x128xbf16>, vector<64x128xf32> -> vector<64x128xf32>
    %62 = arith.addf %57, %61 : vector<64x128xf32>
    %63 = arith.truncf %62 : vector<64x128xf32> to vector<64x128xbf16>
    %c0_59 = arith.constant 0 : index
    %c0_60 = arith.constant 0 : index
    %c0_61 = arith.constant 0 : index
    %64 = vector.load %arg4[%c0_59, %c0_60, %c0_61] : memref<1x64x128xbf16, #tpu.memory_space<vmem>>, vector<1x64x128xbf16>
    %65 = vector.shape_cast %64 : vector<1x64x128xbf16> to vector<64x128xbf16>
    %66 = vector.shape_cast %63 : vector<64x128xbf16> to vector<1x64x128xbf16>
    tpu.vector_store %arg4[%c0_59, %c0_60, %c0_61], %66 {strides = array<i32>} : memref<1x64x128xbf16, #tpu.memory_space<vmem>>, vector<1x64x128xbf16>,
    %cst_62 = arith.constant dense<0.000000e+00> : vector<128xf32>
    %67 = vector.multi_reduction <add>, %62, %cst_62 [0] : vector<64x128xf32> to vector<128xf32>
    %68 = vector.shape_cast %67 : vector<128xf32> to vector<1x128xf32>
    %c0_63 = arith.constant 0 : index
    %c0_64 = arith.constant 0 : index
    %c0_65 = arith.constant 0 : index
    %69 = vector.load %arg5[%c0_63, %c0_64, %c0_65] : memref<1x2x128xf32, #tpu.memory_space<vmem>>, vector<1x1x128xf32>
    %70 = vector.shape_cast %69 : vector<1x1x128xf32> to vector<1x128xf32>
    %71 = vector.shape_cast %68 : vector<1x128xf32> to vector<1x1x128xf32>
    tpu.vector_store %arg5[%c0_63, %c0_64, %c0_65], %71 {strides = array<i32>} : memref<1x2x128xf32, #tpu.memory_space<vmem>>, vector<1x1x128xf32>,
    %72 = arith.mulf %62, %62 : vector<64x128xf32>
    %cst_66 = arith.constant dense<0.000000e+00> : vector<128xf32>
    %73 = vector.multi_reduction <add>, %72, %cst_66 [0] : vector<64x128xf32> to vector<128xf32>
    %74 = vector.shape_cast %73 : vector<128xf32> to vector<1x128xf32>
    %c0_67 = arith.constant 0 : index
    %c1_68 = arith.constant 1 : index
    %c0_69 = arith.constant 0 : index
    %75 = vector.load %arg5[%c0_67, %c1_68, %c0_69] : memref<1x2x128xf32, #tpu.memory_space<vmem>>, vector<1x1x128xf32>
    %76 = vector.shape_cast %75 : vector<1x1x128xf32> to vector<1x128xf32>
    %77 = vector.shape_cast %74 : vector<1x128xf32> to vector<1x1x128xf32>
    tpu.vector_store %arg5[%c0_67, %c1_68, %c0_69], %77 {strides = array<i32>} : memref<1x2x128xf32, #tpu.memory_space<vmem>>, vector<1x1x128xf32>,
    return
  }
  func.func @transform_0(%arg0: i32) -> (i32, i32, i32, i32) {
    %c0_i32 = arith.constant 0 : i32
    %c0_i32_0 = arith.constant 0 : i32
    %c0_i32_1 = arith.constant 0 : i32
    %c0_i32_2 = arith.constant 0 : i32
    return %arg0, %c0_i32, %c0_i32_0, %c0_i32_1 : i32, i32, i32, i32
  }
  func.func @transform_1(%arg0: i32) -> (i32, i32) {
    %c0_i32 = arith.constant 0 : i32
    %c0_i32_0 = arith.constant 0 : i32
    %c0_i32_1 = arith.constant 0 : i32
    return %c0_i32, %c0_i32_0 : i32, i32
  }
  func.func @transform_2(%arg0: i32) -> (i32, i32) {
    %c0_i32 = arith.constant 0 : i32
    %c0_i32_0 = arith.constant 0 : i32
    %c0_i32_1 = arith.constant 0 : i32
    return %c0_i32, %c0_i32_0 : i32, i32
  }
  func.func @transform_3(%arg0: i32) -> (i32, i32, i32) {
    %c0_i32 = arith.constant 0 : i32
    %c0_i32_0 = arith.constant 0 : i32
    %c0_i32_1 = arith.constant 0 : i32
    return %arg0, %c0_i32, %c0_i32_0 : i32, i32, i32
  }
  func.func @transform_4(%arg0: i32) -> (i32, i32, i32) {
    %c0_i32 = arith.constant 0 : i32
    %c0_i32_0 = arith.constant 0 : i32
    %c0_i32_1 = arith.constant 0 : i32
    return %arg0, %c0_i32, %c0_i32_0 : i32, i32, i32
  }
}

module attributes {stable_mosaic.version = 11 : i64} {
  func.func @_conv_stats_kernel(%arg0: i32, %arg1: memref<128x4xbf16, #tpu.memory_space<vmem>>, %arg2: memref<4x128xbf16, #tpu.memory_space<vmem>>, %arg3: memref<128x128xbf16, #tpu.memory_space<vmem>>, %arg4: memref<1x2x128xf32, #tpu.memory_space<vmem>>) attributes {dimension_semantics = [#tpu.dimension_semantics<parallel>], iteration_bounds = array<i64: 1>, scalar_prefetch = 0 : i64, scratch_operands = 0 : i64, tpu.core_type = #tpu.core_type<tc>, window_params = [{transform_indices = @transform_0, window_bounds = array<i64: 128, 4>}, {pipeline_mode = #tpu.pipeline_mode<synchronous>, transform_indices = @transform_1, window_bounds = array<i64: 4, 128>}, {transform_indices = @transform_2, window_bounds = array<i64: 128, 128>}, {transform_indices = @transform_3, window_bounds = array<i64: 1, 2, 128>}]} {
    %c0 = arith.constant 0 : index
    %c0_0 = arith.constant 0 : index
    %0 = vector.load %arg1[%c0, %c0_0] : memref<128x4xbf16, #tpu.memory_space<vmem>>, vector<128x4xbf16>
    %c0_1 = arith.constant 0 : index
    %c0_2 = arith.constant 0 : index
    %1 = vector.load %arg2[%c0_1, %c0_2] : memref<4x128xbf16, #tpu.memory_space<vmem>>, vector<4x128xbf16>
    %cst = arith.constant dense<0.000000e+00> : vector<128x128xf32>
    %2 = tpu.matmul %0, %1, %cst {dimension_numbers = #tpu.dot_dimension_numbers<[1], [0], [0], [1], [0, 0, 1, 1], [], []>} : vector<128x4xbf16>, vector<4x128xbf16>, vector<128x128xf32> -> vector<128x128xf32>
    %3 = arith.truncf %2 : vector<128x128xf32> to vector<128x128xbf16>
    %c0_3 = arith.constant 0 : index
    %c0_4 = arith.constant 0 : index
    %4 = vector.load %arg3[%c0_3, %c0_4] : memref<128x128xbf16, #tpu.memory_space<vmem>>, vector<128x128xbf16>
    tpu.vector_store %arg3[%c0_3, %c0_4], %3 {strides = array<i32>} : memref<128x128xbf16, #tpu.memory_space<vmem>>, vector<128x128xbf16>,
    %c128_i32 = arith.constant 128 : i32
    %5 = arith.muli %arg0, %c128_i32 : i32
    %6 = tpu.iota {dimensions = array<i32: 0>} : vector<128x128xi32>
    %7 = vector.broadcast %5 : i32 to vector<128x128xi32>
    %8 = arith.addi %7, %6 : vector<128x128xi32>
    %c128_i32_5 = arith.constant 128 : i32
    %9 = vector.broadcast %c128_i32_5 : i32 to vector<128x128xi32>
    %10 = arith.cmpi slt, %8, %9 : vector<128x128xi32>
    %cst_6 = arith.constant 0.000000e+00 : f32
    %11 = vector.broadcast %cst_6 : f32 to vector<128x128xf32>
    %12 = arith.select %10, %2, %11 : vector<128x128xi1>, vector<128x128xf32>
    %cst_7 = arith.constant dense<0.000000e+00> : vector<128xf32>
    %13 = vector.multi_reduction <add>, %12, %cst_7 [0] : vector<128x128xf32> to vector<128xf32>
    %14 = vector.shape_cast %13 : vector<128xf32> to vector<1x128xf32>
    %c0_8 = arith.constant 0 : index
    %c0_9 = arith.constant 0 : index
    %c0_10 = arith.constant 0 : index
    %15 = vector.load %arg4[%c0_8, %c0_9, %c0_10] : memref<1x2x128xf32, #tpu.memory_space<vmem>>, vector<1x1x128xf32>
    %16 = vector.shape_cast %15 : vector<1x1x128xf32> to vector<1x128xf32>
    %17 = vector.shape_cast %14 : vector<1x128xf32> to vector<1x1x128xf32>
    tpu.vector_store %arg4[%c0_8, %c0_9, %c0_10], %17 {strides = array<i32>} : memref<1x2x128xf32, #tpu.memory_space<vmem>>, vector<1x1x128xf32>,
    %18 = arith.mulf %12, %12 : vector<128x128xf32>
    %cst_11 = arith.constant dense<0.000000e+00> : vector<128xf32>
    %19 = vector.multi_reduction <add>, %18, %cst_11 [0] : vector<128x128xf32> to vector<128xf32>
    %20 = vector.shape_cast %19 : vector<128xf32> to vector<1x128xf32>
    %c0_12 = arith.constant 0 : index
    %c1 = arith.constant 1 : index
    %c0_13 = arith.constant 0 : index
    %21 = vector.load %arg4[%c0_12, %c1, %c0_13] : memref<1x2x128xf32, #tpu.memory_space<vmem>>, vector<1x1x128xf32>
    %22 = vector.shape_cast %21 : vector<1x1x128xf32> to vector<1x128xf32>
    %23 = vector.shape_cast %20 : vector<1x128xf32> to vector<1x1x128xf32>
    tpu.vector_store %arg4[%c0_12, %c1, %c0_13], %23 {strides = array<i32>} : memref<1x2x128xf32, #tpu.memory_space<vmem>>, vector<1x1x128xf32>,
    return
  }
  func.func @transform_0(%arg0: i32) -> (i32, i32) {
    %c0_i32 = arith.constant 0 : i32
    %c0_i32_0 = arith.constant 0 : i32
    return %arg0, %c0_i32 : i32, i32
  }
  func.func @transform_1(%arg0: i32) -> (i32, i32) {
    %c0_i32 = arith.constant 0 : i32
    %c0_i32_0 = arith.constant 0 : i32
    %c0_i32_1 = arith.constant 0 : i32
    return %c0_i32, %c0_i32_0 : i32, i32
  }
  func.func @transform_2(%arg0: i32) -> (i32, i32) {
    %c0_i32 = arith.constant 0 : i32
    %c0_i32_0 = arith.constant 0 : i32
    return %arg0, %c0_i32 : i32, i32
  }
  func.func @transform_3(%arg0: i32) -> (i32, i32, i32) {
    %c0_i32 = arith.constant 0 : i32
    %c0_i32_0 = arith.constant 0 : i32
    %c0_i32_1 = arith.constant 0 : i32
    return %arg0, %c0_i32, %c0_i32_0 : i32, i32, i32
  }
}

module attributes {stable_mosaic.version = 11 : i64} {
  func.func @_bn_bn_add_relu_kernel(%arg0: i32, %arg1: memref<128x128xbf16, #tpu.memory_space<vmem>>, %arg2: memref<2x128xf32, #tpu.memory_space<vmem>>, %arg3: memref<128x128xbf16, #tpu.memory_space<vmem>>, %arg4: memref<2x128xf32, #tpu.memory_space<vmem>>, %arg5: memref<128x128xf32, #tpu.memory_space<vmem>>) attributes {dimension_semantics = [#tpu.dimension_semantics<parallel>], iteration_bounds = array<i64: 1>, scalar_prefetch = 0 : i64, scratch_operands = 0 : i64, tpu.core_type = #tpu.core_type<tc>, window_params = [{transform_indices = @transform_0, window_bounds = array<i64: 128, 128>}, {pipeline_mode = #tpu.pipeline_mode<synchronous>, transform_indices = @transform_1, window_bounds = array<i64: 2, 128>}, {transform_indices = @transform_2, window_bounds = array<i64: 128, 128>}, {pipeline_mode = #tpu.pipeline_mode<synchronous>, transform_indices = @transform_3, window_bounds = array<i64: 2, 128>}, {transform_indices = @transform_4, window_bounds = array<i64: 128, 128>}]} {
    %c0 = arith.constant 0 : index
    %c0_0 = arith.constant 0 : index
    %0 = vector.load %arg1[%c0, %c0_0] : memref<128x128xbf16, #tpu.memory_space<vmem>>, vector<128x128xbf16>
    %1 = arith.extf %0 : vector<128x128xbf16> to vector<128x128xf32>
    %c0_1 = arith.constant 0 : index
    %c0_2 = arith.constant 0 : index
    %2 = vector.load %arg2[%c0_1, %c0_2] : memref<2x128xf32, #tpu.memory_space<vmem>>, vector<1x128xf32>
    %3 = vector.broadcast %2 : vector<1x128xf32> to vector<128x128xf32>
    %4 = arith.mulf %1, %3 : vector<128x128xf32>
    %c1 = arith.constant 1 : index
    %c0_3 = arith.constant 0 : index
    %5 = vector.load %arg2[%c1, %c0_3] : memref<2x128xf32, #tpu.memory_space<vmem>>, vector<1x128xf32>
    %6 = vector.broadcast %5 : vector<1x128xf32> to vector<128x128xf32>
    %7 = arith.addf %4, %6 : vector<128x128xf32>
    %c0_4 = arith.constant 0 : index
    %c0_5 = arith.constant 0 : index
    %8 = vector.load %arg3[%c0_4, %c0_5] : memref<128x128xbf16, #tpu.memory_space<vmem>>, vector<128x128xbf16>
    %9 = arith.extf %8 : vector<128x128xbf16> to vector<128x128xf32>
    %c0_6 = arith.constant 0 : index
    %c0_7 = arith.constant 0 : index
    %10 = vector.load %arg4[%c0_6, %c0_7] : memref<2x128xf32, #tpu.memory_space<vmem>>, vector<1x128xf32>
    %11 = vector.broadcast %10 : vector<1x128xf32> to vector<128x128xf32>
    %12 = arith.mulf %9, %11 : vector<128x128xf32>
    %c1_8 = arith.constant 1 : index
    %c0_9 = arith.constant 0 : index
    %13 = vector.load %arg4[%c1_8, %c0_9] : memref<2x128xf32, #tpu.memory_space<vmem>>, vector<1x128xf32>
    %14 = vector.broadcast %13 : vector<1x128xf32> to vector<128x128xf32>
    %15 = arith.addf %12, %14 : vector<128x128xf32>
    %16 = arith.addf %7, %15 : vector<128x128xf32>
    %cst = arith.constant 0.000000e+00 : f32
    %17 = vector.broadcast %cst : f32 to vector<128x128xf32>
    %18 = arith.maximumf %16, %17 : vector<128x128xf32>
    %c0_10 = arith.constant 0 : index
    %c0_11 = arith.constant 0 : index
    %19 = vector.load %arg5[%c0_10, %c0_11] : memref<128x128xf32, #tpu.memory_space<vmem>>, vector<128x128xf32>
    tpu.vector_store %arg5[%c0_10, %c0_11], %18 {strides = array<i32>} : memref<128x128xf32, #tpu.memory_space<vmem>>, vector<128x128xf32>,
    return
  }
  func.func @transform_0(%arg0: i32) -> (i32, i32) {
    %c0_i32 = arith.constant 0 : i32
    %c0_i32_0 = arith.constant 0 : i32
    return %arg0, %c0_i32 : i32, i32
  }
  func.func @transform_1(%arg0: i32) -> (i32, i32) {
    %c0_i32 = arith.constant 0 : i32
    %c0_i32_0 = arith.constant 0 : i32
    %c0_i32_1 = arith.constant 0 : i32
    return %c0_i32, %c0_i32_0 : i32, i32
  }
  func.func @transform_2(%arg0: i32) -> (i32, i32) {
    %c0_i32 = arith.constant 0 : i32
    %c0_i32_0 = arith.constant 0 : i32
    return %arg0, %c0_i32 : i32, i32
  }
  func.func @transform_3(%arg0: i32) -> (i32, i32) {
    %c0_i32 = arith.constant 0 : i32
    %c0_i32_0 = arith.constant 0 : i32
    %c0_i32_1 = arith.constant 0 : i32
    return %c0_i32, %c0_i32_0 : i32, i32
  }
  func.func @transform_4(%arg0: i32) -> (i32, i32) {
    %c0_i32 = arith.constant 0 : i32
    %c0_i32_0 = arith.constant 0 : i32
    return %arg0, %c0_i32 : i32, i32
  }
}

</mosaic_0001>

<llo_original>
// kernel: basic_block_sparse_forward.6
$region0: #{basic_block_sparse_forward.6}
  #allocation0 [shape = 'u32[]', space=smem, size = 0x4, offset = 0x4, fixed_abs, tag = 'smem constant byte address 0x4 - core index']
  #allocation1 [shape = 'u32[144,128]{1,0:T(1,128)}', space=vmem, size = 0x12000, scoped, tag = 'internal scratch']
  %s0 = inlined_call_operand.vmem [shape: bf16[128,36], index: 0, kind: input, shape index: {}]
  %s1 = inlined_call_operand.vmem [shape: bf16[36,128], index: 1, kind: input, shape index: {}]
  %s2 = inlined_call_operand.vmem [shape: bf16[128,128], index: 2, kind: output, shape index: {0}]
  %s3 = inlined_call_operand.vmem [shape: f32[1,2,128], index: 3, kind: output, shape index: {1}]
  %4 = xla_tuple %s2, %s3
  %s5 = sld [smem:[#allocation0]]
  $region26: #{basic_block_sparse_forward.6} parent=0
    _
  %s7 = ssub.s32 1, %s5
  %s8 = scalar_select 0, %s7, %s5
  // Predicated region
  $region2: #{basic_block_sparse_forward.6} parent=0 // pred_check
    _
  $region3: #{basic_block_sparse_forward.6} parent=0 // pred_check_branch
    %10 = sbr.rel (0) target = $region5
  $region4: #{basic_block_sparse_forward.6} parent=0 // pred_region
    _
  $region5: #{basic_block_sparse_forward.6} parent=0 // pred_fallthru
    _
  // Predicated region
  $region6: #{basic_block_sparse_forward.6} parent=0 // pred_check
    _
  $region7: #{basic_block_sparse_forward.6} parent=0 // pred_check_branch
    %12 = sbr.rel (0) target = $region9
  $region8: #{basic_block_sparse_forward.6} parent=0 // pred_region
    _
  $region9: #{basic_block_sparse_forward.6} parent=0 // pred_fallthru
    _
  %v14 = vld [vmem:[%s0] sm:$0xf]
  %v15 = vld [vmem:[%s0 + $0x4] sm:$0xf]
  %v16 = vld [vmem:[%s0 + $0x8] sm:$0xf]
  %v17 = vld [vmem:[%s0 + $0xc] sm:$0xf]
  %v18 = vld [vmem:[%s0 + $0x10] sm:$0xf]
  %v19 = vld [vmem:[%s0 + $0x14] sm:$0xf]
  %v20 = vld [vmem:[%s0 + $0x18] sm:$0xf]
  %v21 = vld [vmem:[%s0 + $0x1c] sm:$0xf]
  %v22 = vld [vmem:[%s0 + $0x20] sm:$0xf]
  %v23 = vld [vmem:[%s0 + $0x24] sm:$0xf]
  %v24 = vld [vmem:[%s0 + $0x28] sm:$0xf]
  %v25 = vld [vmem:[%s0 + $0x2c] sm:$0xf]
  %v26 = vld [vmem:[%s0 + $0x30] sm:$0xf]
  %v27 = vld [vmem:[%s0 + $0x34] sm:$0xf]
  %v28 = vld [vmem:[%s0 + $0x38] sm:$0xf]
  %v29 = vld [vmem:[%s0 + $0x3c] sm:$0xf]
  %v30 = vld [vmem:[%s1] sm:$0xf]
  %v31 = vld [vmem:[%s1 + $0x4] sm:$0xf]
  %v32 = vld [vmem:[%s1 + $0x8] sm:$0xf]
  %v33 = vld [vmem:[%s1 + $0xc] sm:$0xf]
  %v34 = vld [vmem:[%s1 + $0x10] sm:$0x3]
  %v51 = vunpack.c.l.b16 %v14
  %v52 = vunpack.c.l.b16 %v15
  %v53 = vunpack.c.l.b16 %v16
  %v54 = vunpack.c.l.b16 %v17
  %v55 = vunpack.c.l.b16 %v18
  %v56 = vunpack.c.l.b16 %v19
  %v57 = vunpack.c.l.b16 %v20
  %v58 = vunpack.c.l.b16 %v21
  %v59 = vunpack.c.l.b16 %v22
  %v60 = vunpack.c.l.b16 %v23
  %v61 = vunpack.c.l.b16 %v24
  %v62 = vunpack.c.l.b16 %v25
  %v63 = vunpack.c.l.b16 %v26
  %v64 = vunpack.c.l.b16 %v27
  %v65 = vunpack.c.l.b16 %v28
  %v66 = vunpack.c.l.b16 %v29
  %v67 = vpack.c.b16 %v52, %v51
  %v68 = vpack.c.b16 %v54, %v53
  %v69 = vpack.c.b16 %v56, %v55
  %v70 = vpack.c.b16 %v58, %v57
  %v71 = vpack.c.b16 %v60, %v59
  %v72 = vpack.c.b16 %v62, %v61
  %v73 = vpack.c.b16 %v64, %v63
  %v74 = vpack.c.b16 %v66, %v65
  %v80 = vunpack.c.l.b16 %v30
  %v81 = vunpack.c.l.b16 %v31
  %v82 = vunpack.c.l.b16 %v32
  %v83 = vunpack.c.l.b16 %v33
  %v84 = vunpack.c.l.b16 %v34
  %v85 = vpack.c.b16 %v81, %v80
  %v86 = vpack.c.b16 %v83, %v82
  %v87 = vpack.c.b16 %v84, %v84
  %vm90 = vcmask 293888
  %v92 = vsel %vm90, %v67, 0
  %v95 = vsel %vm90, %v68, 0
  %v98 = vsel %vm90, %v69, 0
  %v101 = vsel %vm90, %v70, 0
  %v104 = vsel %vm90, %v71, 0
  %v107 = vsel %vm90, %v72, 0
  %v110 = vsel %vm90, %v73, 0
  %v113 = vsel %vm90, %v74, 0
  %vm115 = vcmask 1041408
  %v117 = vsel %vm115, %v87, 0
  %119 = vmatprep.subr.bf16.mxu0 0
  %120 = vmatpush1.bf16.msra.mxu0 %v85
  %121 = vmatprep.subr.bf16.mxu0 0
  %122 = vmatpush1.bf16.msra.mxu0 %v86
  %123 = vmatprep.subr.bf16.mxu0 0
  %124 = vmatpush1.bf16.msra.mxu0 %v117
  %125 = vmatprep.subr.bf16.mxu0 0
  %126 = vmatpush1.bf16.msra.mxu0 0
  %127 = vmatprep.subr.bf16.mxu0 0
  %128 = vmatpush1.bf16.msra.mxu0 0
  %129 = vmatprep.subr.bf16.mxu0 0
  %130 = vmatpush1.bf16.msra.mxu0 0
  %131 = vmatprep.subr.bf16.mxu0 0
  %132 = vmatpush1.bf16.msra.mxu0 0
  %133 = vmatprep.subr.bf16.mxu0 0
  %134 = vmatpush1.bf16.msra.mxu0 0
  %135 = vmatprep.subr.bf16.mxu0 0
  %136 = vmatpush1.bf16.msra.mxu0 0
  %137 = vmatprep.subr.bf16.mxu0 0
  %138 = vmatpush1.bf16.msra.mxu0 0
  %139 = vmatprep.subr.bf16.mxu0 0
  %140 = vmatpush1.bf16.msra.mxu0 0
  %141 = vmatprep.subr.bf16.mxu0 0
  %142 = vmatpush1.bf16.msra.mxu0 0
  %143 = vmatprep.subr.bf16.mxu0 0
  %144 = vmatpush1.bf16.msra.mxu0 0
  %145 = vmatprep.subr.bf16.mxu0 0
  %146 = vmatpush1.bf16.msra.mxu0 0
  %147 = vmatprep.subr.bf16.mxu0 0
  %148 = vmatpush1.bf16.msra.mxu0 0
  %149 = vmatprep.subr.bf16.mxu0 0
  %150 = vmatpush1.bf16.msra.mxu0 0
  %151 = vmatprep.mubr.bf16.mxu0 0
  %152 = vmatmul.mubr.bf16.gmra.mrb[0].mxu0 %v92
  %v153 = vpop.f32.mrb[0].mxu0
  %v154 = vadd.f32 0.0, %v153
  %v155 = vpop.f32.mrb[0].mxu0
  %v156 = vpop.f32.mrb[0].mxu0
  %v157 = vadd.f32 0.0, %v156
  %v158 = vpop.f32.mrb[0].mxu0
  %159 = vmatprep.mubr.bf16.mxu0 0
  %160 = vmatmul.mubr.bf16.gmra.mrb[0].mxu0 %v95
  %v161 = vpop.f32.mrb[0].mxu0
  %v162 = vadd.f32 0.0, %v161
  %v163 = vpop.f32.mrb[0].mxu0
  %v164 = vpop.f32.mrb[0].mxu0
  %v165 = vadd.f32 0.0, %v164
  %v166 = vpop.f32.mrb[0].mxu0
  %167 = vmatprep.mubr.bf16.mxu0 0
  %168 = vmatmul.mubr.bf16.gmra.mrb[0].mxu0 %v98
  %v169 = vpop.f32.mrb[0].mxu0
  %v170 = vadd.f32 0.0, %v169
  %v171 = vpop.f32.mrb[0].mxu0
  %v172 = vpop.f32.mrb[0].mxu0
  %v173 = vadd.f32 0.0, %v172
  %v174 = vpop.f32.mrb[0].mxu0
  %175 = vmatprep.mubr.bf16.mxu0 0
  %176 = vmatmul.mubr.bf16.gmra.mrb[0].mxu0 %v101
  %v177 = vpop.f32.mrb[0].mxu0
  %v178 = vadd.f32 0.0, %v177
  %v179 = vpop.f32.mrb[0].mxu0
  %v180 = vpop.f32.mrb[0].mxu0
  %v181 = vadd.f32 0.0, %v180
  %v182 = vpop.f32.mrb[0].mxu0
  %183 = vmatprep.mubr.bf16.mxu0 0
  %184 = vmatmul.mubr.bf16.gmra.mrb[0].mxu0 %v104
  %v185 = vpop.f32.mrb[0].mxu0
  %v186 = vadd.f32 0.0, %v185
  %v187 = vpop.f32.mrb[0].mxu0
  %v188 = vpop.f32.mrb[0].mxu0
  %v189 = vadd.f32 0.0, %v188
  %v190 = vpop.f32.mrb[0].mxu0
  %191 = vmatprep.mubr.bf16.mxu0 0
  %192 = vmatmul.mubr.bf16.gmra.mrb[0].mxu0 %v107
  %v193 = vpop.f32.mrb[0].mxu0
  %v194 = vadd.f32 0.0, %v193
  %v195 = vpop.f32.mrb[0].mxu0
  %v196 = vpop.f32.mrb[0].mxu0
  %v197 = vadd.f32 0.0, %v196
  %v198 = vpop.f32.mrb[0].mxu0
  %199 = vmatprep.mubr.bf16.mxu0 0
  %200 = vmatmul.mubr.bf16.gmra.mrb[0].mxu0 %v110
  %v201 = vpop.f32.mrb[0].mxu0
  %v202 = vadd.f32 0.0, %v201
  %v203 = vpop.f32.mrb[0].mxu0
  %v204 = vpop.f32.mrb[0].mxu0
  %v205 = vadd.f32 0.0, %v204
  %v206 = vpop.f32.mrb[0].mxu0
  %207 = vmatprep.mubr.bf16.mxu0 0
  %208 = vmatmul.mubr.bf16.gmra.mrb[0].mxu0 %v113
  %v209 = vpop.f32.mrb[0].mxu0
  %v210 = vadd.f32 0.0, %v209
  %v211 = vpop.f32.mrb[0].mxu0
  %v212 = vpop.f32.mrb[0].mxu0
  %v213 = vadd.f32 0.0, %v212
  %v214 = vpop.f32.mrb[0].mxu0
  %215 = vdwg.mxu0
  %v216 = vpack.c.bf16 %v157, %v154
  %v217 = vpack.c.bf16 %v165, %v162
  %v218 = vpack.c.bf16 %v173, %v170
  %v219 = vpack.c.bf16 %v181, %v178
  %v220 = vpack.c.bf16 %v189, %v186
  %v221 = vpack.c.bf16 %v197, %v194
  %v222 = vpack.c.bf16 %v205, %v202
  %v223 = vpack.c.bf16 %v213, %v210
  %v232 = vunpack.c.l.b16 %v216
  %v233 = vunpack.c.h.b16 %v216
  %v234 = vunpack.c.l.b16 %v217
  %v235 = vunpack.c.h.b16 %v217
  %v236 = vunpack.c.l.b16 %v218
  %v237 = vunpack.c.h.b16 %v218
  %v238 = vunpack.c.l.b16 %v219
  %v239 = vunpack.c.h.b16 %v219
  %v240 = vunpack.c.l.b16 %v220
  %v241 = vunpack.c.h.b16 %v220
  %v242 = vunpack.c.l.b16 %v221
  %v243 = vunpack.c.h.b16 %v221
  %v244 = vunpack.c.l.b16 %v222
  %v245 = vunpack.c.h.b16 %v222
  %v246 = vunpack.c.l.b16 %v223
  %v247 = vunpack.c.h.b16 %v223
  %v248 = vpack.c.b16 %v232, %v232
  %v249 = vpack.c.b16 %v233, %v233
  %v250 = vpack.c.b16 %v234, %v234
  %v251 = vpack.c.b16 %v235, %v235
  %v252 = vpack.c.b16 %v236, %v236
  %v253 = vpack.c.b16 %v237, %v237
  %v254 = vpack.c.b16 %v238, %v238
  %v255 = vpack.c.b16 %v239, %v239
  %v256 = vpack.c.b16 %v240, %v240
  %v257 = vpack.c.b16 %v241, %v241
  %v258 = vpack.c.b16 %v242, %v242
  %v259 = vpack.c.b16 %v243, %v243
  %v260 = vpack.c.b16 %v244, %v244
  %v261 = vpack.c.b16 %v245, %v245
  %v262 = vpack.c.b16 %v246, %v246
  %v263 = vpack.c.b16 %v247, %v247
  %280 = vst [vmem:[%s2] sm:$0xf] %v248
  %281 = vst [vmem:[%s2 + $0x4] sm:$0xf] %v249
  %282 = vst [vmem:[%s2 + $0x8] sm:$0xf] %v250
  %283 = vst [vmem:[%s2 + $0xc] sm:$0xf] %v251
  %284 = vst [vmem:[%s2 + $0x10] sm:$0xf] %v252
  %285 = vst [vmem:[%s2 + $0x14] sm:$0xf] %v253
  %286 = vst [vmem:[%s2 + $0x18] sm:$0xf] %v254
  %287 = vst [vmem:[%s2 + $0x1c] sm:$0xf] %v255
  %288 = vst [vmem:[%s2 + $0x20] sm:$0xf] %v256
  %289 = vst [vmem:[%s2 + $0x24] sm:$0xf] %v257
  %290 = vst [vmem:[%s2 + $0x28] sm:$0xf] %v258
  %291 = vst [vmem:[%s2 + $0x2c] sm:$0xf] %v259
  %292 = vst [vmem:[%s2 + $0x30] sm:$0xf] %v260
  %293 = vst [vmem:[%s2 + $0x34] sm:$0xf] %v261
  %294 = vst [vmem:[%s2 + $0x38] sm:$0xf] %v262
  %295 = vst [vmem:[%s2 + $0x3c] sm:$0xf] %v263
  %s296 = smul.u32 0, 128
  %v297 = vlaneseq
  %v298 = vshrl.u32 %v297, 7
  %v299 = vadd.s32 %v298, 8
  %v300 = vadd.s32 %v298, 16
  %v301 = vadd.s32 %v298, 24
  %v302 = vadd.s32 %v298, 32
  %v303 = vadd.s32 %v298, 40
  %v304 = vadd.s32 %v298, 48
  %v305 = vadd.s32 %v298, 56
  %v306 = vadd.s32 %v298, 64
  %v307 = vadd.s32 %v298, 72
  %v308 = vadd.s32 %v298, 80
  %v309 = vadd.s32 %v298, 88
  %v310 = vadd.s32 %v298, 96
  %v311 = vadd.s32 %v298, 104
  %v312 = vadd.s32 %v298, 112
  %v313 = vadd.s32 %v298, 120
  %v314 = vstv %s296
  %v315 = vadd.s32 %v314, %v298
  %v316 = vadd.s32 %v314, %v299
  %v317 = vadd.s32 %v314, %v300
  %v318 = vadd.s32 %v314, %v301
  %v319 = vadd.s32 %v314, %v302
  %v320 = vadd.s32 %v314, %v303
  %v321 = vadd.s32 %v314, %v304
  %v322 = vadd.s32 %v314, %v305
  %v323 = vadd.s32 %v314, %v306
  %v324 = vadd.s32 %v314, %v307
  %v325 = vadd.s32 %v314, %v308
  %v326 = vadd.s32 %v314, %v309
  %v327 = vadd.s32 %v314, %v310
  %v328 = vadd.s32 %v314, %v311
  %v329 = vadd.s32 %v314, %v312
  %v330 = vadd.s32 %v314, %v313
  %vm331 = vcmp.lt.s32.totalorder %v315, 128
  %vm332 = vcmp.lt.s32.totalorder %v316, 128
  %vm333 = vcmp.lt.s32.totalorder %v317, 128
  %vm334 = vcmp.lt.s32.totalorder %v318, 128
  %vm335 = vcmp.lt.s32.totalorder %v319, 128
  %vm336 = vcmp.lt.s32.totalorder %v320, 128
  %vm337 = vcmp.lt.s32.totalorder %v321, 128
  %vm338 = vcmp.lt.s32.totalorder %v322, 128
  %vm339 = vcmp.lt.s32.totalorder %v323, 128
  %vm340 = vcmp.lt.s32.totalorder %v324, 128
  %vm341 = vcmp.lt.s32.totalorder %v325, 128
  %vm342 = vcmp.lt.s32.totalorder %v326, 128
  %vm343 = vcmp.lt.s32.totalorder %v327, 128
  %vm344 = vcmp.lt.s32.totalorder %v328, 128
  %vm345 = vcmp.lt.s32.totalorder %v329, 128
  %vm346 = vcmp.lt.s32.totalorder %v330, 128
  %v347 = vsel %vm331, %v154, 0.0
  %v348 = vsel %vm332, %v157, 0.0
  %v349 = vsel %vm333, %v162, 0.0
  %v350 = vsel %vm334, %v165, 0.0
  %v351 = vsel %vm335, %v170, 0.0
  %v352 = vsel %vm336, %v173, 0.0
  %v353 = vsel %vm337, %v178, 0.0
  %v354 = vsel %vm338, %v181, 0.0
  %v355 = vsel %vm339, %v186, 0.0
  %v356 = vsel %vm340, %v189, 0.0
  %v357 = vsel %vm341, %v194, 0.0
  %v358 = vsel %vm342, %v197, 0.0
  %v359 = vsel %vm343, %v202, 0.0
  %v360 = vsel %vm344, %v205, 0.0
  %v361 = vsel %vm345, %v210, 0.0
  %v362 = vsel %vm346, %v213, 0.0
  %v363 = vadd.f32 %v347, %v348
  %v364 = vadd.f32 %v363, %v349
  %v365 = vadd.f32 %v364, %v350
  %v366 = vadd.f32 %v365, %v351
  %v367 = vadd.f32 %v366, %v352
  %v368 = vadd.f32 %v367, %v353
  %v369 = vadd.f32 %v368, %v354
  %v370 = vadd.f32 %v369, %v355
  %v371 = vadd.f32 %v370, %v356
  %v372 = vadd.f32 %v371, %v357
  %v373 = vadd.f32 %v372, %v358
  %v374 = vadd.f32 %v373, %v359
  %v375 = vadd.f32 %v374, %v360
  %v376 = vadd.f32 %v375, %v361
  %v377 = vadd.f32 %v376, %v362
  %v378 = vrot.slane %v377, 4
  %v379 = vadd.f32 %v377, %v378
  %v380 = vrot.slane %v379, 2
  %v381 = vadd.f32 %v379, %v380
  %v382 = vrot.slane %v381, 1
  %v383 = vadd.f32 %v381, %v382
  %384 = vst [vmem:[%s3] sm:$0x1] %v383
  %v385 = vmul.f32 %v347, %v347
  %v386 = vmul.f32 %v348, %v348
  %v387 = vmul.f32 %v349, %v349
  %v388 = vmul.f32 %v350, %v350
  %v389 = vmul.f32 %v351, %v351
  %v390 = vmul.f32 %v352, %v352
  %v391 = vmul.f32 %v353, %v353
  %v392 = vmul.f32 %v354, %v354
  %v393 = vmul.f32 %v355, %v355
  %v394 = vmul.f32 %v356, %v356
  %v395 = vmul.f32 %v357, %v357
  %v396 = vmul.f32 %v358, %v358
  %v397 = vmul.f32 %v359, %v359
  %v398 = vmul.f32 %v360, %v360
  %v399 = vmul.f32 %v361, %v361
  %v400 = vmul.f32 %v362, %v362
  %v401 = vadd.f32 %v385, %v386
  %v402 = vadd.f32 %v401, %v387
  %v403 = vadd.f32 %v402, %v388
  %v404 = vadd.f32 %v403, %v389
  %v405 = vadd.f32 %v404, %v390
  %v406 = vadd.f32 %v405, %v391
  %v407 = vadd.f32 %v406, %v392
  %v408 = vadd.f32 %v407, %v393
  %v409 = vadd.f32 %v408, %v394
  %v410 = vadd.f32 %v409, %v395
  %v411 = vadd.f32 %v410, %v396
  %v412 = vadd.f32 %v411, %v397
  %v413 = vadd.f32 %v412, %v398
  %v414 = vadd.f32 %v413, %v399
  %v415 = vadd.f32 %v414, %v400
  %v416 = vrot.slane %v415, 4
  %v417 = vadd.f32 %v415, %v416
  %v418 = vrot.slane %v417, 2
  %v419 = vadd.f32 %v417, %v418
  %v420 = vrot.slane %v419, 1
  %v421 = vadd.f32 %v419, %v420
  %422 = vst [vmem:[%s3 + $0x1] sm:$0x1] %v421
  // Predicated region
  $region10: #{basic_block_sparse_forward.6} parent=0 // pred_check
    _
  $region11: #{basic_block_sparse_forward.6} parent=0 // pred_check_branch
    %424 = sbr.rel (0) target = $region13
  $region12: #{basic_block_sparse_forward.6} parent=0 // pred_region
    _
  $region13: #{basic_block_sparse_forward.6} parent=0 // pred_fallthru
    _
  // Predicated region
  $region14: #{basic_block_sparse_forward.6} parent=0 // pred_check
    _
  $region15: #{basic_block_sparse_forward.6} parent=0 // pred_check_branch
    %426 = sbr.rel (0) target = $region17
  $region16: #{basic_block_sparse_forward.6} parent=0 // pred_region
    _
  $region17: #{basic_block_sparse_forward.6} parent=0 // pred_fallthru
    _
  // Predicated region
  $region18: #{basic_block_sparse_forward.6} parent=0 // pred_check
    _
  $region19: #{basic_block_sparse_forward.6} parent=0 // pred_check_branch
    %428 = sbr.rel (0) target = $region21
  $region20: #{basic_block_sparse_forward.6} parent=0 // pred_region
    _
  $region21: #{basic_block_sparse_forward.6} parent=0 // pred_fallthru
    _
  // Predicated region
  $region22: #{basic_block_sparse_forward.6} parent=0 // pred_check
    _
  $region23: #{basic_block_sparse_forward.6} parent=0 // pred_check_branch
    %430 = sbr.rel (0) target = $region25
  $region24: #{basic_block_sparse_forward.6} parent=0 // pred_region
    _
  $region25: #{basic_block_sparse_forward.6} parent=0 // pred_fallthru
    _

// kernel: basic_block_sparse_forward.7
$region0: #{basic_block_sparse_forward.7}
  #allocation0 [shape = 'u32[]', space=smem, size = 0x4, offset = 0x4, fixed_abs, tag = 'smem constant byte address 0x4 - core index']
  #allocation1 [shape = 'u32[144,128]{1,0:T(1,128)}', space=vmem, size = 0x12000, scoped, tag = 'internal scratch']
  %s0 = inlined_call_operand.vmem [shape: bf16[128,128], index: 0, kind: input, shape index: {}]
  %s1 = inlined_call_operand.vmem [shape: f32[2,128], index: 1, kind: input, shape index: {}]
  %s2 = inlined_call_operand.vmem [shape: bf16[128,128], index: 2, kind: input, shape index: {}]
  %s3 = inlined_call_operand.vmem [shape: bf16[128,128], index: 3, kind: output, shape index: {0}]
  %s4 = inlined_call_operand.vmem [shape: f32[1,2,128], index: 4, kind: output, shape index: {1}]
  %s5 = inlined_call_operand.vmem [shape: f32[1,1,128], index: 5, kind: output, shape index: {2}]
  %6 = xla_tuple %s3, %s4, %s5
  %s7 = sld [smem:[#allocation0]]
  $region38: #{basic_block_sparse_forward.7} parent=0
    _
  %s9 = ssub.s32 1, %s7
  %s10 = scalar_select 0, %s9, %s7
  // Predicated region
  $region2: #{basic_block_sparse_forward.7} parent=0 // pred_check
    _
  $region3: #{basic_block_sparse_forward.7} parent=0 // pred_check_branch
    %12 = sbr.rel (0) target = $region5
  $region4: #{basic_block_sparse_forward.7} parent=0 // pred_region
    _
  $region5: #{basic_block_sparse_forward.7} parent=0 // pred_fallthru
    _
  // Predicated region
  $region6: #{basic_block_sparse_forward.7} parent=0 // pred_check
    _
  $region7: #{basic_block_sparse_forward.7} parent=0 // pred_check_branch
    %14 = sbr.rel (0) target = $region9
  $region8: #{basic_block_sparse_forward.7} parent=0 // pred_region
    _
  $region9: #{basic_block_sparse_forward.7} parent=0 // pred_fallthru
    _
  // Predicated region
  $region10: #{basic_block_sparse_forward.7} parent=0 // pred_check
    _
  $region11: #{basic_block_sparse_forward.7} parent=0 // pred_check_branch
    %16 = sbr.rel (0) target = $region13
  $region12: #{basic_block_sparse_forward.7} parent=0 // pred_region
    _
  $region13: #{basic_block_sparse_forward.7} parent=0 // pred_fallthru
    _
  %v18 = vld [vmem:[%s0] sm:$0xf]
  %v19 = vld [vmem:[%s0 + $0x4] sm:$0xf]
  %v20 = vld [vmem:[%s0 + $0x8] sm:$0xf]
  %v21 = vld [vmem:[%s0 + $0xc] sm:$0xf]
  %v22 = vld [vmem:[%s0 + $0x10] sm:$0xf]
  %v23 = vld [vmem:[%s0 + $0x14] sm:$0xf]
  %v24 = vld [vmem:[%s0 + $0x18] sm:$0xf]
  %v25 = vld [vmem:[%s0 + $0x1c] sm:$0xf]
  %v26 = vld [vmem:[%s0 + $0x20] sm:$0xf]
  %v27 = vld [vmem:[%s0 + $0x24] sm:$0xf]
  %v28 = vld [vmem:[%s0 + $0x28] sm:$0xf]
  %v29 = vld [vmem:[%s0 + $0x2c] sm:$0xf]
  %v30 = vld [vmem:[%s0 + $0x30] sm:$0xf]
  %v31 = vld [vmem:[%s0 + $0x34] sm:$0xf]
  %v32 = vld [vmem:[%s0 + $0x38] sm:$0xf]
  %v33 = vld [vmem:[%s0 + $0x3c] sm:$0xf]
  %v34 = vunpack.c.l.bf16 %v18
  %v35 = vunpack.c.l.bf16 %v19
  %v36 = vunpack.c.l.bf16 %v20
  %v37 = vunpack.c.l.bf16 %v21
  %v38 = vunpack.c.l.bf16 %v22
  %v39 = vunpack.c.l.bf16 %v23
  %v40 = vunpack.c.l.bf16 %v24
  %v41 = vunpack.c.l.bf16 %v25
  %v42 = vunpack.c.l.bf16 %v26
  %v43 = vunpack.c.l.bf16 %v27
  %v44 = vunpack.c.l.bf16 %v28
  %v45 = vunpack.c.l.bf16 %v29
  %v46 = vunpack.c.l.bf16 %v30
  %v47 = vunpack.c.l.bf16 %v31
  %v48 = vunpack.c.l.bf16 %v32
  %v49 = vunpack.c.l.bf16 %v33
  %v50 = vld [vmem:[%s1] sm:$0x1]
  %v51 = vlaneseq
  %v52 = vshrl.u32 %v51, 7
  %v53 = vsub.s32 0, %v52
  %v54 = vrot.slane %v50, %v53
  %v55 = vmul.f32 %v34, %v54
  %v56 = vmul.f32 %v35, %v54
  %v57 = vmul.f32 %v36, %v54
  %v58 = vmul.f32 %v37, %v54
  %v59 = vmul.f32 %v38, %v54
  %v60 = vmul.f32 %v39, %v54
  %v61 = vmul.f32 %v40, %v54
  %v62 = vmul.f32 %v41, %v54
  %v63 = vmul.f32 %v42, %v54
  %v64 = vmul.f32 %v43, %v54
  %v65 = vmul.f32 %v44, %v54
  %v66 = vmul.f32 %v45, %v54
  %v67 = vmul.f32 %v46, %v54
  %v68 = vmul.f32 %v47, %v54
  %v69 = vmul.f32 %v48, %v54
  %v70 = vmul.f32 %v49, %v54
  %v71 = vld [vmem:[%s1 + $0x1] sm:$0x1]
  %v72 = vlaneseq
  %v73 = vshrl.u32 %v72, 7
  %v74 = vsub.s32 0, %v73
  %v75 = vrot.slane %v71, %v74
  %v76 = vadd.f32 %v55, %v75
  %v77 = vadd.f32 %v56, %v75
  %v78 = vadd.f32 %v57, %v75
  %v79 = vadd.f32 %v58, %v75
  %v80 = vadd.f32 %v59, %v75
  %v81 = vadd.f32 %v60, %v75
  %v82 = vadd.f32 %v61, %v75
  %v83 = vadd.f32 %v62, %v75
  %v84 = vadd.f32 %v63, %v75
  %v85 = vadd.f32 %v64, %v75
  %v86 = vadd.f32 %v65, %v75
  %v87 = vadd.f32 %v66, %v75
  %v88 = vadd.f32 %v67, %v75
  %v89 = vadd.f32 %v68, %v75
  %v90 = vadd.f32 %v69, %v75
  %v91 = vadd.f32 %v70, %v75
  %s92 = smul.u32 0, 128
  %v93 = vlaneseq
  %v94 = vshrl.u32 %v93, 7
  %v95 = vadd.s32 %v94, 8
  %v96 = vadd.s32 %v94, 16
  %v97 = vadd.s32 %v94, 24
  %v98 = vadd.s32 %v94, 32
  %v99 = vadd.s32 %v94, 40
  %v100 = vadd.s32 %v94, 48
  %v101 = vadd.s32 %v94, 56
  %v102 = vadd.s32 %v94, 64
  %v103 = vadd.s32 %v94, 72
  %v104 = vadd.s32 %v94, 80
  %v105 = vadd.s32 %v94, 88
  %v106 = vadd.s32 %v94, 96
  %v107 = vadd.s32 %v94, 104
  %v108 = vadd.s32 %v94, 112
  %v109 = vadd.s32 %v94, 120
  %v110 = vstv %s92
  %v111 = vadd.s32 %v110, %v94
  %v112 = vadd.s32 %v110, %v95
  %v113 = vadd.s32 %v110, %v96
  %v114 = vadd.s32 %v110, %v97
  %v115 = vadd.s32 %v110, %v98
  %v116 = vadd.s32 %v110, %v99
  %v117 = vadd.s32 %v110, %v100
  %v118 = vadd.s32 %v110, %v101
  %v119 = vadd.s32 %v110, %v102
  %v120 = vadd.s32 %v110, %v103
  %v121 = vadd.s32 %v110, %v104
  %v122 = vadd.s32 %v110, %v105
  %v123 = vadd.s32 %v110, %v106
  %v124 = vadd.s32 %v110, %v107
  %v125 = vadd.s32 %v110, %v108
  %v126 = vadd.s32 %v110, %v109
  %v127 = vlaneseq
  %v128 = vand.u32 %v127, 127
  %vm129 = vcmp.lt.s32.totalorder %v111, 128
  %vm130 = vcmp.lt.s32.totalorder %v112, 128
  %vm131 = vcmp.lt.s32.totalorder %v113, 128
  %vm132 = vcmp.lt.s32.totalorder %v114, 128
  %vm133 = vcmp.lt.s32.totalorder %v115, 128
  %vm134 = vcmp.lt.s32.totalorder %v116, 128
  %vm135 = vcmp.lt.s32.totalorder %v117, 128
  %vm136 = vcmp.lt.s32.totalorder %v118, 128
  %vm137 = vcmp.lt.s32.totalorder %v119, 128
  %vm138 = vcmp.lt.s32.totalorder %v120, 128
  %vm139 = vcmp.lt.s32.totalorder %v121, 128
  %vm140 = vcmp.lt.s32.totalorder %v122, 128
  %vm141 = vcmp.lt.s32.totalorder %v123, 128
  %vm142 = vcmp.lt.s32.totalorder %v124, 128
  %vm143 = vcmp.lt.s32.totalorder %v125, 128
  %vm144 = vcmp.lt.s32.totalorder %v126, 128
  %vm145 = vcmp.lt.s32.totalorder %v128, 16
  %vm146 = vmand %vm129, %vm145
  %vm147 = vmand %vm130, %vm145
  %vm148 = vmand %vm131, %vm145
  %vm149 = vmand %vm132, %vm145
  %vm150 = vmand %vm133, %vm145
  %vm151 = vmand %vm134, %vm145
  %vm152 = vmand %vm135, %vm145
  %vm153 = vmand %vm136, %vm145
  %vm154 = vmand %vm137, %vm145
  %vm155 = vmand %vm138, %vm145
  %vm156 = vmand %vm139, %vm145
  %vm157 = vmand %vm140, %vm145
  %vm158 = vmand %vm141, %vm145
  %vm159 = vmand %vm142, %vm145
  %vm160 = vmand %vm143, %vm145
  %vm161 = vmand %vm144, %vm145
  %v162 = vsel %vm146, %v76, -inf
  %v163 = vsel %vm147, %v77, -inf
  %v164 = vsel %vm148, %v78, -inf
  %v165 = vsel %vm149, %v79, -inf
  %v166 = vsel %vm150, %v80, -inf
  %v167 = vsel %vm151, %v81, -inf
  %v168 = vsel %vm152, %v82, -inf
  %v169 = vsel %vm153, %v83, -inf
  %v170 = vsel %vm154, %v84, -inf
  %v171 = vsel %vm155, %v85, -inf
  %v172 = vsel %vm156, %v86, -inf
  %v173 = vsel %vm157, %v87, -inf
  %v174 = vsel %vm158, %v88, -inf
  %v175 = vsel %vm159, %v89, -inf
  %v176 = vsel %vm160, %v90, -inf
  %v177 = vsel %vm161, %v91, -inf
  %178 = vmax.xlane.f32.xlu0 %v162
  %v179 = vpop.xlane.xlu0 %178
  %180 = vmax.xlane.f32.xlu0 %v163
  %v181 = vpop.xlane.xlu0 %180
  %182 = vmax.xlane.f32.xlu0 %v164
  %v183 = vpop.xlane.xlu0 %182
  %184 = vmax.xlane.f32.xlu0 %v165
  %v185 = vpop.xlane.xlu0 %184
  %186 = vmax.xlane.f32.xlu0 %v166
  %v187 = vpop.xlane.xlu0 %186
  %188 = vmax.xlane.f32.xlu0 %v167
  %v189 = vpop.xlane.xlu0 %188
  %190 = vmax.xlane.f32.xlu0 %v168
  %v191 = vpop.xlane.xlu0 %190
  %192 = vmax.xlane.f32.xlu0 %v169
  %v193 = vpop.xlane.xlu0 %192
  %194 = vmax.xlane.f32.xlu0 %v170
  %v195 = vpop.xlane.xlu0 %194
  %196 = vmax.xlane.f32.xlu0 %v171
  %v197 = vpop.xlane.xlu0 %196
  %198 = vmax.xlane.f32.xlu0 %v172
  %v199 = vpop.xlane.xlu0 %198
  %200 = vmax.xlane.f32.xlu0 %v173
  %v201 = vpop.xlane.xlu0 %200
  %202 = vmax.xlane.f32.xlu0 %v174
  %v203 = vpop.xlane.xlu0 %202
  %204 = vmax.xlane.f32.xlu0 %v175
  %v205 = vpop.xlane.xlu0 %204
  %206 = vmax.xlane.f32.xlu0 %v176
  %v207 = vpop.xlane.xlu0 %206
  %208 = vmax.xlane.f32.xlu0 %v177
  %v209 = vpop.xlane.xlu0 %208
  %vm210 = vcmp.eq.f32.partialorder %v162, %v179
  %vm211 = vcmp.eq.f32.partialorder %v163, %v181
  %vm212 = vcmp.eq.f32.partialorder %v164, %v183
  %vm213 = vcmp.eq.f32.partialorder %v165, %v185
  %vm214 = vcmp.eq.f32.partialorder %v166, %v187
  %vm215 = vcmp.eq.f32.partialorder %v167, %v189
  %vm216 = vcmp.eq.f32.partialorder %v168, %v191
  %vm217 = vcmp.eq.f32.partialorder %v169, %v193
  %vm218 = vcmp.eq.f32.partialorder %v170, %v195
  %vm219 = vcmp.eq.f32.partialorder %v171, %v197
  %vm220 = vcmp.eq.f32.partialorder %v172, %v199
  %vm221 = vcmp.eq.f32.partialorder %v173, %v201
  %vm222 = vcmp.eq.f32.partialorder %v174, %v203
  %vm223 = vcmp.eq.f32.partialorder %v175, %v205
  %vm224 = vcmp.eq.f32.partialorder %v176, %v207
  %vm225 = vcmp.eq.f32.partialorder %v177, %v209
  %v226 = vsel %vm210, %v128, 128
  %v227 = vsel %vm211, %v128, 128
  %v228 = vsel %vm212, %v128, 128
  %v229 = vsel %vm213, %v128, 128
  %v230 = vsel %vm214, %v128, 128
  %v231 = vsel %vm215, %v128, 128
  %v232 = vsel %vm216, %v128, 128
  %v233 = vsel %vm217, %v128, 128
  %v234 = vsel %vm218, %v128, 128
  %v235 = vsel %vm219, %v128, 128
  %v236 = vsel %vm220, %v128, 128
  %v237 = vsel %vm221, %v128, 128
  %v238 = vsel %vm222, %v128, 128
  %v239 = vsel %vm223, %v128, 128
  %v240 = vsel %vm224, %v128, 128
  %v241 = vsel %vm225, %v128, 128
  %v242 = vand.u32 %v226, 65535
  %v243 = vshra.s32 %v226, 16
  %v244 = vcvt.s32.f32 %v242
  %v245 = vcvt.s32.f32 %v243
  %246 = vmin.xlane.f32.xlu0 %v245
  %v247 = vpop.xlane.xlu0 %246
  %vm248 = vcmp.eq.f32.partialorder %v245, %v247
  %v249 = vsel %vm248, %v244, inf
  %250 = vmin.xlane.f32.xlu0 %v249
  %v251 = vpop.xlane.xlu0 %250
  %v252 = vcvt.f32.s32 %v251
  %v253 = vcvt.f32.s32 %v247
  %v254 = vshll.u32 %v253, 16
  %v255 = vadd.s32 %v254, %v252
  %v256 = vand.u32 %v227, 65535
  %v257 = vshra.s32 %v227, 16
  %v258 = vcvt.s32.f32 %v256
  %v259 = vcvt.s32.f32 %v257
  %260 = vmin.xlane.f32.xlu0 %v259
  %v261 = vpop.xlane.xlu0 %260
  %vm262 = vcmp.eq.f32.partialorder %v259, %v261
  %v263 = vsel %vm262, %v258, inf
  %264 = vmin.xlane.f32.xlu0 %v263
  %v265 = vpop.xlane.xlu0 %264
  %v266 = vcvt.f32.s32 %v265
  %v267 = vcvt.f32.s32 %v261
  %v268 = vshll.u32 %v267, 16
  %v269 = vadd.s32 %v268, %v266
  %v270 = vand.u32 %v228, 65535
  %v271 = vshra.s32 %v228, 16
  %v272 = vcvt.s32.f32 %v270
  %v273 = vcvt.s32.f32 %v271
  %274 = vmin.xlane.f32.xlu0 %v273
  %v275 = vpop.xlane.xlu0 %274
  %vm276 = vcmp.eq.f32.partialorder %v273, %v275
  %v277 = vsel %vm276, %v272, inf
  %278 = vmin.xlane.f32.xlu0 %v277
  %v279 = vpop.xlane.xlu0 %278
  %v280 = vcvt.f32.s32 %v279
  %v281 = vcvt.f32.s32 %v275
  %v282 = vshll.u32 %v281, 16
  %v283 = vadd.s32 %v282, %v280
  %v284 = vand.u32 %v229, 65535
  %v285 = vshra.s32 %v229, 16
  %v286 = vcvt.s32.f32 %v284
  %v287 = vcvt.s32.f32 %v285
  %288 = vmin.xlane.f32.xlu0 %v287
  %v289 = vpop.xlane.xlu0 %288
  %vm290 = vcmp.eq.f32.partialorder %v287, %v289
  %v291 = vsel %vm290, %v286, inf
  %292 = vmin.xlane.f32.xlu0 %v291
  %v293 = vpop.xlane.xlu0 %292
  %v294 = vcvt.f32.s32 %v293
  %v295 = vcvt.f32.s32 %v289
  %v296 = vshll.u32 %v295, 16
  %v297 = vadd.s32 %v296, %v294
  %v298 = vand.u32 %v230, 65535
  %v299 = vshra.s32 %v230, 16
  %v300 = vcvt.s32.f32 %v298
  %v301 = vcvt.s32.f32 %v299
  %302 = vmin.xlane.f32.xlu0 %v301
  %v303 = vpop.xlane.xlu0 %302
  %vm304 = vcmp.eq.f32.partialorder %v301, %v303
  %v305 = vsel %vm304, %v300, inf
  %306 = vmin.xlane.f32.xlu0 %v305
  %v307 = vpop.xlane.xlu0 %306
  %v308 = vcvt.f32.s32 %v307
  %v309 = vcvt.f32.s32 %v303
  %v310 = vshll.u32 %v309, 16
  %v311 = vadd.s32 %v310, %v308
  %v312 = vand.u32 %v231, 65535
  %v313 = vshra.s32 %v231, 16
  %v314 = vcvt.s32.f32 %v312
  %v315 = vcvt.s32.f32 %v313
  %316 = vmin.xlane.f32.xlu0 %v315
  %v317 = vpop.xlane.xlu0 %316
  %vm318 = vcmp.eq.f32.partialorder %v315, %v317
  %v319 = vsel %vm318, %v314, inf
  %320 = vmin.xlane.f32.xlu0 %v319
  %v321 = vpop.xlane.xlu0 %320
  %v322 = vcvt.f32.s32 %v321
  %v323 = vcvt.f32.s32 %v317
  %v324 = vshll.u32 %v323, 16
  %v325 = vadd.s32 %v324, %v322
  %v326 = vand.u32 %v232, 65535
  %v327 = vshra.s32 %v232, 16
  %v328 = vcvt.s32.f32 %v326
  %v329 = vcvt.s32.f32 %v327
  %330 = vmin.xlane.f32.xlu0 %v329
  %v331 = vpop.xlane.xlu0 %330
  %vm332 = vcmp.eq.f32.partialorder %v329, %v331
  %v333 = vsel %vm332, %v328, inf
  %334 = vmin.xlane.f32.xlu0 %v333
  %v335 = vpop.xlane.xlu0 %334
  %v336 = vcvt.f32.s32 %v335
  %v337 = vcvt.f32.s32 %v331
  %v338 = vshll.u32 %v337, 16
  %v339 = vadd.s32 %v338, %v336
  %v340 = vand.u32 %v233, 65535
  %v341 = vshra.s32 %v233, 16
  %v342 = vcvt.s32.f32 %v340
  %v343 = vcvt.s32.f32 %v341
  %344 = vmin.xlane.f32.xlu0 %v343
  %v345 = vpop.xlane.xlu0 %344
  %vm346 = vcmp.eq.f32.partialorder %v343, %v345
  %v347 = vsel %vm346, %v342, inf
  %348 = vmin.xlane.f32.xlu0 %v347
  %v349 = vpop.xlane.xlu0 %348
  %v350 = vcvt.f32.s32 %v349
  %v351 = vcvt.f32.s32 %v345
  %v352 = vshll.u32 %v351, 16
  %v353 = vadd.s32 %v352, %v350
  %v354 = vand.u32 %v234, 65535
  %v355 = vshra.s32 %v234, 16
  %v356 = vcvt.s32.f32 %v354
  %v357 = vcvt.s32.f32 %v355
  %358 = vmin.xlane.f32.xlu0 %v357
  %v359 = vpop.xlane.xlu0 %358
  %vm360 = vcmp.eq.f32.partialorder %v357, %v359
  %v361 = vsel %vm360, %v356, inf
  %362 = vmin.xlane.f32.xlu0 %v361
  %v363 = vpop.xlane.xlu0 %362
  %v364 = vcvt.f32.s32 %v363
  %v365 = vcvt.f32.s32 %v359
  %v366 = vshll.u32 %v365, 16
  %v367 = vadd.s32 %v366, %v364
  %v368 = vand.u32 %v235, 65535
  %v369 = vshra.s32 %v235, 16
  %v370 = vcvt.s32.f32 %v368
  %v371 = vcvt.s32.f32 %v369
  %372 = vmin.xlane.f32.xlu0 %v371
  %v373 = vpop.xlane.xlu0 %372
  %vm374 = vcmp.eq.f32.partialorder %v371, %v373
  %v375 = vsel %vm374, %v370, inf
  %376 = vmin.xlane.f32.xlu0 %v375
  %v377 = vpop.xlane.xlu0 %376
  %v378 = vcvt.f32.s32 %v377
  %v379 = vcvt.f32.s32 %v373
  %v380 = vshll.u32 %v379, 16
  %v381 = vadd.s32 %v380, %v378
  %v382 = vand.u32 %v236, 65535
  %v383 = vshra.s32 %v236, 16
  %v384 = vcvt.s32.f32 %v382
  %v385 = vcvt.s32.f32 %v383
  %386 = vmin.xlane.f32.xlu0 %v385
  %v387 = vpop.xlane.xlu0 %386
  %vm388 = vcmp.eq.f32.partialorder %v385, %v387
  %v389 = vsel %vm388, %v384, inf
  %390 = vmin.xlane.f32.xlu0 %v389
  %v391 = vpop.xlane.xlu0 %390
  %v392 = vcvt.f32.s32 %v391
  %v393 = vcvt.f32.s32 %v387
  %v394 = vshll.u32 %v393, 16
  %v395 = vadd.s32 %v394, %v392
  %v396 = vand.u32 %v237, 65535
  %v397 = vshra.s32 %v237, 16
  %v398 = vcvt.s32.f32 %v396
  %v399 = vcvt.s32.f32 %v397
  %400 = vmin.xlane.f32.xlu0 %v399
  %v401 = vpop.xlane.xlu0 %400
  %vm402 = vcmp.eq.f32.partialorder %v399, %v401
  %v403 = vsel %vm402, %v398, inf
  %404 = vmin.xlane.f32.xlu0 %v403
  %v405 = vpop.xlane.xlu0 %404
  %v406 = vcvt.f32.s32 %v405
  %v407 = vcvt.f32.s32 %v401
  %v408 = vshll.u32 %v407, 16
  %v409 = vadd.s32 %v408, %v406
  %v410 = vand.u32 %v238, 65535
  %v411 = vshra.s32 %v238, 16
  %v412 = vcvt.s32.f32 %v410
  %v413 = vcvt.s32.f32 %v411
  %414 = vmin.xlane.f32.xlu0 %v413
  %v415 = vpop.xlane.xlu0 %414
  %vm416 = vcmp.eq.f32.partialorder %v413, %v415
  %v417 = vsel %vm416, %v412, inf
  %418 = vmin.xlane.f32.xlu0 %v417
  %v419 = vpop.xlane.xlu0 %418
  %v420 = vcvt.f32.s32 %v419
  %v421 = vcvt.f32.s32 %v415
  %v422 = vshll.u32 %v421, 16
  %v423 = vadd.s32 %v422, %v420
  %v424 = vand.u32 %v239, 65535
  %v425 = vshra.s32 %v239, 16
  %v426 = vcvt.s32.f32 %v424
  %v427 = vcvt.s32.f32 %v425
  %428 = vmin.xlane.f32.xlu0 %v427
  %v429 = vpop.xlane.xlu0 %428
  %vm430 = vcmp.eq.f32.partialorder %v427, %v429
  %v431 = vsel %vm430, %v426, inf
  %432 = vmin.xlane.f32.xlu0 %v431
  %v433 = vpop.xlane.xlu0 %432
  %v434 = vcvt.f32.s32 %v433
  %v435 = vcvt.f32.s32 %v429
  %v436 = vshll.u32 %v435, 16
  %v437 = vadd.s32 %v436, %v434
  %v438 = vand.u32 %v240, 65535
  %v439 = vshra.s32 %v240, 16
  %v440 = vcvt.s32.f32 %v438
  %v441 = vcvt.s32.f32 %v439
  %442 = vmin.xlane.f32.xlu0 %v441
  %v443 = vpop.xlane.xlu0 %442
  %vm444 = vcmp.eq.f32.partialorder %v441, %v443
  %v445 = vsel %vm444, %v440, inf
  %446 = vmin.xlane.f32.xlu0 %v445
  %v447 = vpop.xlane.xlu0 %446
  %v448 = vcvt.f32.s32 %v447
  %v449 = vcvt.f32.s32 %v443
  %v450 = vshll.u32 %v449, 16
  %v451 = vadd.s32 %v450, %v448
  %v452 = vand.u32 %v241, 65535
  %v453 = vshra.s32 %v241, 16
  %v454 = vcvt.s32.f32 %v452
  %v455 = vcvt.s32.f32 %v453
  %456 = vmin.xlane.f32.xlu0 %v455
  %v457 = vpop.xlane.xlu0 %456
  %vm458 = vcmp.eq.f32.partialorder %v455, %v457
  %v459 = vsel %vm458, %v454, inf
  %460 = vmin.xlane.f32.xlu0 %v459
  %v461 = vpop.xlane.xlu0 %460
  %v462 = vcvt.f32.s32 %v461
  %v463 = vcvt.f32.s32 %v457
  %v464 = vshll.u32 %v463, 16
  %v465 = vadd.s32 %v464, %v462
  %vm466 = vcmp.eq.s32.totalorder %v128, %v255
  %vm467 = vcmp.eq.s32.totalorder %v128, %v269
  %vm468 = vcmp.eq.s32.totalorder %v128, %v283
  %vm469 = vcmp.eq.s32.totalorder %v128, %v297
  %vm470 = vcmp.eq.s32.totalorder %v128, %v311
  %vm471 = vcmp.eq.s32.totalorder %v128, %v325
  %vm472 = vcmp.eq.s32.totalorder %v128, %v339
  %vm473 = vcmp.eq.s32.totalorder %v128, %v353
  %vm474 = vcmp.eq.s32.totalorder %v128, %v367
  %vm475 = vcmp.eq.s32.totalorder %v128, %v381
  %vm476 = vcmp.eq.s32.totalorder %v128, %v395
  %vm477 = vcmp.eq.s32.totalorder %v128, %v409
  %vm478 = vcmp.eq.s32.totalorder %v128, %v423
  %vm479 = vcmp.eq.s32.totalorder %v128, %v437
  %vm480 = vcmp.eq.s32.totalorder %v128, %v451
  %vm481 = vcmp.eq.s32.totalorder %v128, %v465
  %v482 = vsel %vm466, -inf, %v162
  %v483 = vsel %vm467, -inf, %v163
  %v484 = vsel %vm468, -inf, %v164
  %v485 = vsel %vm469, -inf, %v165
  %v486 = vsel %vm470, -inf, %v166
  %v487 = vsel %vm471, -inf, %v167
  %v488 = vsel %vm472, -inf, %v168
  %v489 = vsel %vm473, -inf, %v169
  %v490 = vsel %vm474, -inf, %v170
  %v491 = vsel %vm475, -inf, %v171
  %v492 = vsel %vm476, -inf, %v172
  %v493 = vsel %vm477, -inf, %v173
  %v494 = vsel %vm478, -inf, %v174
  %v495 = vsel %vm479, -inf, %v175
  %v496 = vsel %vm480, -inf, %v176
  %v497 = vsel %vm481, -inf, %v177
  %498 = vmax.xlane.f32.xlu0 %v482
  %v499 = vpop.xlane.xlu0 %498
  %500 = vmax.xlane.f32.xlu0 %v483
  %v501 = vpop.xlane.xlu0 %500
  %502 = vmax.xlane.f32.xlu0 %v484
  %v503 = vpop.xlane.xlu0 %502
  %504 = vmax.xlane.f32.xlu0 %v485
  %v505 = vpop.xlane.xlu0 %504
  %506 = vmax.xlane.f32.xlu0 %v486
  %v507 = vpop.xlane.xlu0 %506
  %508 = vmax.xlane.f32.xlu0 %v487
  %v509 = vpop.xlane.xlu0 %508
  %510 = vmax.xlane.f32.xlu0 %v488
  %v511 = vpop.xlane.xlu0 %510
  %512 = vmax.xlane.f32.xlu0 %v489
  %v513 = vpop.xlane.xlu0 %512
  %514 = vmax.xlane.f32.xlu0 %v490
  %v515 = vpop.xlane.xlu0 %514
  %516 = vmax.xlane.f32.xlu0 %v491
  %v517 = vpop.xlane.xlu0 %516
  %518 = vmax.xlane.f32.xlu0 %v492
  %v519 = vpop.xlane.xlu0 %518
  %520 = vmax.xlane.f32.xlu0 %v493
  %v521 = vpop.xlane.xlu0 %520
  %522 = vmax.xlane.f32.xlu0 %v494
  %v523 = vpop.xlane.xlu0 %522
  %524 = vmax.xlane.f32.xlu0 %v495
  %v525 = vpop.xlane.xlu0 %524
  %526 = vmax.xlane.f32.xlu0 %v496
  %v527 = vpop.xlane.xlu0 %526
  %528 = vmax.xlane.f32.xlu0 %v497
  %v529 = vpop.xlane.xlu0 %528
  %vm530 = vcmp.eq.f32.partialorder %v482, %v499
  %vm531 = vcmp.eq.f32.partialorder %v483, %v501
  %vm532 = vcmp.eq.f32.partialorder %v484, %v503
  %vm533 = vcmp.eq.f32.partialorder %v485, %v505
  %vm534 = vcmp.eq.f32.partialorder %v486, %v507
  %vm535 = vcmp.eq.f32.partialorder %v487, %v509
  %vm536 = vcmp.eq.f32.partialorder %v488, %v511
  %vm537 = vcmp.eq.f32.partialorder %v489, %v513
  %vm538 = vcmp.eq.f32.partialorder %v490, %v515
  %vm539 = vcmp.eq.f32.partialorder %v491, %v517
  %vm540 = vcmp.eq.f32.partialorder %v492, %v519
  %vm541 = vcmp.eq.f32.partialorder %v493, %v521
  %vm542 = vcmp.eq.f32.partialorder %v494, %v523
  %vm543 = vcmp.eq.f32.partialorder %v495, %v525
  %vm544 = vcmp.eq.f32.partialorder %v496, %v527
  %vm545 = vcmp.eq.f32.partialorder %v497, %v529
  %v546 = vsel %vm530, %v128, 128
  %v547 = vsel %vm531, %v128, 128
  %v548 = vsel %vm532, %v128, 128
  %v549 = vsel %vm533, %v128, 128
  %v550 = vsel %vm534, %v128, 128
  %v551 = vsel %vm535, %v128, 128
  %v552 = vsel %vm536, %v128, 128
  %v553 = vsel %vm537, %v128, 128
  %v554 = vsel %vm538, %v128, 128
  %v555 = vsel %vm539, %v128, 128
  %v556 = vsel %vm540, %v128, 128
  %v557 = vsel %vm541, %v128, 128
  %v558 = vsel %vm542, %v128, 128
  %v559 = vsel %vm543, %v128, 128
  %v560 = vsel %vm544, %v128, 128
  %v561 = vsel %vm545, %v128, 128
  %v562 = vand.u32 %v546, 65535
  %v563 = vshra.s32 %v546, 16
  %v564 = vcvt.s32.f32 %v562
  %v565 = vcvt.s32.f32 %v563
  %566 = vmin.xlane.f32.xlu0 %v565
  %v567 = vpop.xlane.xlu0 %566
  %vm568 = vcmp.eq.f32.partialorder %v565, %v567
  %v569 = vsel %vm568, %v564, inf
  %570 = vmin.xlane.f32.xlu0 %v569
  %v571 = vpop.xlane.xlu0 %570
  %v572 = vcvt.f32.s32 %v571
  %v573 = vcvt.f32.s32 %v567
  %v574 = vshll.u32 %v573, 16
  %v575 = vadd.s32 %v574, %v572
  %v576 = vand.u32 %v547, 65535
  %v577 = vshra.s32 %v547, 16
  %v578 = vcvt.s32.f32 %v576
  %v579 = vcvt.s32.f32 %v577
  %580 = vmin.xlane.f32.xlu0 %v579
  %v581 = vpop.xlane.xlu0 %580
  %vm582 = vcmp.eq.f32.partialorder %v579, %v581
  %v583 = vsel %vm582, %v578, inf
  %584 = vmin.xlane.f32.xlu0 %v583
  %v585 = vpop.xlane.xlu0 %584
  %v586 = vcvt.f32.s32 %v585
  %v587 = vcvt.f32.s32 %v581
  %v588 = vshll.u32 %v587, 16
  %v589 = vadd.s32 %v588, %v586
  %v590 = vand.u32 %v548, 65535
  %v591 = vshra.s32 %v548, 16
  %v592 = vcvt.s32.f32 %v590
  %v593 = vcvt.s32.f32 %v591
  %594 = vmin.xlane.f32.xlu0 %v593
  %v595 = vpop.xlane.xlu0 %594
  %vm596 = vcmp.eq.f32.partialorder %v593, %v595
  %v597 = vsel %vm596, %v592, inf
  %598 = vmin.xlane.f32.xlu0 %v597
  %v599 = vpop.xlane.xlu0 %598
  %v600 = vcvt.f32.s32 %v599
  %v601 = vcvt.f32.s32 %v595
  %v602 = vshll.u32 %v601, 16
  %v603 = vadd.s32 %v602, %v600
  %v604 = vand.u32 %v549, 65535
  %v605 = vshra.s32 %v549, 16
  %v606 = vcvt.s32.f32 %v604
  %v607 = vcvt.s32.f32 %v605
  %608 = vmin.xlane.f32.xlu0 %v607
  %v609 = vpop.xlane.xlu0 %608
  %vm610 = vcmp.eq.f32.partialorder %v607, %v609
  %v611 = vsel %vm610, %v606, inf
  %612 = vmin.xlane.f32.xlu0 %v611
  %v613 = vpop.xlane.xlu0 %612
  %v614 = vcvt.f32.s32 %v613
  %v615 = vcvt.f32.s32 %v609
  %v616 = vshll.u32 %v615, 16
  %v617 = vadd.s32 %v616, %v614
  %v618 = vand.u32 %v550, 65535
  %v619 = vshra.s32 %v550, 16
  %v620 = vcvt.s32.f32 %v618
  %v621 = vcvt.s32.f32 %v619
  %622 = vmin.xlane.f32.xlu0 %v621
  %v623 = vpop.xlane.xlu0 %622
  %vm624 = vcmp.eq.f32.partialorder %v621, %v623
  %v625 = vsel %vm624, %v620, inf
  %626 = vmin.xlane.f32.xlu0 %v625
  %v627 = vpop.xlane.xlu0 %626
  %v628 = vcvt.f32.s32 %v627
  %v629 = vcvt.f32.s32 %v623
  %v630 = vshll.u32 %v629, 16
  %v631 = vadd.s32 %v630, %v628
  %v632 = vand.u32 %v551, 65535
  %v633 = vshra.s32 %v551, 16
  %v634 = vcvt.s32.f32 %v632
  %v635 = vcvt.s32.f32 %v633
  %636 = vmin.xlane.f32.xlu0 %v635
  %v637 = vpop.xlane.xlu0 %636
  %vm638 = vcmp.eq.f32.partialorder %v635, %v637
  %v639 = vsel %vm638, %v634, inf
  %640 = vmin.xlane.f32.xlu0 %v639
  %v641 = vpop.xlane.xlu0 %640
  %v642 = vcvt.f32.s32 %v641
  %v643 = vcvt.f32.s32 %v637
  %v644 = vshll.u32 %v643, 16
  %v645 = vadd.s32 %v644, %v642
  %v646 = vand.u32 %v552, 65535
  %v647 = vshra.s32 %v552, 16
  %v648 = vcvt.s32.f32 %v646
  %v649 = vcvt.s32.f32 %v647
  %650 = vmin.xlane.f32.xlu0 %v649
  %v651 = vpop.xlane.xlu0 %650
  %vm652 = vcmp.eq.f32.partialorder %v649, %v651
  %v653 = vsel %vm652, %v648, inf
  %654 = vmin.xlane.f32.xlu0 %v653
  %v655 = vpop.xlane.xlu0 %654
  %v656 = vcvt.f32.s32 %v655
  %v657 = vcvt.f32.s32 %v651
  %v658 = vshll.u32 %v657, 16
  %v659 = vadd.s32 %v658, %v656
  %v660 = vand.u32 %v553, 65535
  %v661 = vshra.s32 %v553, 16
  %v662 = vcvt.s32.f32 %v660
  %v663 = vcvt.s32.f32 %v661
  %664 = vmin.xlane.f32.xlu0 %v663
  %v665 = vpop.xlane.xlu0 %664
  %vm666 = vcmp.eq.f32.partialorder %v663, %v665
  %v667 = vsel %vm666, %v662, inf
  %668 = vmin.xlane.f32.xlu0 %v667
  %v669 = vpop.xlane.xlu0 %668
  %v670 = vcvt.f32.s32 %v669
  %v671 = vcvt.f32.s32 %v665
  %v672 = vshll.u32 %v671, 16
  %v673 = vadd.s32 %v672, %v670
  %v674 = vand.u32 %v554, 65535
  %v675 = vshra.s32 %v554, 16
  %v676 = vcvt.s32.f32 %v674
  %v677 = vcvt.s32.f32 %v675
  %678 = vmin.xlane.f32.xlu0 %v677
  %v679 = vpop.xlane.xlu0 %678
  %vm680 = vcmp.eq.f32.partialorder %v677, %v679
  %v681 = vsel %vm680, %v676, inf
  %682 = vmin.xlane.f32.xlu0 %v681
  %v683 = vpop.xlane.xlu0 %682
  %v684 = vcvt.f32.s32 %v683
  %v685 = vcvt.f32.s32 %v679
  %v686 = vshll.u32 %v685, 16
  %v687 = vadd.s32 %v686, %v684
  %v688 = vand.u32 %v555, 65535
  %v689 = vshra.s32 %v555, 16
  %v690 = vcvt.s32.f32 %v688
  %v691 = vcvt.s32.f32 %v689
  %692 = vmin.xlane.f32.xlu0 %v691
  %v693 = vpop.xlane.xlu0 %692
  %vm694 = vcmp.eq.f32.partialorder %v691, %v693
  %v695 = vsel %vm694, %v690, inf
  %696 = vmin.xlane.f32.xlu0 %v695
  %v697 = vpop.xlane.xlu0 %696
  %v698 = vcvt.f32.s32 %v697
  %v699 = vcvt.f32.s32 %v693
  %v700 = vshll.u32 %v699, 16
  %v701 = vadd.s32 %v700, %v698
  %v702 = vand.u32 %v556, 65535
  %v703 = vshra.s32 %v556, 16
  %v704 = vcvt.s32.f32 %v702
  %v705 = vcvt.s32.f32 %v703
  %706 = vmin.xlane.f32.xlu0 %v705
  %v707 = vpop.xlane.xlu0 %706
  %vm708 = vcmp.eq.f32.partialorder %v705, %v707
  %v709 = vsel %vm708, %v704, inf
  %710 = vmin.xlane.f32.xlu0 %v709
  %v711 = vpop.xlane.xlu0 %710
  %v712 = vcvt.f32.s32 %v711
  %v713 = vcvt.f32.s32 %v707
  %v714 = vshll.u32 %v713, 16
  %v715 = vadd.s32 %v714, %v712
  %v716 = vand.u32 %v557, 65535
  %v717 = vshra.s32 %v557, 16
  %v718 = vcvt.s32.f32 %v716
  %v719 = vcvt.s32.f32 %v717
  %720 = vmin.xlane.f32.xlu0 %v719
  %v721 = vpop.xlane.xlu0 %720
  %vm722 = vcmp.eq.f32.partialorder %v719, %v721
  %v723 = vsel %vm722, %v718, inf
  %724 = vmin.xlane.f32.xlu0 %v723
  %v725 = vpop.xlane.xlu0 %724
  %v726 = vcvt.f32.s32 %v725
  %v727 = vcvt.f32.s32 %v721
  %v728 = vshll.u32 %v727, 16
  %v729 = vadd.s32 %v728, %v726
  %v730 = vand.u32 %v558, 65535
  %v731 = vshra.s32 %v558, 16
  %v732 = vcvt.s32.f32 %v730
  %v733 = vcvt.s32.f32 %v731
  %734 = vmin.xlane.f32.xlu0 %v733
  %v735 = vpop.xlane.xlu0 %734
  %vm736 = vcmp.eq.f32.partialorder %v733, %v735
  %v737 = vsel %vm736, %v732, inf
  %738 = vmin.xlane.f32.xlu0 %v737
  %v739 = vpop.xlane.xlu0 %738
  %v740 = vcvt.f32.s32 %v739
  %v741 = vcvt.f32.s32 %v735
  %v742 = vshll.u32 %v741, 16
  %v743 = vadd.s32 %v742, %v740
  %v744 = vand.u32 %v559, 65535
  %v745 = vshra.s32 %v559, 16
  %v746 = vcvt.s32.f32 %v744
  %v747 = vcvt.s32.f32 %v745
  %748 = vmin.xlane.f32.xlu0 %v747
  %v749 = vpop.xlane.xlu0 %748
  %vm750 = vcmp.eq.f32.partialorder %v747, %v749
  %v751 = vsel %vm750, %v746, inf
  %752 = vmin.xlane.f32.xlu0 %v751
  %v753 = vpop.xlane.xlu0 %752
  %v754 = vcvt.f32.s32 %v753
  %v755 = vcvt.f32.s32 %v749
  %v756 = vshll.u32 %v755, 16
  %v757 = vadd.s32 %v756, %v754
  %v758 = vand.u32 %v560, 65535
  %v759 = vshra.s32 %v560, 16
  %v760 = vcvt.s32.f32 %v758
  %v761 = vcvt.s32.f32 %v759
  %762 = vmin.xlane.f32.xlu0 %v761
  %v763 = vpop.xlane.xlu0 %762
  %vm764 = vcmp.eq.f32.partialorder %v761, %v763
  %v765 = vsel %vm764, %v760, inf
  %766 = vmin.xlane.f32.xlu0 %v765
  %v767 = vpop.xlane.xlu0 %766
  %v768 = vcvt.f32.s32 %v767
  %v769 = vcvt.f32.s32 %v763
  %v770 = vshll.u32 %v769, 16
  %v771 = vadd.s32 %v770, %v768
  %v772 = vand.u32 %v561, 65535
  %v773 = vshra.s32 %v561, 16
  %v774 = vcvt.s32.f32 %v772
  %v775 = vcvt.s32.f32 %v773
  %776 = vmin.xlane.f32.xlu0 %v775
  %v777 = vpop.xlane.xlu0 %776
  %vm778 = vcmp.eq.f32.partialorder %v775, %v777
  %v779 = vsel %vm778, %v774, inf
  %780 = vmin.xlane.f32.xlu0 %v779
  %v781 = vpop.xlane.xlu0 %780
  %v782 = vcvt.f32.s32 %v781
  %v783 = vcvt.f32.s32 %v777
  %v784 = vshll.u32 %v783, 16
  %v785 = vadd.s32 %v784, %v782
  %vm786 = vcmp.eq.s32.totalorder %v128, %v575
  %vm787 = vcmp.eq.s32.totalorder %v128, %v589
  %vm788 = vcmp.eq.s32.totalorder %v128, %v603
  %vm789 = vcmp.eq.s32.totalorder %v128, %v617
  %vm790 = vcmp.eq.s32.totalorder %v128, %v631
  %vm791 = vcmp.eq.s32.totalorder %v128, %v645
  %vm792 = vcmp.eq.s32.totalorder %v128, %v659
  %vm793 = vcmp.eq.s32.totalorder %v128, %v673
  %vm794 = vcmp.eq.s32.totalorder %v128, %v687
  %vm795 = vcmp.eq.s32.totalorder %v128, %v701
  %vm796 = vcmp.eq.s32.totalorder %v128, %v715
  %vm797 = vcmp.eq.s32.totalorder %v128, %v729
  %vm798 = vcmp.eq.s32.totalorder %v128, %v743
  %vm799 = vcmp.eq.s32.totalorder %v128, %v757
  %vm800 = vcmp.eq.s32.totalorder %v128, %v771
  %vm801 = vcmp.eq.s32.totalorder %v128, %v785
  %v802 = vsel %vm786, -inf, %v482
  %v803 = vsel %vm787, -inf, %v483
  %v804 = vsel %vm788, -inf, %v484
  %v805 = vsel %vm789, -inf, %v485
  %v806 = vsel %vm790, -inf, %v486
  %v807 = vsel %vm791, -inf, %v487
  %v808 = vsel %vm792, -inf, %v488
  %v809 = vsel %vm793, -inf, %v489
  %v810 = vsel %vm794, -inf, %v490
  %v811 = vsel %vm795, -inf, %v491
  %v812 = vsel %vm796, -inf, %v492
  %v813 = vsel %vm797, -inf, %v493
  %v814 = vsel %vm798, -inf, %v494
  %v815 = vsel %vm799, -inf, %v495
  %v816 = vsel %vm800, -inf, %v496
  %v817 = vsel %vm801, -inf, %v497
  %818 = vmax.xlane.f32.xlu0 %v802
  %v819 = vpop.xlane.xlu0 %818
  %820 = vmax.xlane.f32.xlu0 %v803
  %v821 = vpop.xlane.xlu0 %820
  %822 = vmax.xlane.f32.xlu0 %v804
  %v823 = vpop.xlane.xlu0 %822
  %824 = vmax.xlane.f32.xlu0 %v805
  %v825 = vpop.xlane.xlu0 %824
  %826 = vmax.xlane.f32.xlu0 %v806
  %v827 = vpop.xlane.xlu0 %826
  %828 = vmax.xlane.f32.xlu0 %v807
  %v829 = vpop.xlane.xlu0 %828
  %830 = vmax.xlane.f32.xlu0 %v808
  %v831 = vpop.xlane.xlu0 %830
  %832 = vmax.xlane.f32.xlu0 %v809
  %v833 = vpop.xlane.xlu0 %832
  %834 = vmax.xlane.f32.xlu0 %v810
  %v835 = vpop.xlane.xlu0 %834
  %836 = vmax.xlane.f32.xlu0 %v811
  %v837 = vpop.xlane.xlu0 %836
  %838 = vmax.xlane.f32.xlu0 %v812
  %v839 = vpop.xlane.xlu0 %838
  %840 = vmax.xlane.f32.xlu0 %v813
  %v841 = vpop.xlane.xlu0 %840
  %842 = vmax.xlane.f32.xlu0 %v814
  %v843 = vpop.xlane.xlu0 %842
  %844 = vmax.xlane.f32.xlu0 %v815
  %v845 = vpop.xlane.xlu0 %844
  %846 = vmax.xlane.f32.xlu0 %v816
  %v847 = vpop.xlane.xlu0 %846
  %848 = vmax.xlane.f32.xlu0 %v817
  %v849 = vpop.xlane.xlu0 %848
  %vm850 = vcmp.eq.f32.partialorder %v802, %v819
  %vm851 = vcmp.eq.f32.partialorder %v803, %v821
  %vm852 = vcmp.eq.f32.partialorder %v804, %v823
  %vm853 = vcmp.eq.f32.partialorder %v805, %v825
  %vm854 = vcmp.eq.f32.partialorder %v806, %v827
  %vm855 = vcmp.eq.f32.partialorder %v807, %v829
  %vm856 = vcmp.eq.f32.partialorder %v808, %v831
  %vm857 = vcmp.eq.f32.partialorder %v809, %v833
  %vm858 = vcmp.eq.f32.partialorder %v810, %v835
  %vm859 = vcmp.eq.f32.partialorder %v811, %v837
  %vm860 = vcmp.eq.f32.partialorder %v812, %v839
  %vm861 = vcmp.eq.f32.partialorder %v813, %v841
  %vm862 = vcmp.eq.f32.partialorder %v814, %v843
  %vm863 = vcmp.eq.f32.partialorder %v815, %v845
  %vm864 = vcmp.eq.f32.partialorder %v816, %v847
  %vm865 = vcmp.eq.f32.partialorder %v817, %v849
  %v866 = vsel %vm850, %v128, 128
  %v867 = vsel %vm851, %v128, 128
  %v868 = vsel %vm852, %v128, 128
  %v869 = vsel %vm853, %v128, 128
  %v870 = vsel %vm854, %v128, 128
  %v871 = vsel %vm855, %v128, 128
  %v872 = vsel %vm856, %v128, 128
  %v873 = vsel %vm857, %v128, 128
  %v874 = vsel %vm858, %v128, 128
  %v875 = vsel %vm859, %v128, 128
  %v876 = vsel %vm860, %v128, 128
  %v877 = vsel %vm861, %v128, 128
  %v878 = vsel %vm862, %v128, 128
  %v879 = vsel %vm863, %v128, 128
  %v880 = vsel %vm864, %v128, 128
  %v881 = vsel %vm865, %v128, 128
  %v882 = vand.u32 %v866, 65535
  %v883 = vshra.s32 %v866, 16
  %v884 = vcvt.s32.f32 %v882
  %v885 = vcvt.s32.f32 %v883
  %886 = vmin.xlane.f32.xlu0 %v885
  %v887 = vpop.xlane.xlu0 %886
  %vm888 = vcmp.eq.f32.partialorder %v885, %v887
  %v889 = vsel %vm888, %v884, inf
  %890 = vmin.xlane.f32.xlu0 %v889
  %v891 = vpop.xlane.xlu0 %890
  %v892 = vcvt.f32.s32 %v891
  %v893 = vcvt.f32.s32 %v887
  %v894 = vshll.u32 %v893, 16
  %v895 = vadd.s32 %v894, %v892
  %v896 = vand.u32 %v867, 65535
  %v897 = vshra.s32 %v867, 16
  %v898 = vcvt.s32.f32 %v896
  %v899 = vcvt.s32.f32 %v897
  %900 = vmin.xlane.f32.xlu0 %v899
  %v901 = vpop.xlane.xlu0 %900
  %vm902 = vcmp.eq.f32.partialorder %v899, %v901
  %v903 = vsel %vm902, %v898, inf
  %904 = vmin.xlane.f32.xlu0 %v903
  %v905 = vpop.xlane.xlu0 %904
  %v906 = vcvt.f32.s32 %v905
  %v907 = vcvt.f32.s32 %v901
  %v908 = vshll.u32 %v907, 16
  %v909 = vadd.s32 %v908, %v906
  %v910 = vand.u32 %v868, 65535
  %v911 = vshra.s32 %v868, 16
  %v912 = vcvt.s32.f32 %v910
  %v913 = vcvt.s32.f32 %v911
  %914 = vmin.xlane.f32.xlu0 %v913
  %v915 = vpop.xlane.xlu0 %914
  %vm916 = vcmp.eq.f32.partialorder %v913, %v915
  %v917 = vsel %vm916, %v912, inf
  %918 = vmin.xlane.f32.xlu0 %v917
  %v919 = vpop.xlane.xlu0 %918
  %v920 = vcvt.f32.s32 %v919
  %v921 = vcvt.f32.s32 %v915
  %v922 = vshll.u32 %v921, 16
  %v923 = vadd.s32 %v922, %v920
  %v924 = vand.u32 %v869, 65535
  %v925 = vshra.s32 %v869, 16
  %v926 = vcvt.s32.f32 %v924
  %v927 = vcvt.s32.f32 %v925
  %928 = vmin.xlane.f32.xlu0 %v927
  %v929 = vpop.xlane.xlu0 %928
  %vm930 = vcmp.eq.f32.partialorder %v927, %v929
  %v931 = vsel %vm930, %v926, inf
  %932 = vmin.xlane.f32.xlu0 %v931
  %v933 = vpop.xlane.xlu0 %932
  %v934 = vcvt.f32.s32 %v933
  %v935 = vcvt.f32.s32 %v929
  %v936 = vshll.u32 %v935, 16
  %v937 = vadd.s32 %v936, %v934
  %v938 = vand.u32 %v870, 65535
  %v939 = vshra.s32 %v870, 16
  %v940 = vcvt.s32.f32 %v938
  %v941 = vcvt.s32.f32 %v939
  %942 = vmin.xlane.f32.xlu0 %v941
  %v943 = vpop.xlane.xlu0 %942
  %vm944 = vcmp.eq.f32.partialorder %v941, %v943
  %v945 = vsel %vm944, %v940, inf
  %946 = vmin.xlane.f32.xlu0 %v945
  %v947 = vpop.xlane.xlu0 %946
  %v948 = vcvt.f32.s32 %v947
  %v949 = vcvt.f32.s32 %v943
  %v950 = vshll.u32 %v949, 16
  %v951 = vadd.s32 %v950, %v948
  %v952 = vand.u32 %v871, 65535
  %v953 = vshra.s32 %v871, 16
  %v954 = vcvt.s32.f32 %v952
  %v955 = vcvt.s32.f32 %v953
  %956 = vmin.xlane.f32.xlu0 %v955
  %v957 = vpop.xlane.xlu0 %956
  %vm958 = vcmp.eq.f32.partialorder %v955, %v957
  %v959 = vsel %vm958, %v954, inf
  %960 = vmin.xlane.f32.xlu0 %v959
  %v961 = vpop.xlane.xlu0 %960
  %v962 = vcvt.f32.s32 %v961
  %v963 = vcvt.f32.s32 %v957
  %v964 = vshll.u32 %v963, 16
  %v965 = vadd.s32 %v964, %v962
  %v966 = vand.u32 %v872, 65535
  %v967 = vshra.s32 %v872, 16
  %v968 = vcvt.s32.f32 %v966
  %v969 = vcvt.s32.f32 %v967
  %970 = vmin.xlane.f32.xlu0 %v969
  %v971 = vpop.xlane.xlu0 %970
  %vm972 = vcmp.eq.f32.partialorder %v969, %v971
  %v973 = vsel %vm972, %v968, inf
  %974 = vmin.xlane.f32.xlu0 %v973
  %v975 = vpop.xlane.xlu0 %974
  %v976 = vcvt.f32.s32 %v975
  %v977 = vcvt.f32.s32 %v971
  %v978 = vshll.u32 %v977, 16
  %v979 = vadd.s32 %v978, %v976
  %v980 = vand.u32 %v873, 65535
  %v981 = vshra.s32 %v873, 16
  %v982 = vcvt.s32.f32 %v980
  %v983 = vcvt.s32.f32 %v981
  %984 = vmin.xlane.f32.xlu0 %v983
  %v985 = vpop.xlane.xlu0 %984
  %vm986 = vcmp.eq.f32.partialorder %v983, %v985
  %v987 = vsel %vm986, %v982, inf
  %988 = vmin.xlane.f32.xlu0 %v987
  %v989 = vpop.xlane.xlu0 %988
  %v990 = vcvt.f32.s32 %v989
  %v991 = vcvt.f32.s32 %v985
  %v992 = vshll.u32 %v991, 16
  %v993 = vadd.s32 %v992, %v990
  %v994 = vand.u32 %v874, 65535
  %v995 = vshra.s32 %v874, 16
  %v996 = vcvt.s32.f32 %v994
  %v997 = vcvt.s32.f32 %v995
  %998 = vmin.xlane.f32.xlu0 %v997
  %v999 = vpop.xlane.xlu0 %998
  %vm1000 = vcmp.eq.f32.partialorder %v997, %v999
  %v1001 = vsel %vm1000, %v996, inf
  %1002 = vmin.xlane.f32.xlu0 %v1001
  %v1003 = vpop.xlane.xlu0 %1002
  %v1004 = vcvt.f32.s32 %v1003
  %v1005 = vcvt.f32.s32 %v999
  %v1006 = vshll.u32 %v1005, 16
  %v1007 = vadd.s32 %v1006, %v1004
  %v1008 = vand.u32 %v875, 65535
  %v1009 = vshra.s32 %v875, 16
  %v1010 = vcvt.s32.f32 %v1008
  %v1011 = vcvt.s32.f32 %v1009
  %1012 = vmin.xlane.f32.xlu0 %v1011
  %v1013 = vpop.xlane.xlu0 %1012
  %vm1014 = vcmp.eq.f32.partialorder %v1011, %v1013
  %v1015 = vsel %vm1014, %v1010, inf
  %1016 = vmin.xlane.f32.xlu0 %v1015
  %v1017 = vpop.xlane.xlu0 %1016
  %v1018 = vcvt.f32.s32 %v1017
  %v1019 = vcvt.f32.s32 %v1013
  %v1020 = vshll.u32 %v1019, 16
  %v1021 = vadd.s32 %v1020, %v1018
  %v1022 = vand.u32 %v876, 65535
  %v1023 = vshra.s32 %v876, 16
  %v1024 = vcvt.s32.f32 %v1022
  %v1025 = vcvt.s32.f32 %v1023
  %1026 = vmin.xlane.f32.xlu0 %v1025
  %v1027 = vpop.xlane.xlu0 %1026
  %vm1028 = vcmp.eq.f32.partialorder %v1025, %v1027
  %v1029 = vsel %vm1028, %v1024, inf
  %1030 = vmin.xlane.f32.xlu0 %v1029
  %v1031 = vpop.xlane.xlu0 %1030
  %v1032 = vcvt.f32.s32 %v1031
  %v1033 = vcvt.f32.s32 %v1027
  %v1034 = vshll.u32 %v1033, 16
  %v1035 = vadd.s32 %v1034, %v1032
  %v1036 = vand.u32 %v877, 65535
  %v1037 = vshra.s32 %v877, 16
  %v1038 = vcvt.s32.f32 %v1036
  %v1039 = vcvt.s32.f32 %v1037
  %1040 = vmin.xlane.f32.xlu0 %v1039
  %v1041 = vpop.xlane.xlu0 %1040
  %vm1042 = vcmp.eq.f32.partialorder %v1039, %v1041
  %v1043 = vsel %vm1042, %v1038, inf
  %1044 = vmin.xlane.f32.xlu0 %v1043
  %v1045 = vpop.xlane.xlu0 %1044
  %v1046 = vcvt.f32.s32 %v1045
  %v1047 = vcvt.f32.s32 %v1041
  %v1048 = vshll.u32 %v1047, 16
  %v1049 = vadd.s32 %v1048, %v1046
  %v1050 = vand.u32 %v878, 65535
  %v1051 = vshra.s32 %v878, 16
  %v1052 = vcvt.s32.f32 %v1050
  %v1053 = vcvt.s32.f32 %v1051
  %1054 = vmin.xlane.f32.xlu0 %v1053
  %v1055 = vpop.xlane.xlu0 %1054
  %vm1056 = vcmp.eq.f32.partialorder %v1053, %v1055
  %v1057 = vsel %vm1056, %v1052, inf
  %1058 = vmin.xlane.f32.xlu0 %v1057
  %v1059 = vpop.xlane.xlu0 %1058
  %v1060 = vcvt.f32.s32 %v1059
  %v1061 = vcvt.f32.s32 %v1055
  %v1062 = vshll.u32 %v1061, 16
  %v1063 = vadd.s32 %v1062, %v1060
  %v1064 = vand.u32 %v879, 65535
  %v1065 = vshra.s32 %v879, 16
  %v1066 = vcvt.s32.f32 %v1064
  %v1067 = vcvt.s32.f32 %v1065
  %1068 = vmin.xlane.f32.xlu0 %v1067
  %v1069 = vpop.xlane.xlu0 %1068
  %vm1070 = vcmp.eq.f32.partialorder %v1067, %v1069
  %v1071 = vsel %vm1070, %v1066, inf
  %1072 = vmin.xlane.f32.xlu0 %v1071
  %v1073 = vpop.xlane.xlu0 %1072
  %v1074 = vcvt.f32.s32 %v1073
  %v1075 = vcvt.f32.s32 %v1069
  %v1076 = vshll.u32 %v1075, 16
  %v1077 = vadd.s32 %v1076, %v1074
  %v1078 = vand.u32 %v880, 65535
  %v1079 = vshra.s32 %v880, 16
  %v1080 = vcvt.s32.f32 %v1078
  %v1081 = vcvt.s32.f32 %v1079
  %1082 = vmin.xlane.f32.xlu0 %v1081
  %v1083 = vpop.xlane.xlu0 %1082
  %vm1084 = vcmp.eq.f32.partialorder %v1081, %v1083
  %v1085 = vsel %vm1084, %v1080, inf
  %1086 = vmin.xlane.f32.xlu0 %v1085
  %v1087 = vpop.xlane.xlu0 %1086
  %v1088 = vcvt.f32.s32 %v1087
  %v1089 = vcvt.f32.s32 %v1083
  %v1090 = vshll.u32 %v1089, 16
  %v1091 = vadd.s32 %v1090, %v1088
  %v1092 = vand.u32 %v881, 65535
  %v1093 = vshra.s32 %v881, 16
  %v1094 = vcvt.s32.f32 %v1092
  %v1095 = vcvt.s32.f32 %v1093
  %1096 = vmin.xlane.f32.xlu0 %v1095
  %v1097 = vpop.xlane.xlu0 %1096
  %vm1098 = vcmp.eq.f32.partialorder %v1095, %v1097
  %v1099 = vsel %vm1098, %v1094, inf
  %1100 = vmin.xlane.f32.xlu0 %v1099
  %v1101 = vpop.xlane.xlu0 %1100
  %v1102 = vcvt.f32.s32 %v1101
  %v1103 = vcvt.f32.s32 %v1097
  %v1104 = vshll.u32 %v1103, 16
  %v1105 = vadd.s32 %v1104, %v1102
  %vm1106 = vcmp.eq.s32.totalorder %v128, %v895
  %vm1107 = vcmp.eq.s32.totalorder %v128, %v909
  %vm1108 = vcmp.eq.s32.totalorder %v128, %v923
  %vm1109 = vcmp.eq.s32.totalorder %v128, %v937
  %vm1110 = vcmp.eq.s32.totalorder %v128, %v951
  %vm1111 = vcmp.eq.s32.totalorder %v128, %v965
  %vm1112 = vcmp.eq.s32.totalorder %v128, %v979
  %vm1113 = vcmp.eq.s32.totalorder %v128, %v993
  %vm1114 = vcmp.eq.s32.totalorder %v128, %v1007
  %vm1115 = vcmp.eq.s32.totalorder %v128, %v1021
  %vm1116 = vcmp.eq.s32.totalorder %v128, %v1035
  %vm1117 = vcmp.eq.s32.totalorder %v128, %v1049
  %vm1118 = vcmp.eq.s32.totalorder %v128, %v1063
  %vm1119 = vcmp.eq.s32.totalorder %v128, %v1077
  %vm1120 = vcmp.eq.s32.totalorder %v128, %v1091
  %vm1121 = vcmp.eq.s32.totalorder %v128, %v1105
  %v1122 = vsel %vm1106, -inf, %v802
  %v1123 = vsel %vm1107, -inf, %v803
  %v1124 = vsel %vm1108, -inf, %v804
  %v1125 = vsel %vm1109, -inf, %v805
  %v1126 = vsel %vm1110, -inf, %v806
  %v1127 = vsel %vm1111, -inf, %v807
  %v1128 = vsel %vm1112, -inf, %v808
  %v1129 = vsel %vm1113, -inf, %v809
  %v1130 = vsel %vm1114, -inf, %v810
  %v1131 = vsel %vm1115, -inf, %v811
  %v1132 = vsel %vm1116, -inf, %v812
  %v1133 = vsel %vm1117, -inf, %v813
  %v1134 = vsel %vm1118, -inf, %v814
  %v1135 = vsel %vm1119, -inf, %v815
  %v1136 = vsel %vm1120, -inf, %v816
  %v1137 = vsel %vm1121, -inf, %v817
  %1138 = vmax.xlane.f32.xlu0 %v1122
  %v1139 = vpop.xlane.xlu0 %1138
  %1140 = vmax.xlane.f32.xlu0 %v1123
  %v1141 = vpop.xlane.xlu0 %1140
  %1142 = vmax.xlane.f32.xlu0 %v1124
  %v1143 = vpop.xlane.xlu0 %1142
  %1144 = vmax.xlane.f32.xlu0 %v1125
  %v1145 = vpop.xlane.xlu0 %1144
  %1146 = vmax.xlane.f32.xlu0 %v1126
  %v1147 = vpop.xlane.xlu0 %1146
  %1148 = vmax.xlane.f32.xlu0 %v1127
  %v1149 = vpop.xlane.xlu0 %1148
  %1150 = vmax.xlane.f32.xlu0 %v1128
  %v1151 = vpop.xlane.xlu0 %1150
  %1152 = vmax.xlane.f32.xlu0 %v1129
  %v1153 = vpop.xlane.xlu0 %1152
  %1154 = vmax.xlane.f32.xlu0 %v1130
  %v1155 = vpop.xlane.xlu0 %1154
  %1156 = vmax.xlane.f32.xlu0 %v1131
  %v1157 = vpop.xlane.xlu0 %1156
  %1158 = vmax.xlane.f32.xlu0 %v1132
  %v1159 = vpop.xlane.xlu0 %1158
  %1160 = vmax.xlane.f32.xlu0 %v1133
  %v1161 = vpop.xlane.xlu0 %1160
  %1162 = vmax.xlane.f32.xlu0 %v1134
  %v1163 = vpop.xlane.xlu0 %1162
  %1164 = vmax.xlane.f32.xlu0 %v1135
  %v1165 = vpop.xlane.xlu0 %1164
  %1166 = vmax.xlane.f32.xlu0 %v1136
  %v1167 = vpop.xlane.xlu0 %1166
  %1168 = vmax.xlane.f32.xlu0 %v1137
  %v1169 = vpop.xlane.xlu0 %1168
  %vm1170 = vcmp.ge.f32.partialorder %v162, %v1139
  %vm1171 = vcmp.ge.f32.partialorder %v163, %v1141
  %vm1172 = vcmp.ge.f32.partialorder %v164, %v1143
  %vm1173 = vcmp.ge.f32.partialorder %v165, %v1145
  %vm1174 = vcmp.ge.f32.partialorder %v166, %v1147
  %vm1175 = vcmp.ge.f32.partialorder %v167, %v1149
  %vm1176 = vcmp.ge.f32.partialorder %v168, %v1151
  %vm1177 = vcmp.ge.f32.partialorder %v169, %v1153
  %vm1178 = vcmp.ge.f32.partialorder %v170, %v1155
  %vm1179 = vcmp.ge.f32.partialorder %v171, %v1157
  %vm1180 = vcmp.ge.f32.partialorder %v172, %v1159
  %vm1181 = vcmp.ge.f32.partialorder %v173, %v1161
  %vm1182 = vcmp.ge.f32.partialorder %v174, %v1163
  %vm1183 = vcmp.ge.f32.partialorder %v175, %v1165
  %vm1184 = vcmp.ge.f32.partialorder %v176, %v1167
  %vm1185 = vcmp.ge.f32.partialorder %v177, %v1169
  %vm1186 = vmand %vm146, %vm1170
  %vm1187 = vmand %vm147, %vm1171
  %vm1188 = vmand %vm148, %vm1172
  %vm1189 = vmand %vm149, %vm1173
  %vm1190 = vmand %vm150, %vm1174
  %vm1191 = vmand %vm151, %vm1175
  %vm1192 = vmand %vm152, %vm1176
  %vm1193 = vmand %vm153, %vm1177
  %vm1194 = vmand %vm154, %vm1178
  %vm1195 = vmand %vm155, %vm1179
  %vm1196 = vmand %vm156, %vm1180
  %vm1197 = vmand %vm157, %vm1181
  %vm1198 = vmand %vm158, %vm1182
  %vm1199 = vmand %vm159, %vm1183
  %vm1200 = vmand %vm160, %vm1184
  %vm1201 = vmand %vm161, %vm1185
  %v1202 = vsel %vm1186, %v76, 0.0
  %v1203 = vsel %vm1187, %v77, 0.0
  %v1204 = vsel %vm1188, %v78, 0.0
  %v1205 = vsel %vm1189, %v79, 0.0
  %v1206 = vsel %vm1190, %v80, 0.0
  %v1207 = vsel %vm1191, %v81, 0.0
  %v1208 = vsel %vm1192, %v82, 0.0
  %v1209 = vsel %vm1193, %v83, 0.0
  %v1210 = vsel %vm1194, %v84, 0.0
  %v1211 = vsel %vm1195, %v85, 0.0
  %v1212 = vsel %vm1196, %v86, 0.0
  %v1213 = vsel %vm1197, %v87, 0.0
  %v1214 = vsel %vm1198, %v88, 0.0
  %v1215 = vsel %vm1199, %v89, 0.0
  %v1216 = vsel %vm1200, %v90, 0.0
  %v1217 = vsel %vm1201, %v91, 0.0
  %v1218 = vand.u32 2147483647, %v1202
  %v1219 = vand.u32 2147483647, %v1203
  %v1220 = vand.u32 2147483647, %v1204
  %v1221 = vand.u32 2147483647, %v1205
  %v1222 = vand.u32 2147483647, %v1206
  %v1223 = vand.u32 2147483647, %v1207
  %v1224 = vand.u32 2147483647, %v1208
  %v1225 = vand.u32 2147483647, %v1209
  %v1226 = vand.u32 2147483647, %v1210
  %v1227 = vand.u32 2147483647, %v1211
  %v1228 = vand.u32 2147483647, %v1212
  %v1229 = vand.u32 2147483647, %v1213
  %v1230 = vand.u32 2147483647, %v1214
  %v1231 = vand.u32 2147483647, %v1215
  %v1232 = vand.u32 2147483647, %v1216
  %v1233 = vand.u32 2147483647, %v1217
  %v1234 = vadd.f32 %v1218, %v1219
  %v1235 = vadd.f32 %v1234, %v1220
  %v1236 = vadd.f32 %v1235, %v1221
  %v1237 = vadd.f32 %v1236, %v1222
  %v1238 = vadd.f32 %v1237, %v1223
  %v1239 = vadd.f32 %v1238, %v1224
  %v1240 = vadd.f32 %v1239, %v1225
  %v1241 = vadd.f32 %v1240, %v1226
  %v1242 = vadd.f32 %v1241, %v1227
  %v1243 = vadd.f32 %v1242, %v1228
  %v1244 = vadd.f32 %v1243, %v1229
  %v1245 = vadd.f32 %v1244, %v1230
  %v1246 = vadd.f32 %v1245, %v1231
  %v1247 = vadd.f32 %v1246, %v1232
  %v1248 = vadd.f32 %v1247, %v1233
  %v1249 = vrot.slane %v1248, 4
  %v1250 = vadd.f32 %v1248, %v1249
  %v1251 = vrot.slane %v1250, 2
  %v1252 = vadd.f32 %v1250, %v1251
  %v1253 = vrot.slane %v1252, 1
  %v1254 = vadd.f32 %v1252, %v1253
  %1255 = vst [vmem:[%s5] sm:$0x1] %v1254
  %v1256 = vpack.c.bf16 %v1203, %v1202
  %v1257 = vpack.c.bf16 %v1205, %v1204
  %v1258 = vpack.c.bf16 %v1207, %v1206
  %v1259 = vpack.c.bf16 %v1209, %v1208
  %v1260 = vpack.c.bf16 %v1211, %v1210
  %v1261 = vpack.c.bf16 %v1213, %v1212
  %v1262 = vpack.c.bf16 %v1215, %v1214
  %v1263 = vpack.c.bf16 %v1217, %v1216
  %v1264 = vld [vmem:[%s2] sm:$0xf]
  %v1265 = vld [vmem:[%s2 + $0x4] sm:$0xf]
  %v1266 = vld [vmem:[%s2 + $0x8] sm:$0xf]
  %v1267 = vld [vmem:[%s2 + $0xc] sm:$0xf]
  %v1268 = vld [vmem:[%s2 + $0x10] sm:$0xf]
  %v1269 = vld [vmem:[%s2 + $0x14] sm:$0xf]
  %v1270 = vld [vmem:[%s2 + $0x18] sm:$0xf]
  %v1271 = vld [vmem:[%s2 + $0x1c] sm:$0xf]
  %v1272 = vld [vmem:[%s2 + $0x20] sm:$0xf]
  %v1273 = vld [vmem:[%s2 + $0x24] sm:$0xf]
  %v1274 = vld [vmem:[%s2 + $0x28] sm:$0xf]
  %v1275 = vld [vmem:[%s2 + $0x2c] sm:$0xf]
  %v1276 = vld [vmem:[%s2 + $0x30] sm:$0xf]
  %v1277 = vld [vmem:[%s2 + $0x34] sm:$0xf]
  %v1278 = vld [vmem:[%s2 + $0x38] sm:$0xf]
  %v1279 = vld [vmem:[%s2 + $0x3c] sm:$0xf]
  %v1296 = vunpack.c.l.b16 %v1264
  %v1297 = vunpack.c.l.b16 %v1265
  %v1298 = vunpack.c.l.b16 %v1266
  %v1299 = vunpack.c.l.b16 %v1267
  %v1300 = vunpack.c.l.b16 %v1268
  %v1301 = vunpack.c.l.b16 %v1269
  %v1302 = vunpack.c.l.b16 %v1270
  %v1303 = vunpack.c.l.b16 %v1271
  %v1304 = vunpack.c.l.b16 %v1272
  %v1305 = vunpack.c.l.b16 %v1273
  %v1306 = vunpack.c.l.b16 %v1274
  %v1307 = vunpack.c.l.b16 %v1275
  %v1308 = vunpack.c.l.b16 %v1276
  %v1309 = vunpack.c.l.b16 %v1277
  %v1310 = vunpack.c.l.b16 %v1278
  %v1311 = vunpack.c.l.b16 %v1279
  %v1312 = vpack.c.b16 %v1297, %v1296
  %v1313 = vpack.c.b16 %v1299, %v1298
  %v1314 = vpack.c.b16 %v1301, %v1300
  %v1315 = vpack.c.b16 %v1303, %v1302
  %v1316 = vpack.c.b16 %v1305, %v1304
  %v1317 = vpack.c.b16 %v1307, %v1306
  %v1318 = vpack.c.b16 %v1309, %v1308
  %v1319 = vpack.c.b16 %v1311, %v1310
  %1328 = vmatprep.subr.bf16.mxu0 0
  %1329 = vmatpush1.bf16.msra.mxu0 %v1312
  %1330 = vmatprep.subr.bf16.mxu0 0
  %1331 = vmatpush1.bf16.msra.mxu0 %v1313
  %1332 = vmatprep.subr.bf16.mxu0 0
  %1333 = vmatpush1.bf16.msra.mxu0 %v1314
  %1334 = vmatprep.subr.bf16.mxu0 0
  %1335 = vmatpush1.bf16.msra.mxu0 %v1315
  %1336 = vmatprep.subr.bf16.mxu0 0
  %1337 = vmatpush1.bf16.msra.mxu0 %v1316
  %1338 = vmatprep.subr.bf16.mxu0 0
  %1339 = vmatpush1.bf16.msra.mxu0 %v1317
  %1340 = vmatprep.subr.bf16.mxu0 0
  %1341 = vmatpush1.bf16.msra.mxu0 %v1318
  %1342 = vmatprep.subr.bf16.mxu0 0
  %1343 = vmatpush1.bf16.msra.mxu0 %v1319
  %1344 = vmatprep.subr.bf16.mxu0 0
  %1345 = vmatpush1.bf16.msra.mxu0 0
  %1346 = vmatprep.subr.bf16.mxu0 0
  %1347 = vmatpush1.bf16.msra.mxu0 0
  %1348 = vmatprep.subr.bf16.mxu0 0
  %1349 = vmatpush1.bf16.msra.mxu0 0
  %1350 = vmatprep.subr.bf16.mxu0 0
  %1351 = vmatpush1.bf16.msra.mxu0 0
  %1352 = vmatprep.subr.bf16.mxu0 0
  %1353 = vmatpush1.bf16.msra.mxu0 0
  %1354 = vmatprep.subr.bf16.mxu0 0
  %1355 = vmatpush1.bf16.msra.mxu0 0
  %1356 = vmatprep.subr.bf16.mxu0 0
  %1357 = vmatpush1.bf16.msra.mxu0 0
  %1358 = vmatprep.subr.bf16.mxu0 0
  %1359 = vmatpush1.bf16.msra.mxu0 0
  %1360 = vmatprep.mubr.bf16.mxu0 0
  %1361 = vmatmul.mubr.bf16.gmra.mrb[0].mxu0 %v1256
  %v1362 = vpop.f32.mrb[0].mxu0
  %v1363 = vadd.f32 0.0, %v1362
  %v1364 = vpop.f32.mrb[0].mxu0
  %v1365 = vpop.f32.mrb[0].mxu0
  %v1366 = vadd.f32 0.0, %v1365
  %v1367 = vpop.f32.mrb[0].mxu0
  %1368 = vmatprep.mubr.bf16.mxu0 0
  %1369 = vmatmul.mubr.bf16.gmra.mrb[0].mxu0 %v1257
  %v1370 = vpop.f32.mrb[0].mxu0
  %v1371 = vadd.f32 0.0, %v1370
  %v1372 = vpop.f32.mrb[0].mxu0
  %v1373 = vpop.f32.mrb[0].mxu0
  %v1374 = vadd.f32 0.0, %v1373
  %v1375 = vpop.f32.mrb[0].mxu0
  %1376 = vmatprep.mubr.bf16.mxu0 0
  %1377 = vmatmul.mubr.bf16.gmra.mrb[0].mxu0 %v1258
  %v1378 = vpop.f32.mrb[0].mxu0
  %v1379 = vadd.f32 0.0, %v1378
  %v1380 = vpop.f32.mrb[0].mxu0
  %v1381 = vpop.f32.mrb[0].mxu0
  %v1382 = vadd.f32 0.0, %v1381
  %v1383 = vpop.f32.mrb[0].mxu0
  %1384 = vmatprep.mubr.bf16.mxu0 0
  %1385 = vmatmul.mubr.bf16.gmra.mrb[0].mxu0 %v1259
  %v1386 = vpop.f32.mrb[0].mxu0
  %v1387 = vadd.f32 0.0, %v1386
  %v1388 = vpop.f32.mrb[0].mxu0
  %v1389 = vpop.f32.mrb[0].mxu0
  %v1390 = vadd.f32 0.0, %v1389
  %v1391 = vpop.f32.mrb[0].mxu0
  %1392 = vmatprep.mubr.bf16.mxu0 0
  %1393 = vmatmul.mubr.bf16.gmra.mrb[0].mxu0 %v1260
  %v1394 = vpop.f32.mrb[0].mxu0
  %v1395 = vadd.f32 0.0, %v1394
  %v1396 = vpop.f32.mrb[0].mxu0
  %v1397 = vpop.f32.mrb[0].mxu0
  %v1398 = vadd.f32 0.0, %v1397
  %v1399 = vpop.f32.mrb[0].mxu0
  %1400 = vmatprep.mubr.bf16.mxu0 0
  %1401 = vmatmul.mubr.bf16.gmra.mrb[0].mxu0 %v1261
  %v1402 = vpop.f32.mrb[0].mxu0
  %v1403 = vadd.f32 0.0, %v1402
  %v1404 = vpop.f32.mrb[0].mxu0
  %v1405 = vpop.f32.mrb[0].mxu0
  %v1406 = vadd.f32 0.0, %v1405
  %v1407 = vpop.f32.mrb[0].mxu0
  %1408 = vmatprep.mubr.bf16.mxu0 0
  %1409 = vmatmul.mubr.bf16.gmra.mrb[0].mxu0 %v1262
  %v1410 = vpop.f32.mrb[0].mxu0
  %v1411 = vadd.f32 0.0, %v1410
  %v1412 = vpop.f32.mrb[0].mxu0
  %v1413 = vpop.f32.mrb[0].mxu0
  %v1414 = vadd.f32 0.0, %v1413
  %v1415 = vpop.f32.mrb[0].mxu0
  %1416 = vmatprep.mubr.bf16.mxu0 0
  %1417 = vmatmul.mubr.bf16.gmra.mrb[0].mxu0 %v1263
  %v1418 = vpop.f32.mrb[0].mxu0
  %v1419 = vadd.f32 0.0, %v1418
  %v1420 = vpop.f32.mrb[0].mxu0
  %v1421 = vpop.f32.mrb[0].mxu0
  %v1422 = vadd.f32 0.0, %v1421
  %v1423 = vpop.f32.mrb[0].mxu0
  %1424 = vdwg.mxu0
  %v1425 = vpack.c.bf16 %v1366, %v1363
  %v1426 = vpack.c.bf16 %v1374, %v1371
  %v1427 = vpack.c.bf16 %v1382, %v1379
  %v1428 = vpack.c.bf16 %v1390, %v1387
  %v1429 = vpack.c.bf16 %v1398, %v1395
  %v1430 = vpack.c.bf16 %v1406, %v1403
  %v1431 = vpack.c.bf16 %v1414, %v1411
  %v1432 = vpack.c.bf16 %v1422, %v1419
  %v1441 = vunpack.c.l.b16 %v1425
  %v1442 = vunpack.c.h.b16 %v1425
  %v1443 = vunpack.c.l.b16 %v1426
  %v1444 = vunpack.c.h.b16 %v1426
  %v1445 = vunpack.c.l.b16 %v1427
  %v1446 = vunpack.c.h.b16 %v1427
  %v1447 = vunpack.c.l.b16 %v1428
  %v1448 = vunpack.c.h.b16 %v1428
  %v1449 = vunpack.c.l.b16 %v1429
  %v1450 = vunpack.c.h.b16 %v1429
  %v1451 = vunpack.c.l.b16 %v1430
  %v1452 = vunpack.c.h.b16 %v1430
  %v1453 = vunpack.c.l.b16 %v1431
  %v1454 = vunpack.c.h.b16 %v1431
  %v1455 = vunpack.c.l.b16 %v1432
  %v1456 = vunpack.c.h.b16 %v1432
  %v1457 = vpack.c.b16 %v1441, %v1441
  %v1458 = vpack.c.b16 %v1442, %v1442
  %v1459 = vpack.c.b16 %v1443, %v1443
  %v1460 = vpack.c.b16 %v1444, %v1444
  %v1461 = vpack.c.b16 %v1445, %v1445
  %v1462 = vpack.c.b16 %v1446, %v1446
  %v1463 = vpack.c.b16 %v1447, %v1447
  %v1464 = vpack.c.b16 %v1448, %v1448
  %v1465 = vpack.c.b16 %v1449, %v1449
  %v1466 = vpack.c.b16 %v1450, %v1450
  %v1467 = vpack.c.b16 %v1451, %v1451
  %v1468 = vpack.c.b16 %v1452, %v1452
  %v1469 = vpack.c.b16 %v1453, %v1453
  %v1470 = vpack.c.b16 %v1454, %v1454
  %v1471 = vpack.c.b16 %v1455, %v1455
  %v1472 = vpack.c.b16 %v1456, %v1456
  %1489 = vst [vmem:[%s3] sm:$0xf] %v1457
  %1490 = vst [vmem:[%s3 + $0x4] sm:$0xf] %v1458
  %1491 = vst [vmem:[%s3 + $0x8] sm:$0xf] %v1459
  %1492 = vst [vmem:[%s3 + $0xc] sm:$0xf] %v1460
  %1493 = vst [vmem:[%s3 + $0x10] sm:$0xf] %v1461
  %1494 = vst [vmem:[%s3 + $0x14] sm:$0xf] %v1462
  %1495 = vst [vmem:[%s3 + $0x18] sm:$0xf] %v1463
  %1496 = vst [vmem:[%s3 + $0x1c] sm:$0xf] %v1464
  %1497 = vst [vmem:[%s3 + $0x20] sm:$0xf] %v1465
  %1498 = vst [vmem:[%s3 + $0x24] sm:$0xf] %v1466
  %1499 = vst [vmem:[%s3 + $0x28] sm:$0xf] %v1467
  %1500 = vst [vmem:[%s3 + $0x2c] sm:$0xf] %v1468
  %1501 = vst [vmem:[%s3 + $0x30] sm:$0xf] %v1469
  %1502 = vst [vmem:[%s3 + $0x34] sm:$0xf] %v1470
  %1503 = vst [vmem:[%s3 + $0x38] sm:$0xf] %v1471
  %1504 = vst [vmem:[%s3 + $0x3c] sm:$0xf] %v1472
  %v1505 = vadd.f32 %v1363, %v1366
  %v1506 = vadd.f32 %v1505, %v1371
  %v1507 = vadd.f32 %v1506, %v1374
  %v1508 = vadd.f32 %v1507, %v1379
  %v1509 = vadd.f32 %v1508, %v1382
  %v1510 = vadd.f32 %v1509, %v1387
  %v1511 = vadd.f32 %v1510, %v1390
  %v1512 = vadd.f32 %v1511, %v1395
  %v1513 = vadd.f32 %v1512, %v1398
  %v1514 = vadd.f32 %v1513, %v1403
  %v1515 = vadd.f32 %v1514, %v1406
  %v1516 = vadd.f32 %v1515, %v1411
  %v1517 = vadd.f32 %v1516, %v1414
  %v1518 = vadd.f32 %v1517, %v1419
  %v1519 = vadd.f32 %v1518, %v1422
  %v1520 = vrot.slane %v1519, 4
  %v1521 = vadd.f32 %v1519, %v1520
  %v1522 = vrot.slane %v1521, 2
  %v1523 = vadd.f32 %v1521, %v1522
  %v1524 = vrot.slane %v1523, 1
  %v1525 = vadd.f32 %v1523, %v1524
  %1526 = vst [vmem:[%s4] sm:$0x1] %v1525
  %v1527 = vmul.f32 %v1363, %v1363
  %v1528 = vmul.f32 %v1366, %v1366
  %v1529 = vmul.f32 %v1371, %v1371
  %v1530 = vmul.f32 %v1374, %v1374
  %v1531 = vmul.f32 %v1379, %v1379
  %v1532 = vmul.f32 %v1382, %v1382
  %v1533 = vmul.f32 %v1387, %v1387
  %v1534 = vmul.f32 %v1390, %v1390
  %v1535 = vmul.f32 %v1395, %v1395
  %v1536 = vmul.f32 %v1398, %v1398
  %v1537 = vmul.f32 %v1403, %v1403
  %v1538 = vmul.f32 %v1406, %v1406
  %v1539 = vmul.f32 %v1411, %v1411
  %v1540 = vmul.f32 %v1414, %v1414
  %v1541 = vmul.f32 %v1419, %v1419
  %v1542 = vmul.f32 %v1422, %v1422
  %v1543 = vadd.f32 %v1527, %v1528
  %v1544 = vadd.f32 %v1543, %v1529
  %v1545 = vadd.f32 %v1544, %v1530
  %v1546 = vadd.f32 %v1545, %v1531
  %v1547 = vadd.f32 %v1546, %v1532
  %v1548 = vadd.f32 %v1547, %v1533
  %v1549 = vadd.f32 %v1548, %v1534
  %v1550 = vadd.f32 %v1549, %v1535
  %v1551 = vadd.f32 %v1550, %v1536
  %v1552 = vadd.f32 %v1551, %v1537
  %v1553 = vadd.f32 %v1552, %v1538
  %v1554 = vadd.f32 %v1553, %v1539
  %v1555 = vadd.f32 %v1554, %v1540
  %v1556 = vadd.f32 %v1555, %v1541
  %v1557 = vadd.f32 %v1556, %v1542
  %v1558 = vrot.slane %v1557, 4
  %v1559 = vadd.f32 %v1557, %v1558
  %v1560 = vrot.slane %v1559, 2
  %v1561 = vadd.f32 %v1559, %v1560
  %v1562 = vrot.slane %v1561, 1
  %v1563 = vadd.f32 %v1561, %v1562
  %1564 = vst [vmem:[%s4 + $0x1] sm:$0x1] %v1563
  // Predicated region
  $region14: #{basic_block_sparse_forward.7} parent=0 // pred_check
    _
  $region15: #{basic_block_sparse_forward.7} parent=0 // pred_check_branch
    %1566 = sbr.rel (0) target = $region17
  $region16: #{basic_block_sparse_forward.7} parent=0 // pred_region
    _
  $region17: #{basic_block_sparse_forward.7} parent=0 // pred_fallthru
    _
  // Predicated region
  $region18: #{basic_block_sparse_forward.7} parent=0 // pred_check
    _
  $region19: #{basic_block_sparse_forward.7} parent=0 // pred_check_branch
    %1568 = sbr.rel (0) target = $region21
  $region20: #{basic_block_sparse_forward.7} parent=0 // pred_region
    _
  $region21: #{basic_block_sparse_forward.7} parent=0 // pred_fallthru
    _
  // Predicated region
  $region22: #{basic_block_sparse_forward.7} parent=0 // pred_check
    _
  $region23: #{basic_block_sparse_forward.7} parent=0 // pred_check_branch
    %1570 = sbr.rel (0) target = $region25
  $region24: #{basic_block_sparse_forward.7} parent=0 // pred_region
    _
  $region25: #{basic_block_sparse_forward.7} parent=0 // pred_fallthru
    _
  // Predicated region
  $region26: #{basic_block_sparse_forward.7} parent=0 // pred_check
    _
  $region27: #{basic_block_sparse_forward.7} parent=0 // pred_check_branch
    %1572 = sbr.rel (0) target = $region29
  $region28: #{basic_block_sparse_forward.7} parent=0 // pred_region
    _
  $region29: #{basic_block_sparse_forward.7} parent=0 // pred_fallthru
    _
  // Predicated region
  $region30: #{basic_block_sparse_forward.7} parent=0 // pred_check
    _
  $region31: #{basic_block_sparse_forward.7} parent=0 // pred_check_branch
    %1574 = sbr.rel (0) target = $region33
  $region32: #{basic_block_sparse_forward.7} parent=0 // pred_region
    _
  $region33: #{basic_block_sparse_forward.7} parent=0 // pred_fallthru
    _
  // Predicated region
  $region34: #{basic_block_sparse_forward.7} parent=0 // pred_check
    _
  $region35: #{basic_block_sparse_forward.7} parent=0 // pred_check_branch
    %1576 = sbr.rel (0) target = $region37
  $region36: #{basic_block_sparse_forward.7} parent=0 // pred_region
    _
  $region37: #{basic_block_sparse_forward.7} parent=0 // pred_fallthru
    _

// kernel: basic_block_sparse_forward.10
$region0: #{basic_block_sparse_forward.10}
  #allocation0 [shape = 'u32[]', space=smem, size = 0x4, offset = 0x4, fixed_abs, tag = 'smem constant byte address 0x4 - core index']
  #allocation1 [shape = 'u32[144,128]{1,0:T(1,128)}', space=vmem, size = 0x12000, scoped, tag = 'internal scratch']
  %s0 = inlined_call_operand.vmem [shape: bf16[128,4], index: 0, kind: input, shape index: {}]
  %s1 = inlined_call_operand.vmem [shape: bf16[4,128], index: 1, kind: input, shape index: {}]
  %s2 = inlined_call_operand.vmem [shape: bf16[128,128], index: 2, kind: output, shape index: {0}]
  %s3 = inlined_call_operand.vmem [shape: f32[1,2,128], index: 3, kind: output, shape index: {1}]
  %4 = xla_tuple %s2, %s3
  %s5 = sld [smem:[#allocation0]]
  $region26: #{basic_block_sparse_forward.10} parent=0
    _
  %s7 = ssub.s32 1, %s5
  %s8 = scalar_select 0, %s7, %s5
  // Predicated region
  $region2: #{basic_block_sparse_forward.10} parent=0 // pred_check
    _
  $region3: #{basic_block_sparse_forward.10} parent=0 // pred_check_branch
    %10 = sbr.rel (0) target = $region5
  $region4: #{basic_block_sparse_forward.10} parent=0 // pred_region
    _
  $region5: #{basic_block_sparse_forward.10} parent=0 // pred_fallthru
    _
  // Predicated region
  $region6: #{basic_block_sparse_forward.10} parent=0 // pred_check
    _
  $region7: #{basic_block_sparse_forward.10} parent=0 // pred_check_branch
    %12 = sbr.rel (0) target = $region9
  $region8: #{basic_block_sparse_forward.10} parent=0 // pred_region
    _
  $region9: #{basic_block_sparse_forward.10} parent=0 // pred_fallthru
    _
  %v14 = vld [vmem:[%s0] sm:$0xf]
  %v15 = vld [vmem:[%s0 + $0x4] sm:$0xf]
  %v16 = vld [vmem:[%s0 + $0x8] sm:$0xf]
  %v17 = vld [vmem:[%s0 + $0xc] sm:$0xf]
  %v18 = vld [vmem:[%s0 + $0x10] sm:$0xf]
  %v19 = vld [vmem:[%s0 + $0x14] sm:$0xf]
  %v20 = vld [vmem:[%s0 + $0x18] sm:$0xf]
  %v21 = vld [vmem:[%s0 + $0x1c] sm:$0xf]
  %v22 = vld [vmem:[%s0 + $0x20] sm:$0xf]
  %v23 = vld [vmem:[%s0 + $0x24] sm:$0xf]
  %v24 = vld [vmem:[%s0 + $0x28] sm:$0xf]
  %v25 = vld [vmem:[%s0 + $0x2c] sm:$0xf]
  %v26 = vld [vmem:[%s0 + $0x30] sm:$0xf]
  %v27 = vld [vmem:[%s0 + $0x34] sm:$0xf]
  %v28 = vld [vmem:[%s0 + $0x38] sm:$0xf]
  %v29 = vld [vmem:[%s0 + $0x3c] sm:$0xf]
  %v30 = vld [vmem:[%s1] sm:$0x3]
  %v47 = vunpack.c.l.b16 %v14
  %v48 = vunpack.c.l.b16 %v15
  %v49 = vunpack.c.l.b16 %v16
  %v50 = vunpack.c.l.b16 %v17
  %v51 = vunpack.c.l.b16 %v18
  %v52 = vunpack.c.l.b16 %v19
  %v53 = vunpack.c.l.b16 %v20
  %v54 = vunpack.c.l.b16 %v21
  %v55 = vunpack.c.l.b16 %v22
  %v56 = vunpack.c.l.b16 %v23
  %v57 = vunpack.c.l.b16 %v24
  %v58 = vunpack.c.l.b16 %v25
  %v59 = vunpack.c.l.b16 %v26
  %v60 = vunpack.c.l.b16 %v27
  %v61 = vunpack.c.l.b16 %v28
  %v62 = vunpack.c.l.b16 %v29
  %v63 = vpack.c.b16 %v48, %v47
  %v64 = vpack.c.b16 %v50, %v49
  %v65 = vpack.c.b16 %v52, %v51
  %v66 = vpack.c.b16 %v54, %v53
  %v67 = vpack.c.b16 %v56, %v55
  %v68 = vpack.c.b16 %v58, %v57
  %v69 = vpack.c.b16 %v60, %v59
  %v70 = vpack.c.b16 %v62, %v61
  %vm71 = vcmask 31744
  %v73 = vsel %vm71, %v63, 0
  %v76 = vsel %vm71, %v64, 0
  %v79 = vsel %vm71, %v65, 0
  %v82 = vsel %vm71, %v66, 0
  %v85 = vsel %vm71, %v67, 0
  %v88 = vsel %vm71, %v68, 0
  %v91 = vsel %vm71, %v69, 0
  %v94 = vsel %vm71, %v70, 0
  %vm96 = vcmask 1041408
  %v98 = vsel %vm96, %v30, 0
  %100 = vmatprep.subr.bf16.mxu0 0
  %101 = vmatpush1.bf16.msra.mxu0 %v98
  %102 = vmatprep.subr.bf16.mxu0 0
  %103 = vmatpush1.bf16.msra.mxu0 0
  %104 = vmatprep.subr.bf16.mxu0 0
  %105 = vmatpush1.bf16.msra.mxu0 0
  %106 = vmatprep.subr.bf16.mxu0 0
  %107 = vmatpush1.bf16.msra.mxu0 0
  %108 = vmatprep.subr.bf16.mxu0 0
  %109 = vmatpush1.bf16.msra.mxu0 0
  %110 = vmatprep.subr.bf16.mxu0 0
  %111 = vmatpush1.bf16.msra.mxu0 0
  %112 = vmatprep.subr.bf16.mxu0 0
  %113 = vmatpush1.bf16.msra.mxu0 0
  %114 = vmatprep.subr.bf16.mxu0 0
  %115 = vmatpush1.bf16.msra.mxu0 0
  %116 = vmatprep.subr.bf16.mxu0 0
  %117 = vmatpush1.bf16.msra.mxu0 0
  %118 = vmatprep.subr.bf16.mxu0 0
  %119 = vmatpush1.bf16.msra.mxu0 0
  %120 = vmatprep.subr.bf16.mxu0 0
  %121 = vmatpush1.bf16.msra.mxu0 0
  %122 = vmatprep.subr.bf16.mxu0 0
  %123 = vmatpush1.bf16.msra.mxu0 0
  %124 = vmatprep.subr.bf16.mxu0 0
  %125 = vmatpush1.bf16.msra.mxu0 0
  %126 = vmatprep.subr.bf16.mxu0 0
  %127 = vmatpush1.bf16.msra.mxu0 0
  %128 = vmatprep.subr.bf16.mxu0 0
  %129 = vmatpush1.bf16.msra.mxu0 0
  %130 = vmatprep.subr.bf16.mxu0 0
  %131 = vmatpush1.bf16.msra.mxu0 0
  %132 = vmatprep.mubr.bf16.mxu0 0
  %133 = vmatmul.mubr.bf16.gmra.mrb[0].mxu0 %v73
  %v134 = vpop.f32.mrb[0].mxu0
  %v135 = vadd.f32 0.0, %v134
  %v136 = vpop.f32.mrb[0].mxu0
  %v137 = vpop.f32.mrb[0].mxu0
  %v138 = vadd.f32 0.0, %v137
  %v139 = vpop.f32.mrb[0].mxu0
  %140 = vmatprep.mubr.bf16.mxu0 0
  %141 = vmatmul.mubr.bf16.gmra.mrb[0].mxu0 %v76
  %v142 = vpop.f32.mrb[0].mxu0
  %v143 = vadd.f32 0.0, %v142
  %v144 = vpop.f32.mrb[0].mxu0
  %v145 = vpop.f32.mrb[0].mxu0
  %v146 = vadd.f32 0.0, %v145
  %v147 = vpop.f32.mrb[0].mxu0
  %148 = vmatprep.mubr.bf16.mxu0 0
  %149 = vmatmul.mubr.bf16.gmra.mrb[0].mxu0 %v79
  %v150 = vpop.f32.mrb[0].mxu0
  %v151 = vadd.f32 0.0, %v150
  %v152 = vpop.f32.mrb[0].mxu0
  %v153 = vpop.f32.mrb[0].mxu0
  %v154 = vadd.f32 0.0, %v153
  %v155 = vpop.f32.mrb[0].mxu0
  %156 = vmatprep.mubr.bf16.mxu0 0
  %157 = vmatmul.mubr.bf16.gmra.mrb[0].mxu0 %v82
  %v158 = vpop.f32.mrb[0].mxu0
  %v159 = vadd.f32 0.0, %v158
  %v160 = vpop.f32.mrb[0].mxu0
  %v161 = vpop.f32.mrb[0].mxu0
  %v162 = vadd.f32 0.0, %v161
  %v163 = vpop.f32.mrb[0].mxu0
  %164 = vmatprep.mubr.bf16.mxu0 0
  %165 = vmatmul.mubr.bf16.gmra.mrb[0].mxu0 %v85
  %v166 = vpop.f32.mrb[0].mxu0
  %v167 = vadd.f32 0.0, %v166
  %v168 = vpop.f32.mrb[0].mxu0
  %v169 = vpop.f32.mrb[0].mxu0
  %v170 = vadd.f32 0.0, %v169
  %v171 = vpop.f32.mrb[0].mxu0
  %172 = vmatprep.mubr.bf16.mxu0 0
  %173 = vmatmul.mubr.bf16.gmra.mrb[0].mxu0 %v88
  %v174 = vpop.f32.mrb[0].mxu0
  %v175 = vadd.f32 0.0, %v174
  %v176 = vpop.f32.mrb[0].mxu0
  %v177 = vpop.f32.mrb[0].mxu0
  %v178 = vadd.f32 0.0, %v177
  %v179 = vpop.f32.mrb[0].mxu0
  %180 = vmatprep.mubr.bf16.mxu0 0
  %181 = vmatmul.mubr.bf16.gmra.mrb[0].mxu0 %v91
  %v182 = vpop.f32.mrb[0].mxu0
  %v183 = vadd.f32 0.0, %v182
  %v184 = vpop.f32.mrb[0].mxu0
  %v185 = vpop.f32.mrb[0].mxu0
  %v186 = vadd.f32 0.0, %v185
  %v187 = vpop.f32.mrb[0].mxu0
  %188 = vmatprep.mubr.bf16.mxu0 0
  %189 = vmatmul.mubr.bf16.gmra.mrb[0].mxu0 %v94
  %v190 = vpop.f32.mrb[0].mxu0
  %v191 = vadd.f32 0.0, %v190
  %v192 = vpop.f32.mrb[0].mxu0
  %v193 = vpop.f32.mrb[0].mxu0
  %v194 = vadd.f32 0.0, %v193
  %v195 = vpop.f32.mrb[0].mxu0
  %196 = vdwg.mxu0
  %v197 = vpack.c.bf16 %v138, %v135
  %v198 = vpack.c.bf16 %v146, %v143
  %v199 = vpack.c.bf16 %v154, %v151
  %v200 = vpack.c.bf16 %v162, %v159
  %v201 = vpack.c.bf16 %v170, %v167
  %v202 = vpack.c.bf16 %v178, %v175
  %v203 = vpack.c.bf16 %v186, %v183
  %v204 = vpack.c.bf16 %v194, %v191
  %v213 = vunpack.c.l.b16 %v197
  %v214 = vunpack.c.h.b16 %v197
  %v215 = vunpack.c.l.b16 %v198
  %v216 = vunpack.c.h.b16 %v198
  %v217 = vunpack.c.l.b16 %v199
  %v218 = vunpack.c.h.b16 %v199
  %v219 = vunpack.c.l.b16 %v200
  %v220 = vunpack.c.h.b16 %v200
  %v221 = vunpack.c.l.b16 %v201
  %v222 = vunpack.c.h.b16 %v201
  %v223 = vunpack.c.l.b16 %v202
  %v224 = vunpack.c.h.b16 %v202
  %v225 = vunpack.c.l.b16 %v203
  %v226 = vunpack.c.h.b16 %v203
  %v227 = vunpack.c.l.b16 %v204
  %v228 = vunpack.c.h.b16 %v204
  %v229 = vpack.c.b16 %v213, %v213
  %v230 = vpack.c.b16 %v214, %v214
  %v231 = vpack.c.b16 %v215, %v215
  %v232 = vpack.c.b16 %v216, %v216
  %v233 = vpack.c.b16 %v217, %v217
  %v234 = vpack.c.b16 %v218, %v218
  %v235 = vpack.c.b16 %v219, %v219
  %v236 = vpack.c.b16 %v220, %v220
  %v237 = vpack.c.b16 %v221, %v221
  %v238 = vpack.c.b16 %v222, %v222
  %v239 = vpack.c.b16 %v223, %v223
  %v240 = vpack.c.b16 %v224, %v224
  %v241 = vpack.c.b16 %v225, %v225
  %v242 = vpack.c.b16 %v226, %v226
  %v243 = vpack.c.b16 %v227, %v227
  %v244 = vpack.c.b16 %v228, %v228
  %261 = vst [vmem:[%s2] sm:$0xf] %v229
  %262 = vst [vmem:[%s2 + $0x4] sm:$0xf] %v230
  %263 = vst [vmem:[%s2 + $0x8] sm:$0xf] %v231
  %264 = vst [vmem:[%s2 + $0xc] sm:$0xf] %v232
  %265 = vst [vmem:[%s2 + $0x10] sm:$0xf] %v233
  %266 = vst [vmem:[%s2 + $0x14] sm:$0xf] %v234
  %267 = vst [vmem:[%s2 + $0x18] sm:$0xf] %v235
  %268 = vst [vmem:[%s2 + $0x1c] sm:$0xf] %v236
  %269 = vst [vmem:[%s2 + $0x20] sm:$0xf] %v237
  %270 = vst [vmem:[%s2 + $0x24] sm:$0xf] %v238
  %271 = vst [vmem:[%s2 + $0x28] sm:$0xf] %v239
  %272 = vst [vmem:[%s2 + $0x2c] sm:$0xf] %v240
  %273 = vst [vmem:[%s2 + $0x30] sm:$0xf] %v241
  %274 = vst [vmem:[%s2 + $0x34] sm:$0xf] %v242
  %275 = vst [vmem:[%s2 + $0x38] sm:$0xf] %v243
  %276 = vst [vmem:[%s2 + $0x3c] sm:$0xf] %v244
  %s277 = smul.u32 0, 128
  %v278 = vlaneseq
  %v279 = vshrl.u32 %v278, 7
  %v280 = vadd.s32 %v279, 8
  %v281 = vadd.s32 %v279, 16
  %v282 = vadd.s32 %v279, 24
  %v283 = vadd.s32 %v279, 32
  %v284 = vadd.s32 %v279, 40
  %v285 = vadd.s32 %v279, 48
  %v286 = vadd.s32 %v279, 56
  %v287 = vadd.s32 %v279, 64
  %v288 = vadd.s32 %v279, 72
  %v289 = vadd.s32 %v279, 80
  %v290 = vadd.s32 %v279, 88
  %v291 = vadd.s32 %v279, 96
  %v292 = vadd.s32 %v279, 104
  %v293 = vadd.s32 %v279, 112
  %v294 = vadd.s32 %v279, 120
  %v295 = vstv %s277
  %v296 = vadd.s32 %v295, %v279
  %v297 = vadd.s32 %v295, %v280
  %v298 = vadd.s32 %v295, %v281
  %v299 = vadd.s32 %v295, %v282
  %v300 = vadd.s32 %v295, %v283
  %v301 = vadd.s32 %v295, %v284
  %v302 = vadd.s32 %v295, %v285
  %v303 = vadd.s32 %v295, %v286
  %v304 = vadd.s32 %v295, %v287
  %v305 = vadd.s32 %v295, %v288
  %v306 = vadd.s32 %v295, %v289
  %v307 = vadd.s32 %v295, %v290
  %v308 = vadd.s32 %v295, %v291
  %v309 = vadd.s32 %v295, %v292
  %v310 = vadd.s32 %v295, %v293
  %v311 = vadd.s32 %v295, %v294
  %vm312 = vcmp.lt.s32.totalorder %v296, 128
  %vm313 = vcmp.lt.s32.totalorder %v297, 128
  %vm314 = vcmp.lt.s32.totalorder %v298, 128
  %vm315 = vcmp.lt.s32.totalorder %v299, 128
  %vm316 = vcmp.lt.s32.totalorder %v300, 128
  %vm317 = vcmp.lt.s32.totalorder %v301, 128
  %vm318 = vcmp.lt.s32.totalorder %v302, 128
  %vm319 = vcmp.lt.s32.totalorder %v303, 128
  %vm320 = vcmp.lt.s32.totalorder %v304, 128
  %vm321 = vcmp.lt.s32.totalorder %v305, 128
  %vm322 = vcmp.lt.s32.totalorder %v306, 128
  %vm323 = vcmp.lt.s32.totalorder %v307, 128
  %vm324 = vcmp.lt.s32.totalorder %v308, 128
  %vm325 = vcmp.lt.s32.totalorder %v309, 128
  %vm326 = vcmp.lt.s32.totalorder %v310, 128
  %vm327 = vcmp.lt.s32.totalorder %v311, 128
  %v328 = vsel %vm312, %v135, 0.0
  %v329 = vsel %vm313, %v138, 0.0
  %v330 = vsel %vm314, %v143, 0.0
  %v331 = vsel %vm315, %v146, 0.0
  %v332 = vsel %vm316, %v151, 0.0
  %v333 = vsel %vm317, %v154, 0.0
  %v334 = vsel %vm318, %v159, 0.0
  %v335 = vsel %vm319, %v162, 0.0
  %v336 = vsel %vm320, %v167, 0.0
  %v337 = vsel %vm321, %v170, 0.0
  %v338 = vsel %vm322, %v175, 0.0
  %v339 = vsel %vm323, %v178, 0.0
  %v340 = vsel %vm324, %v183, 0.0
  %v341 = vsel %vm325, %v186, 0.0
  %v342 = vsel %vm326, %v191, 0.0
  %v343 = vsel %vm327, %v194, 0.0
  %v344 = vadd.f32 %v328, %v329
  %v345 = vadd.f32 %v344, %v330
  %v346 = vadd.f32 %v345, %v331
  %v347 = vadd.f32 %v346, %v332
  %v348 = vadd.f32 %v347, %v333
  %v349 = vadd.f32 %v348, %v334
  %v350 = vadd.f32 %v349, %v335
  %v351 = vadd.f32 %v350, %v336
  %v352 = vadd.f32 %v351, %v337
  %v353 = vadd.f32 %v352, %v338
  %v354 = vadd.f32 %v353, %v339
  %v355 = vadd.f32 %v354, %v340
  %v356 = vadd.f32 %v355, %v341
  %v357 = vadd.f32 %v356, %v342
  %v358 = vadd.f32 %v357, %v343
  %v359 = vrot.slane %v358, 4
  %v360 = vadd.f32 %v358, %v359
  %v361 = vrot.slane %v360, 2
  %v362 = vadd.f32 %v360, %v361
  %v363 = vrot.slane %v362, 1
  %v364 = vadd.f32 %v362, %v363
  %365 = vst [vmem:[%s3] sm:$0x1] %v364
  %v366 = vmul.f32 %v328, %v328
  %v367 = vmul.f32 %v329, %v329
  %v368 = vmul.f32 %v330, %v330
  %v369 = vmul.f32 %v331, %v331
  %v370 = vmul.f32 %v332, %v332
  %v371 = vmul.f32 %v333, %v333
  %v372 = vmul.f32 %v334, %v334
  %v373 = vmul.f32 %v335, %v335
  %v374 = vmul.f32 %v336, %v336
  %v375 = vmul.f32 %v337, %v337
  %v376 = vmul.f32 %v338, %v338
  %v377 = vmul.f32 %v339, %v339
  %v378 = vmul.f32 %v340, %v340
  %v379 = vmul.f32 %v341, %v341
  %v380 = vmul.f32 %v342, %v342
  %v381 = vmul.f32 %v343, %v343
  %v382 = vadd.f32 %v366, %v367
  %v383 = vadd.f32 %v382, %v368
  %v384 = vadd.f32 %v383, %v369
  %v385 = vadd.f32 %v384, %v370
  %v386 = vadd.f32 %v385, %v371
  %v387 = vadd.f32 %v386, %v372
  %v388 = vadd.f32 %v387, %v373
  %v389 = vadd.f32 %v388, %v374
  %v390 = vadd.f32 %v389, %v375
  %v391 = vadd.f32 %v390, %v376
  %v392 = vadd.f32 %v391, %v377
  %v393 = vadd.f32 %v392, %v378
  %v394 = vadd.f32 %v393, %v379
  %v395 = vadd.f32 %v394, %v380
  %v396 = vadd.f32 %v395, %v381
  %v397 = vrot.slane %v396, 4
  %v398 = vadd.f32 %v396, %v397
  %v399 = vrot.slane %v398, 2
  %v400 = vadd.f32 %v398, %v399
  %v401 = vrot.slane %v400, 1
  %v402 = vadd.f32 %v400, %v401
  %403 = vst [vmem:[%s3 + $0x1] sm:$0x1] %v402
  // Predicated region
  $region10: #{basic_block_sparse_forward.10} parent=0 // pred_check
    _
  $region11: #{basic_block_sparse_forward.10} parent=0 // pred_check_branch
    %405 = sbr.rel (0) target = $region13
  $region12: #{basic_block_sparse_forward.10} parent=0 // pred_region
    _
  $region13: #{basic_block_sparse_forward.10} parent=0 // pred_fallthru
    _
  // Predicated region
  $region14: #{basic_block_sparse_forward.10} parent=0 // pred_check
    _
  $region15: #{basic_block_sparse_forward.10} parent=0 // pred_check_branch
    %407 = sbr.rel (0) target = $region17
  $region16: #{basic_block_sparse_forward.10} parent=0 // pred_region
    _
  $region17: #{basic_block_sparse_forward.10} parent=0 // pred_fallthru
    _
  // Predicated region
  $region18: #{basic_block_sparse_forward.10} parent=0 // pred_check
    _
  $region19: #{basic_block_sparse_forward.10} parent=0 // pred_check_branch
    %409 = sbr.rel (0) target = $region21
  $region20: #{basic_block_sparse_forward.10} parent=0 // pred_region
    _
  $region21: #{basic_block_sparse_forward.10} parent=0 // pred_fallthru
    _
  // Predicated region
  $region22: #{basic_block_sparse_forward.10} parent=0 // pred_check
    _
  $region23: #{basic_block_sparse_forward.10} parent=0 // pred_check_branch
    %411 = sbr.rel (0) target = $region25
  $region24: #{basic_block_sparse_forward.10} parent=0 // pred_region
    _
  $region25: #{basic_block_sparse_forward.10} parent=0 // pred_fallthru
    _

// kernel: basic_block_sparse_forward.11
$region0: #{basic_block_sparse_forward.11}
  #allocation0 [shape = 'u32[]', space=smem, size = 0x4, offset = 0x4, fixed_abs, tag = 'smem constant byte address 0x4 - core index']
  #allocation1 [shape = 'u32[144,128]{1,0:T(1,128)}', space=vmem, size = 0x12000, scoped, tag = 'internal scratch']
  %s0 = inlined_call_operand.vmem [shape: bf16[128,128], index: 0, kind: input, shape index: {}]
  %s1 = inlined_call_operand.vmem [shape: f32[2,128], index: 1, kind: input, shape index: {}]
  %s2 = inlined_call_operand.vmem [shape: bf16[128,128], index: 2, kind: input, shape index: {}]
  %s3 = inlined_call_operand.vmem [shape: f32[2,128], index: 3, kind: input, shape index: {}]
  %s4 = inlined_call_operand.vmem [shape: f32[128,128], index: 4, kind: output, shape index: {}]
  %s5 = sld [smem:[#allocation0]]
  $region26: #{basic_block_sparse_forward.11} parent=0
    _
  %s7 = ssub.s32 1, %s5
  %s8 = scalar_select 0, %s7, %s5
  // Predicated region
  $region2: #{basic_block_sparse_forward.11} parent=0 // pred_check
    _
  $region3: #{basic_block_sparse_forward.11} parent=0 // pred_check_branch
    %10 = sbr.rel (0) target = $region5
  $region4: #{basic_block_sparse_forward.11} parent=0 // pred_region
    _
  $region5: #{basic_block_sparse_forward.11} parent=0 // pred_fallthru
    _
  // Predicated region
  $region6: #{basic_block_sparse_forward.11} parent=0 // pred_check
    _
  $region7: #{basic_block_sparse_forward.11} parent=0 // pred_check_branch
    %12 = sbr.rel (0) target = $region9
  $region8: #{basic_block_sparse_forward.11} parent=0 // pred_region
    _
  $region9: #{basic_block_sparse_forward.11} parent=0 // pred_fallthru
    _
  // Predicated region
  $region10: #{basic_block_sparse_forward.11} parent=0 // pred_check
    _
  $region11: #{basic_block_sparse_forward.11} parent=0 // pred_check_branch
    %14 = sbr.rel (0) target = $region13
  $region12: #{basic_block_sparse_forward.11} parent=0 // pred_region
    _
  $region13: #{basic_block_sparse_forward.11} parent=0 // pred_fallthru
    _
  // Predicated region
  $region14: #{basic_block_sparse_forward.11} parent=0 // pred_check
    _
  $region15: #{basic_block_sparse_forward.11} parent=0 // pred_check_branch
    %16 = sbr.rel (0) target = $region17
  $region16: #{basic_block_sparse_forward.11} parent=0 // pred_region
    _
  $region17: #{basic_block_sparse_forward.11} parent=0 // pred_fallthru
    _
  %v17 = vld [vmem:[%s0] sm:$0xf]
  %v18 = vld [vmem:[%s0 + $0x4] sm:$0xf]
  %v19 = vld [vmem:[%s0 + $0x8] sm:$0xf]
  %v20 = vld [vmem:[%s0 + $0xc] sm:$0xf]
  %v21 = vld [vmem:[%s0 + $0x10] sm:$0xf]
  %v22 = vld [vmem:[%s0 + $0x14] sm:$0xf]
  %v23 = vld [vmem:[%s0 + $0x18] sm:$0xf]
  %v24 = vld [vmem:[%s0 + $0x1c] sm:$0xf]
  %v25 = vld [vmem:[%s0 + $0x20] sm:$0xf]
  %v26 = vld [vmem:[%s0 + $0x24] sm:$0xf]
  %v27 = vld [vmem:[%s0 + $0x28] sm:$0xf]
  %v28 = vld [vmem:[%s0 + $0x2c] sm:$0xf]
  %v29 = vld [vmem:[%s0 + $0x30] sm:$0xf]
  %v30 = vld [vmem:[%s0 + $0x34] sm:$0xf]
  %v31 = vld [vmem:[%s0 + $0x38] sm:$0xf]
  %v32 = vld [vmem:[%s0 + $0x3c] sm:$0xf]
  %v33 = vunpack.c.l.bf16 %v17
  %v34 = vunpack.c.l.bf16 %v18
  %v35 = vunpack.c.l.bf16 %v19
  %v36 = vunpack.c.l.bf16 %v20
  %v37 = vunpack.c.l.bf16 %v21
  %v38 = vunpack.c.l.bf16 %v22
  %v39 = vunpack.c.l.bf16 %v23
  %v40 = vunpack.c.l.bf16 %v24
  %v41 = vunpack.c.l.bf16 %v25
  %v42 = vunpack.c.l.bf16 %v26
  %v43 = vunpack.c.l.bf16 %v27
  %v44 = vunpack.c.l.bf16 %v28
  %v45 = vunpack.c.l.bf16 %v29
  %v46 = vunpack.c.l.bf16 %v30
  %v47 = vunpack.c.l.bf16 %v31
  %v48 = vunpack.c.l.bf16 %v32
  %v49 = vld [vmem:[%s1] sm:$0x1]
  %v50 = vlaneseq
  %v51 = vshrl.u32 %v50, 7
  %v52 = vsub.s32 0, %v51
  %v53 = vrot.slane %v49, %v52
  %v54 = vmul.f32 %v33, %v53
  %v55 = vmul.f32 %v34, %v53
  %v56 = vmul.f32 %v35, %v53
  %v57 = vmul.f32 %v36, %v53
  %v58 = vmul.f32 %v37, %v53
  %v59 = vmul.f32 %v38, %v53
  %v60 = vmul.f32 %v39, %v53
  %v61 = vmul.f32 %v40, %v53
  %v62 = vmul.f32 %v41, %v53
  %v63 = vmul.f32 %v42, %v53
  %v64 = vmul.f32 %v43, %v53
  %v65 = vmul.f32 %v44, %v53
  %v66 = vmul.f32 %v45, %v53
  %v67 = vmul.f32 %v46, %v53
  %v68 = vmul.f32 %v47, %v53
  %v69 = vmul.f32 %v48, %v53
  %v70 = vld [vmem:[%s1 + $0x1] sm:$0x1]
  %v71 = vlaneseq
  %v72 = vshrl.u32 %v71, 7
  %v73 = vsub.s32 0, %v72
  %v74 = vrot.slane %v70, %v73
  %v75 = vadd.f32 %v54, %v74
  %v76 = vadd.f32 %v55, %v74
  %v77 = vadd.f32 %v56, %v74
  %v78 = vadd.f32 %v57, %v74
  %v79 = vadd.f32 %v58, %v74
  %v80 = vadd.f32 %v59, %v74
  %v81 = vadd.f32 %v60, %v74
  %v82 = vadd.f32 %v61, %v74
  %v83 = vadd.f32 %v62, %v74
  %v84 = vadd.f32 %v63, %v74
  %v85 = vadd.f32 %v64, %v74
  %v86 = vadd.f32 %v65, %v74
  %v87 = vadd.f32 %v66, %v74
  %v88 = vadd.f32 %v67, %v74
  %v89 = vadd.f32 %v68, %v74
  %v90 = vadd.f32 %v69, %v74
  %v91 = vld [vmem:[%s2] sm:$0xf]
  %v92 = vld [vmem:[%s2 + $0x4] sm:$0xf]
  %v93 = vld [vmem:[%s2 + $0x8] sm:$0xf]
  %v94 = vld [vmem:[%s2 + $0xc] sm:$0xf]
  %v95 = vld [vmem:[%s2 + $0x10] sm:$0xf]
  %v96 = vld [vmem:[%s2 + $0x14] sm:$0xf]
  %v97 = vld [vmem:[%s2 + $0x18] sm:$0xf]
  %v98 = vld [vmem:[%s2 + $0x1c] sm:$0xf]
  %v99 = vld [vmem:[%s2 + $0x20] sm:$0xf]
  %v100 = vld [vmem:[%s2 + $0x24] sm:$0xf]
  %v101 = vld [vmem:[%s2 + $0x28] sm:$0xf]
  %v102 = vld [vmem:[%s2 + $0x2c] sm:$0xf]
  %v103 = vld [vmem:[%s2 + $0x30] sm:$0xf]
  %v104 = vld [vmem:[%s2 + $0x34] sm:$0xf]
  %v105 = vld [vmem:[%s2 + $0x38] sm:$0xf]
  %v106 = vld [vmem:[%s2 + $0x3c] sm:$0xf]
  %v107 = vunpack.c.l.bf16 %v91
  %v108 = vunpack.c.l.bf16 %v92
  %v109 = vunpack.c.l.bf16 %v93
  %v110 = vunpack.c.l.bf16 %v94
  %v111 = vunpack.c.l.bf16 %v95
  %v112 = vunpack.c.l.bf16 %v96
  %v113 = vunpack.c.l.bf16 %v97
  %v114 = vunpack.c.l.bf16 %v98
  %v115 = vunpack.c.l.bf16 %v99
  %v116 = vunpack.c.l.bf16 %v100
  %v117 = vunpack.c.l.bf16 %v101
  %v118 = vunpack.c.l.bf16 %v102
  %v119 = vunpack.c.l.bf16 %v103
  %v120 = vunpack.c.l.bf16 %v104
  %v121 = vunpack.c.l.bf16 %v105
  %v122 = vunpack.c.l.bf16 %v106
  %v123 = vld [vmem:[%s3] sm:$0x1]
  %v124 = vlaneseq
  %v125 = vshrl.u32 %v124, 7
  %v126 = vsub.s32 0, %v125
  %v127 = vrot.slane %v123, %v126
  %v128 = vmul.f32 %v107, %v127
  %v129 = vmul.f32 %v108, %v127
  %v130 = vmul.f32 %v109, %v127
  %v131 = vmul.f32 %v110, %v127
  %v132 = vmul.f32 %v111, %v127
  %v133 = vmul.f32 %v112, %v127
  %v134 = vmul.f32 %v113, %v127
  %v135 = vmul.f32 %v114, %v127
  %v136 = vmul.f32 %v115, %v127
  %v137 = vmul.f32 %v116, %v127
  %v138 = vmul.f32 %v117, %v127
  %v139 = vmul.f32 %v118, %v127
  %v140 = vmul.f32 %v119, %v127
  %v141 = vmul.f32 %v120, %v127
  %v142 = vmul.f32 %v121, %v127
  %v143 = vmul.f32 %v122, %v127
  %v144 = vld [vmem:[%s3 + $0x1] sm:$0x1]
  %v145 = vlaneseq
  %v146 = vshrl.u32 %v145, 7
  %v147 = vsub.s32 0, %v146
  %v148 = vrot.slane %v144, %v147
  %v149 = vadd.f32 %v128, %v148
  %v150 = vadd.f32 %v129, %v148
  %v151 = vadd.f32 %v130, %v148
  %v152 = vadd.f32 %v131, %v148
  %v153 = vadd.f32 %v132, %v148
  %v154 = vadd.f32 %v133, %v148
  %v155 = vadd.f32 %v134, %v148
  %v156 = vadd.f32 %v135, %v148
  %v157 = vadd.f32 %v136, %v148
  %v158 = vadd.f32 %v137, %v148
  %v159 = vadd.f32 %v138, %v148
  %v160 = vadd.f32 %v139, %v148
  %v161 = vadd.f32 %v140, %v148
  %v162 = vadd.f32 %v141, %v148
  %v163 = vadd.f32 %v142, %v148
  %v164 = vadd.f32 %v143, %v148
  %v165 = vadd.f32 %v75, %v149
  %v166 = vadd.f32 %v76, %v150
  %v167 = vadd.f32 %v77, %v151
  %v168 = vadd.f32 %v78, %v152
  %v169 = vadd.f32 %v79, %v153
  %v170 = vadd.f32 %v80, %v154
  %v171 = vadd.f32 %v81, %v155
  %v172 = vadd.f32 %v82, %v156
  %v173 = vadd.f32 %v83, %v157
  %v174 = vadd.f32 %v84, %v158
  %v175 = vadd.f32 %v85, %v159
  %v176 = vadd.f32 %v86, %v160
  %v177 = vadd.f32 %v87, %v161
  %v178 = vadd.f32 %v88, %v162
  %v179 = vadd.f32 %v89, %v163
  %v180 = vadd.f32 %v90, %v164
  %v181 = vmax.f32 %v165, 0.0
  %v182 = vmax.f32 %v166, 0.0
  %v183 = vmax.f32 %v167, 0.0
  %v184 = vmax.f32 %v168, 0.0
  %v185 = vmax.f32 %v169, 0.0
  %v186 = vmax.f32 %v170, 0.0
  %v187 = vmax.f32 %v171, 0.0
  %v188 = vmax.f32 %v172, 0.0
  %v189 = vmax.f32 %v173, 0.0
  %v190 = vmax.f32 %v174, 0.0
  %v191 = vmax.f32 %v175, 0.0
  %v192 = vmax.f32 %v176, 0.0
  %v193 = vmax.f32 %v177, 0.0
  %v194 = vmax.f32 %v178, 0.0
  %v195 = vmax.f32 %v179, 0.0
  %v196 = vmax.f32 %v180, 0.0
  %197 = vst [vmem:[%s4] sm:$0xff] %v181
  %198 = vst [vmem:[%s4 + $0x8] sm:$0xff] %v182
  %199 = vst [vmem:[%s4 + $0x10] sm:$0xff] %v183
  %200 = vst [vmem:[%s4 + $0x18] sm:$0xff] %v184
  %201 = vst [vmem:[%s4 + $0x20] sm:$0xff] %v185
  %202 = vst [vmem:[%s4 + $0x28] sm:$0xff] %v186
  %203 = vst [vmem:[%s4 + $0x30] sm:$0xff] %v187
  %204 = vst [vmem:[%s4 + $0x38] sm:$0xff] %v188
  %205 = vst [vmem:[%s4 + $0x40] sm:$0xff] %v189
  %206 = vst [vmem:[%s4 + $0x48] sm:$0xff] %v190
  %207 = vst [vmem:[%s4 + $0x50] sm:$0xff] %v191
  %208 = vst [vmem:[%s4 + $0x58] sm:$0xff] %v192
  %209 = vst [vmem:[%s4 + $0x60] sm:$0xff] %v193
  %210 = vst [vmem:[%s4 + $0x68] sm:$0xff] %v194
  %211 = vst [vmem:[%s4 + $0x70] sm:$0xff] %v195
  %212 = vst [vmem:[%s4 + $0x78] sm:$0xff] %v196
  // Predicated region
  $region18: #{basic_block_sparse_forward.11} parent=0 // pred_check
    _
  $region19: #{basic_block_sparse_forward.11} parent=0 // pred_check_branch
    %214 = sbr.rel (0) target = $region21
  $region20: #{basic_block_sparse_forward.11} parent=0 // pred_region
    _
  $region21: #{basic_block_sparse_forward.11} parent=0 // pred_fallthru
    _
  // Predicated region
  $region22: #{basic_block_sparse_forward.11} parent=0 // pred_check
    _
  $region23: #{basic_block_sparse_forward.11} parent=0 // pred_check_branch
    %216 = sbr.rel (0) target = $region25
  $region24: #{basic_block_sparse_forward.11} parent=0 // pred_region
    _
  $region25: #{basic_block_sparse_forward.11} parent=0 // pred_fallthru
    _

// kernel: basic_block_sparse_forward.8
$region0: #{basic_block_sparse_forward.8}
  #allocation0 [shape = 'u32[]', space=smem, size = 0x4, offset = 0x4, fixed_abs, tag = 'smem constant byte address 0x4 - core index']
  #allocation1 [shape = 'u32[144,128]{1,0:T(1,128)}', space=vmem, size = 0x12000, scoped, tag = 'internal scratch']
  #allocation2 [shape = 'bf16[10,10,128]{2,1,0:T(8,128)(2,1)}', space=vmem, size = 0xa000, scoped, tag = 'scratch operand']
  %s0 = inlined_call_operand.vmem [shape: bf16[2,8,8,128], index: 0, kind: input, shape index: {}]
  %s1 = inlined_call_operand.vmem [shape: f32[2,128], index: 1, kind: input, shape index: {}]
  %s2 = inlined_call_operand.vmem [shape: bf16[1152,128], index: 2, kind: input, shape index: {}]
  %s3 = inlined_call_operand.vmem [shape: bf16[2,64,128], index: 3, kind: output, shape index: {0}]
  %s4 = inlined_call_operand.vmem [shape: f32[2,2,128], index: 4, kind: output, shape index: {1}]
  %5 = xla_tuple %s3, %s4
  %s6 = sld [smem:[#allocation0]]
  $region53: #{basic_block_sparse_forward.8} parent=0
    _
  %s8 = ssub.s32 1, %s6
  %s9 = scalar_select 0, %s8, %s6
  loop: start=0, step=1, limit=4
  $region2: #{basic_block_sparse_forward.8} parent=0 // loop_pre_header
    _
  $region3: #{basic_block_sparse_forward.8} parent=0 // loop_header
    %s11 = sphi 0, %s15
    %p12 = scmp.ge.s32.totalorder %s11, 4
    %s21 = sphi 0, %s23
    %s24 = sphi 0, %s21
    %s25 = sphi 0, %s24
    %s41 = sphi 0, %s25
    %s45 = sphi 0, %s45
    %s47 = sphi 0, %s45
    %s48 = sphi 0, %s47
    %s62 = sphi 0, %s48
    %s66 = sphi 0, %s66
    %s68 = sphi 0, %s66
    %s69 = sphi 0, %s68
    %s83 = sphi 0, %s69
    %s89 = sphi 0, %s91
    %s92 = sphi 0, %s89
    %s93 = sphi 0, %s92
    %s109 = sphi 0, %s93
    %s115 = sphi 0, %s117
    %s118 = sphi 0, %s115
    %s119 = sphi 0, %s118
    %s135 = sphi 0, %s119
  $region4: #{basic_block_sparse_forward.8} parent=0 // loop_header_branch
    %14 = sbr.rel (%p12) target = $region8
  $region5: #{basic_block_sparse_forward.8} parent=0 // loop_body
    %s16 = ssub.s32 %s11, 1
    %s17 = ssub.s32 %s11, 2
    %s18 = sadd.s32 %s11, 1
    %s19 = ssub.s32 %s11, %s18
    %p20 = scmp.eq.s32.totalorder %s19, 0
    %s22 = sadd.s32 %s21, 1
    %s23 = scalar_select %p20, %s21, %s22
    %p26 = pneg %p20
    %p27 = scmp.eq.s32.totalorder %s11, 1
    %p28 = por %p26, %p27
    %p29 = scmp.ne.s32.totalorder %s21, %s24
    %p30 = scmp.eq.s32.totalorder %s11, 0
    %p31 = por %p29, %p30
    %p32 = scmp.ne.s32.totalorder %s21, %s24
    %p33 = scmp.eq.s32.totalorder %s16, 1
    %p34 = por %p32, %p33
    %p35 = scmp.ne.s32.totalorder %s24, %s25
    %p36 = scmp.eq.s32.totalorder %s16, 0
    %p37 = por %p35, %p36
    %p38 = scmp.ne.s32.totalorder %s24, %s25
    %p39 = scmp.eq.s32.totalorder %s17, 1
    %p40 = por %p38, %p39
    %p42 = scmp.ne.s32.totalorder %s25, %s41
    %p43 = scmp.eq.s32.totalorder %s17, 0
    %p44 = por %p42, %p43
    %s46 = sadd.s32 %s45, 1
    %p49 = scmp.eq.s32.totalorder %s11, 1
    %p50 = scmp.ne.s32.totalorder %s45, %s47
    %p51 = scmp.eq.s32.totalorder %s11, 0
    %p52 = por %p50, %p51
    %p53 = scmp.ne.s32.totalorder %s45, %s47
    %p54 = scmp.eq.s32.totalorder %s16, 1
    %p55 = por %p53, %p54
    %p56 = scmp.ne.s32.totalorder %s47, %s48
    %p57 = scmp.eq.s32.totalorder %s16, 0
    %p58 = por %p56, %p57
    %p59 = scmp.ne.s32.totalorder %s47, %s48
    %p60 = scmp.eq.s32.totalorder %s17, 1
    %p61 = por %p59, %p60
    %p63 = scmp.ne.s32.totalorder %s48, %s62
    %p64 = scmp.eq.s32.totalorder %s17, 0
    %p65 = por %p63, %p64
    %s67 = sadd.s32 %s66, 1
    %p70 = scmp.eq.s32.totalorder %s11, 1
    %p71 = scmp.ne.s32.totalorder %s66, %s68
    %p72 = scmp.eq.s32.totalorder %s11, 0
    %p73 = por %p71, %p72
    %p74 = scmp.ne.s32.totalorder %s66, %s68
    %p75 = scmp.eq.s32.totalorder %s16, 1
    %p76 = por %p74, %p75
    %p77 = scmp.ne.s32.totalorder %s68, %s69
    %p78 = scmp.eq.s32.totalorder %s16, 0
    %p79 = por %p77, %p78
    %p80 = scmp.ne.s32.totalorder %s68, %s69
    %p81 = scmp.eq.s32.totalorder %s17, 1
    %p82 = por %p80, %p81
    %p84 = scmp.ne.s32.totalorder %s69, %s83
    %p85 = scmp.eq.s32.totalorder %s17, 0
    %p86 = por %p84, %p85
    %s87 = ssub.s32 %s11, %s18
    %p88 = scmp.eq.s32.totalorder %s87, 0
    %s90 = sadd.s32 %s89, 1
    %s91 = scalar_select %p88, %s89, %s90
    %p94 = pneg %p88
    %p95 = scmp.eq.s32.totalorder %s11, 1
    %p96 = por %p94, %p95
    %p97 = scmp.ne.s32.totalorder %s89, %s92
    %p98 = scmp.eq.s32.totalorder %s11, 0
    %p99 = por %p97, %p98
    %p100 = scmp.ne.s32.totalorder %s89, %s92
    %p101 = scmp.eq.s32.totalorder %s16, 1
    %p102 = por %p100, %p101
    %p103 = scmp.ne.s32.totalorder %s92, %s93
    %p104 = scmp.eq.s32.totalorder %s16, 0
    %p105 = por %p103, %p104
    %p106 = scmp.ne.s32.totalorder %s92, %s93
    %p107 = scmp.eq.s32.totalorder %s17, 1
    %p108 = por %p106, %p107
    %p110 = scmp.ne.s32.totalorder %s93, %s109
    %p111 = scmp.eq.s32.totalorder %s17, 0
    %p112 = por %p110, %p111
    %s113 = ssub.s32 %s11, %s18
    %p114 = scmp.eq.s32.totalorder %s113, 0
    %s116 = sadd.s32 %s115, 1
    %s117 = scalar_select %p114, %s115, %s116
    %p120 = pneg %p114
    %p121 = scmp.eq.s32.totalorder %s11, 1
    %p122 = por %p120, %p121
    %p123 = scmp.ne.s32.totalorder %s115, %s118
    %p124 = scmp.eq.s32.totalorder %s11, 0
    %p125 = por %p123, %p124
    %p126 = scmp.ne.s32.totalorder %s115, %s118
    %p127 = scmp.eq.s32.totalorder %s16, 1
    %p128 = por %p126, %p127
    %p129 = scmp.ne.s32.totalorder %s118, %s119
    %p130 = scmp.eq.s32.totalorder %s16, 0
    %p131 = por %p129, %p130
    %p132 = scmp.ne.s32.totalorder %s118, %s119
    %p133 = scmp.eq.s32.totalorder %s17, 1
    %p134 = por %p132, %p133
    %p136 = scmp.ne.s32.totalorder %s119, %s135
    %p137 = scmp.eq.s32.totalorder %s17, 0
    %p138 = por %p136, %p137
    %p139 = scmp.le.s32.totalorder 1, %s11
    %p140 = scmp.lt.s32.totalorder %s11, 3
    %p141 = pnand %p139, %p140
    %p142 = pneg %p141
    // Predicated region
    $region9: #{basic_block_sparse_forward.8} parent=5 // pred_check
      _
    $region10: #{basic_block_sparse_forward.8} parent=5 // pred_check_branch
      %144 = sbr.rel (%p141) target = $region12
    $region11: #{basic_block_sparse_forward.8} parent=5 // pred_region
      %s145 = ssub.s32 %s11, 1
      // Predicated region
      $region13: #{basic_block_sparse_forward.8} parent=11 // pred_check
        %p146 = pneg %p58
      $region14: #{basic_block_sparse_forward.8} parent=11 // pred_check_branch
        %148 = sbr.rel (%p146) target = $region16
      $region15: #{basic_block_sparse_forward.8} parent=11 // pred_region
        _
      $region16: #{basic_block_sparse_forward.8} parent=11 // pred_fallthru
        _
      // Predicated region
      $region17: #{basic_block_sparse_forward.8} parent=11 // pred_check
        %p149 = pneg %p79
      $region18: #{basic_block_sparse_forward.8} parent=11 // pred_check_branch
        %151 = sbr.rel (%p149) target = $region20
      $region19: #{basic_block_sparse_forward.8} parent=11 // pred_region
        _
      $region20: #{basic_block_sparse_forward.8} parent=11 // pred_fallthru
        _
    $region12: #{basic_block_sparse_forward.8} parent=5 // pred_fallthru
      _
    %p152 = scmp.lt.s32.totalorder %s11, 2
    // Predicated region
    $region21: #{basic_block_sparse_forward.8} parent=5 // pred_check
      %p153 = pneg %p152
    $region22: #{basic_block_sparse_forward.8} parent=5 // pred_check_branch
      %155 = sbr.rel (%p153) target = $region24
    $region23: #{basic_block_sparse_forward.8} parent=5 // pred_region
      // Predicated region
      $region25: #{basic_block_sparse_forward.8} parent=23 // pred_check
        %p156 = pneg %p31
      $region26: #{basic_block_sparse_forward.8} parent=23 // pred_check_branch
        %158 = sbr.rel (%p156) target = $region28
      $region27: #{basic_block_sparse_forward.8} parent=23 // pred_region
        %p159 = scmp.lt.s32.totalorder %s11, 1
        %s160 = scalar_select %p159, %s11, 1
        %s161 = smul.addr %s160, 8
        %s162 = smul.addr %s161, 4
        %s163 = scalar_lea.vmem %s0, %s162
      $region28: #{basic_block_sparse_forward.8} parent=23 // pred_fallthru
        _
    $region24: #{basic_block_sparse_forward.8} parent=5 // pred_fallthru
      _
    %p164 = scmp.le.s32.totalorder 1, %s11
    %p165 = scmp.lt.s32.totalorder %s11, 3
    %p166 = pnand %p164, %p165
    %p167 = pneg %p166
    // Predicated region
    $region29: #{basic_block_sparse_forward.8} parent=5 // pred_check
      _
    $region30: #{basic_block_sparse_forward.8} parent=5 // pred_check_branch
      %169 = sbr.rel (%p166) target = $region32
    $region31: #{basic_block_sparse_forward.8} parent=5 // pred_region
      %s170 = ssub.s32 %s11, 1
      %p171 = scmp.lt.s32.totalorder %s16, 1
      %s172 = scalar_select %p171, %s16, 1
      %s173 = smul.addr %s172, 8
      %s174 = smul.addr %s173, 4
      %s175 = scalar_lea.vmem %s0, %s174
      %p176 = pneg %p37
      %p177 = pneg %p34
      %p178 = pneg %p58
      %p179 = pneg %p55
      %p180 = pneg %p79
      %p181 = pneg %p76
      %p182 = pneg %p105
      %p183 = pneg %p102
      %p184 = scmp.lt.s32.totalorder %s16, 1
      %s185 = scalar_select %p184, %s16, 1
      %s186 = smul.addr %s185, 8
      %s187 = smul.addr %s186, 4
      %s188 = scalar_lea.vmem %s3, %s187
      %p189 = pneg %p131
      %p190 = pneg %p128
      %p191 = scmp.lt.s32.totalorder %s16, 1
      %s192 = scalar_select %p191, %s16, 1
      %s193 = smul.addr %s192, 2
      %s194 = scalar_lea.vmem %s4, %s193
      %p195 = scmp.lt.s32.totalorder %s16, 1
      %s196 = scalar_select %p195, %s16, 1
      %s197 = smul.addr %s196, 8
      %s198 = smul.addr %s197, 4
      %s199 = scalar_lea.vmem %s0, %s198
      %p200 = scmp.lt.s32.totalorder %s16, 1
      %s201 = scalar_select %p200, %s16, 1
      %s202 = smul.addr %s201, 8
      %s203 = smul.addr %s202, 4
      %s204 = scalar_lea.vmem %s3, %s203
      %p205 = scmp.lt.s32.totalorder %s16, 1
      %s206 = scalar_select %p205, %s16, 1
      %s207 = smul.addr %s206, 2
      %s208 = scalar_lea.vmem %s4, %s207
      %v210 = vld [vmem:[%s199] sm:$0xf]
      %v211 = vld [vmem:[%s199 + $0x4] sm:$0xf]
      %v212 = vld [vmem:[%s199 + $0x8] sm:$0xf]
      %v213 = vld [vmem:[%s199 + $0xc] sm:$0xf]
      %v214 = vld [vmem:[%s199 + $0x10] sm:$0xf]
      %v215 = vld [vmem:[%s199 + $0x14] sm:$0xf]
      %v216 = vld [vmem:[%s199 + $0x18] sm:$0xf]
      %v217 = vld [vmem:[%s199 + $0x1c] sm:$0xf]
      %v218 = vunpack.c.l.bf16 %v210
      %v219 = vunpack.c.l.bf16 %v211
      %v220 = vunpack.c.l.bf16 %v212
      %v221 = vunpack.c.l.bf16 %v213
      %v222 = vunpack.c.l.bf16 %v214
      %v223 = vunpack.c.l.bf16 %v215
      %v224 = vunpack.c.l.bf16 %v216
      %v225 = vunpack.c.l.bf16 %v217
      %v226 = vld [vmem:[%s1] sm:$0x1]
      %v227 = vlaneseq
      %v228 = vshrl.u32 %v227, 7
      %v229 = vsub.s32 0, %v228
      %v230 = vrot.slane %v226, %v229
      %v231 = vmul.f32 %v218, %v230
      %v232 = vmul.f32 %v219, %v230
      %v233 = vmul.f32 %v220, %v230
      %v234 = vmul.f32 %v221, %v230
      %v235 = vmul.f32 %v222, %v230
      %v236 = vmul.f32 %v223, %v230
      %v237 = vmul.f32 %v224, %v230
      %v238 = vmul.f32 %v225, %v230
      %v239 = vld [vmem:[%s1 + $0x1] sm:$0x1]
      %v240 = vlaneseq
      %v241 = vshrl.u32 %v240, 7
      %v242 = vsub.s32 0, %v241
      %v243 = vrot.slane %v239, %v242
      %v244 = vadd.f32 %v231, %v243
      %v245 = vadd.f32 %v232, %v243
      %v246 = vadd.f32 %v233, %v243
      %v247 = vadd.f32 %v234, %v243
      %v248 = vadd.f32 %v235, %v243
      %v249 = vadd.f32 %v236, %v243
      %v250 = vadd.f32 %v237, %v243
      %v251 = vadd.f32 %v238, %v243
      %v252 = vmax.f32 %v244, 0.0
      %v253 = vmax.f32 %v245, 0.0
      %v254 = vmax.f32 %v246, 0.0
      %v255 = vmax.f32 %v247, 0.0
      %v256 = vmax.f32 %v248, 0.0
      %v257 = vmax.f32 %v249, 0.0
      %v258 = vmax.f32 %v250, 0.0
      %v259 = vmax.f32 %v251, 0.0
      %260 = vst [vmem:[#allocation2] sm:$0xf] 0
      %261 = vst [vmem:[#allocation2 + $0x4] sm:$0x1] 0
      %262 = vst [vmem:[#allocation2 + $0x8] sm:$0xf] 0
      %263 = vst [vmem:[#allocation2 + $0xc] sm:$0x1] 0
      %264 = vst [vmem:[#allocation2 + $0x10] sm:$0xf] 0
      %265 = vst [vmem:[#allocation2 + $0x14] sm:$0x1] 0
      %266 = vst [vmem:[#allocation2 + $0x18] sm:$0xf] 0
      %267 = vst [vmem:[#allocation2 + $0x1c] sm:$0x1] 0
      %268 = vst [vmem:[#allocation2 + $0x20] sm:$0xf] 0
      %269 = vst [vmem:[#allocation2 + $0x24] sm:$0x1] 0
      %270 = vst [vmem:[#allocation2 + $0x28] sm:$0xf] 0
      %271 = vst [vmem:[#allocation2 + $0x2c] sm:$0x1] 0
      %272 = vst [vmem:[#allocation2 + $0x30] sm:$0xf] 0
      %273 = vst [vmem:[#allocation2 + $0x34] sm:$0x1] 0
      %274 = vst [vmem:[#allocation2 + $0x38] sm:$0xf] 0
      %275 = vst [vmem:[#allocation2 + $0x3c] sm:$0x1] 0
      %276 = vst [vmem:[#allocation2 + $0x40] sm:$0xf] 0
      %277 = vst [vmem:[#allocation2 + $0x44] sm:$0x1] 0
      %278 = vst [vmem:[#allocation2 + $0x48] sm:$0xf] 0
      %279 = vst [vmem:[#allocation2 + $0x4c] sm:$0x1] 0
      %v280 = vpack.c.bf16 %v252, %v252
      %v281 = vpack.c.bf16 %v253, %v253
      %v282 = vpack.c.bf16 %v254, %v254
      %v283 = vpack.c.bf16 %v255, %v255
      %v284 = vpack.c.bf16 %v256, %v256
      %v285 = vpack.c.bf16 %v257, %v257
      %v286 = vpack.c.bf16 %v258, %v258
      %v287 = vpack.c.bf16 %v259, %v259
      %v296 = vunpack.c.l.b16 %v280
      %v297 = vunpack.c.l.b16 %v281
      %v298 = vunpack.c.l.b16 %v282
      %v299 = vunpack.c.l.b16 %v283
      %v300 = vunpack.c.l.b16 %v284
      %v301 = vunpack.c.l.b16 %v285
      %v302 = vunpack.c.l.b16 %v286
      %v303 = vunpack.c.l.b16 %v287
      %v304 = vpack.c.b16 %v296, %v296
      %v305 = vpack.c.b16 %v297, %v297
      %v306 = vpack.c.b16 %v298, %v298
      %v307 = vpack.c.b16 %v299, %v299
      %v308 = vpack.c.b16 %v300, %v300
      %v309 = vpack.c.b16 %v301, %v301
      %v310 = vpack.c.b16 %v302, %v302
      %v311 = vpack.c.b16 %v303, %v303
      %v313 = vshrl.u32 %v304, 16
      %v315 = vrot.slane %v313, 7
      %v316 = vshll.u32 %v304, 16
      %v318 = vor.u32 %v315, %v316
      %v319 = vrot.slane %v315, 4
      %v321 = vshrl.u32 %v305, 16
      %v323 = vrot.slane %v321, 7
      %v324 = vshll.u32 %v305, 16
      %v326 = vor.u32 %v323, %v324
      %v327 = vrot.slane %v323, 4
      %v329 = vshrl.u32 %v306, 16
      %v331 = vrot.slane %v329, 7
      %v332 = vshll.u32 %v306, 16
      %v334 = vor.u32 %v331, %v332
      %v335 = vrot.slane %v331, 4
      %v337 = vshrl.u32 %v307, 16
      %v339 = vrot.slane %v337, 7
      %v340 = vshll.u32 %v307, 16
      %v342 = vor.u32 %v339, %v340
      %v343 = vrot.slane %v339, 4
      %v345 = vshrl.u32 %v308, 16
      %v347 = vrot.slane %v345, 7
      %v348 = vshll.u32 %v308, 16
      %v350 = vor.u32 %v347, %v348
      %v351 = vrot.slane %v347, 4
      %v353 = vshrl.u32 %v309, 16
      %v355 = vrot.slane %v353, 7
      %v356 = vshll.u32 %v309, 16
      %v358 = vor.u32 %v355, %v356
      %v359 = vrot.slane %v355, 4
      %v361 = vshrl.u32 %v310, 16
      %v363 = vrot.slane %v361, 7
      %v364 = vshll.u32 %v310, 16
      %v366 = vor.u32 %v363, %v364
      %v367 = vrot.slane %v363, 4
      %v369 = vshrl.u32 %v311, 16
      %v371 = vrot.slane %v369, 7
      %v372 = vshll.u32 %v311, 16
      %v374 = vor.u32 %v371, %v372
      %v375 = vrot.slane %v371, 4
      %s392 = scalar_lea.vmem [#allocation2], 8
      %vm393 = vcmask 1043456
      %vm394 = vsmask.f32 7938
      %vm395 = vmand %vm393, %vm394
      %v396 = vld [vmem:[%s392] sm:$0xf]
      %v397 = vsel %vm395, %v318, %v396
      %398 = vst [vmem:[%s392] sm:$0xf] %v397
      %vm399 = vcmask 1040384
      %vm400 = vsmask.f32 256
      %vm401 = vmand %vm399, %vm400
      %v402 = vld [vmem:[%s392 + $0x4] sm:$0x1]
      %v403 = vsel %vm401, %v319, %v402
      %404 = vst [vmem:[%s392 + $0x4] sm:$0x1] %v403
      %v405 = vld [vmem:[%s392 + $0x8] sm:$0xf]
      %v406 = vsel %vm395, %v326, %v405
      %407 = vst [vmem:[%s392 + $0x8] sm:$0xf] %v406
      %v408 = vld [vmem:[%s392 + $0xc] sm:$0x1]
      %v409 = vsel %vm401, %v327, %v408
      %410 = vst [vmem:[%s392 + $0xc] sm:$0x1] %v409
      %v411 = vld [vmem:[%s392 + $0x10] sm:$0xf]
      %v412 = vsel %vm395, %v334, %v411
      %413 = vst [vmem:[%s392 + $0x10] sm:$0xf] %v412
      %v414 = vld [vmem:[%s392 + $0x14] sm:$0x1]
      %v415 = vsel %vm401, %v335, %v414
      %416 = vst [vmem:[%s392 + $0x14] sm:$0x1] %v415
      %v417 = vld [vmem:[%s392 + $0x18] sm:$0xf]
      %v418 = vsel %vm395, %v342, %v417
      %419 = vst [vmem:[%s392 + $0x18] sm:$0xf] %v418
      %v420 = vld [vmem:[%s392 + $0x1c] sm:$0x1]
      %v421 = vsel %vm401, %v343, %v420
      %422 = vst [vmem:[%s392 + $0x1c] sm:$0x1] %v421
      %v423 = vld [vmem:[%s392 + $0x20] sm:$0xf]
      %v424 = vsel %vm395, %v350, %v423
      %425 = vst [vmem:[%s392 + $0x20] sm:$0xf] %v424
      %v426 = vld [vmem:[%s392 + $0x24] sm:$0x1]
      %v427 = vsel %vm401, %v351, %v426
      %428 = vst [vmem:[%s392 + $0x24] sm:$0x1] %v427
      %v429 = vld [vmem:[%s392 + $0x28] sm:$0xf]
      %v430 = vsel %vm395, %v358, %v429
      %431 = vst [vmem:[%s392 + $0x28] sm:$0xf] %v430
      %v432 = vld [vmem:[%s392 + $0x2c] sm:$0x1]
      %v433 = vsel %vm401, %v359, %v432
      %434 = vst [vmem:[%s392 + $0x2c] sm:$0x1] %v433
      %v435 = vld [vmem:[%s392 + $0x30] sm:$0xf]
      %v436 = vsel %vm395, %v366, %v435
      %437 = vst [vmem:[%s392 + $0x30] sm:$0xf] %v436
      %v438 = vld [vmem:[%s392 + $0x34] sm:$0x1]
      %v439 = vsel %vm401, %v367, %v438
      %440 = vst [vmem:[%s392 + $0x34] sm:$0x1] %v439
      %v441 = vld [vmem:[%s392 + $0x38] sm:$0xf]
      %v442 = vsel %vm395, %v374, %v441
      %443 = vst [vmem:[%s392 + $0x38] sm:$0xf] %v442
      %v444 = vld [vmem:[%s392 + $0x3c] sm:$0x1]
      %v445 = vsel %vm401, %v375, %v444
      %446 = vst [vmem:[%s392 + $0x3c] sm:$0x1] %v445
      %v447 = vld [vmem:[#allocation2] sm:$0xf]
      %v448 = vld [vmem:[#allocation2 + $0x8] sm:$0xf]
      %v449 = vld [vmem:[#allocation2 + $0x10] sm:$0xf]
      %v450 = vld [vmem:[#allocation2 + $0x18] sm:$0xf]
      %v451 = vld [vmem:[#allocation2 + $0x20] sm:$0xf]
      %v452 = vld [vmem:[#allocation2 + $0x28] sm:$0xf]
      %v453 = vld [vmem:[#allocation2 + $0x30] sm:$0xf]
      %v454 = vld [vmem:[#allocation2 + $0x38] sm:$0xf]
      %v455 = vld [vmem:[%s2] sm:$0xf]
      %v456 = vld [vmem:[%s2 + $0x4] sm:$0xf]
      %v457 = vld [vmem:[%s2 + $0x8] sm:$0xf]
      %v458 = vld [vmem:[%s2 + $0xc] sm:$0xf]
      %v459 = vld [vmem:[%s2 + $0x10] sm:$0xf]
      %v460 = vld [vmem:[%s2 + $0x14] sm:$0xf]
      %v461 = vld [vmem:[%s2 + $0x18] sm:$0xf]
      %v462 = vld [vmem:[%s2 + $0x1c] sm:$0xf]
      %v463 = vld [vmem:[%s2 + $0x20] sm:$0xf]
      %v464 = vld [vmem:[%s2 + $0x24] sm:$0xf]
      %v465 = vld [vmem:[%s2 + $0x28] sm:$0xf]
      %v466 = vld [vmem:[%s2 + $0x2c] sm:$0xf]
      %v467 = vld [vmem:[%s2 + $0x30] sm:$0xf]
      %v468 = vld [vmem:[%s2 + $0x34] sm:$0xf]
      %v469 = vld [vmem:[%s2 + $0x38] sm:$0xf]
      %v470 = vld [vmem:[%s2 + $0x3c] sm:$0xf]
      %v471 = vld [vmem:[#allocation2 + $0x4] sm:$0x1]
      %v472 = vld [vmem:[#allocation2 + $0xc] sm:$0x1]
      %v473 = vld [vmem:[#allocation2 + $0x14] sm:$0x1]
      %v474 = vld [vmem:[#allocation2 + $0x1c] sm:$0x1]
      %v475 = vld [vmem:[#allocation2 + $0x24] sm:$0x1]
      %v476 = vld [vmem:[#allocation2 + $0x2c] sm:$0x1]
      %v477 = vld [vmem:[#allocation2 + $0x34] sm:$0x1]
      %v478 = vld [vmem:[#allocation2 + $0x3c] sm:$0x1]
      %vm479 = vsmask.f32 3328
      %vm480 = vsmask.f32 7440
      %vm481 = vmor %vm479, %vm480
      %v483 = vshrl.u32 %v447, 16
      %v485 = vrot.slane %v483, 4
      %v486 = vshll.u32 %v447, 16
      %v488 = vrot.slane %v486, 5
      %v489 = vor.u32 %v485, %v488
      %v490 = vrot.slane %v489, 4
      %v492 = vshll.u32 %v471, 16
      %v494 = vrot.slane %v492, 5
      %v495 = vsel %vm481, %v490, %v494
      %v497 = vshrl.u32 %v448, 16
      %v499 = vrot.slane %v497, 4
      %v500 = vshll.u32 %v448, 16
      %v502 = vrot.slane %v500, 5
      %v503 = vor.u32 %v499, %v502
      %v504 = vrot.slane %v503, 4
      %v506 = vshll.u32 %v472, 16
      %v508 = vrot.slane %v506, 5
      %v509 = vsel %vm481, %v504, %v508
      %v511 = vshrl.u32 %v449, 16
      %v513 = vrot.slane %v511, 4
      %v514 = vshll.u32 %v449, 16
      %v516 = vrot.slane %v514, 5
      %v517 = vor.u32 %v513, %v516
      %v518 = vrot.slane %v517, 4
      %v520 = vshll.u32 %v473, 16
      %v522 = vrot.slane %v520, 5
      %v523 = vsel %vm481, %v518, %v522
      %v525 = vshrl.u32 %v450, 16
      %v527 = vrot.slane %v525, 4
      %v528 = vshll.u32 %v450, 16
      %v530 = vrot.slane %v528, 5
      %v531 = vor.u32 %v527, %v530
      %v532 = vrot.slane %v531, 4
      %v534 = vshll.u32 %v474, 16
      %v536 = vrot.slane %v534, 5
      %v537 = vsel %vm481, %v532, %v536
      %v539 = vshrl.u32 %v451, 16
      %v541 = vrot.slane %v539, 4
      %v542 = vshll.u32 %v451, 16
      %v544 = vrot.slane %v542, 5
      %v545 = vor.u32 %v541, %v544
      %v546 = vrot.slane %v545, 4
      %v548 = vshll.u32 %v475, 16
      %v550 = vrot.slane %v548, 5
      %v551 = vsel %vm481, %v546, %v550
      %v553 = vshrl.u32 %v452, 16
      %v555 = vrot.slane %v553, 4
      %v556 = vshll.u32 %v452, 16
      %v558 = vrot.slane %v556, 5
      %v559 = vor.u32 %v555, %v558
      %v560 = vrot.slane %v559, 4
      %v562 = vshll.u32 %v476, 16
      %v564 = vrot.slane %v562, 5
      %v565 = vsel %vm481, %v560, %v564
      %v567 = vshrl.u32 %v453, 16
      %v569 = vrot.slane %v567, 4
      %v570 = vshll.u32 %v453, 16
      %v572 = vrot.slane %v570, 5
      %v573 = vor.u32 %v569, %v572
      %v574 = vrot.slane %v573, 4
      %v576 = vshll.u32 %v477, 16
      %v578 = vrot.slane %v576, 5
      %v579 = vsel %vm481, %v574, %v578
      %v581 = vshrl.u32 %v454, 16
      %v583 = vrot.slane %v581, 4
      %v584 = vshll.u32 %v454, 16
      %v586 = vrot.slane %v584, 5
      %v587 = vor.u32 %v583, %v586
      %v588 = vrot.slane %v587, 4
      %v590 = vshll.u32 %v478, 16
      %v592 = vrot.slane %v590, 5
      %v593 = vsel %vm481, %v588, %v592
      %v594 = vld [vmem:[%s2 + $0x40] sm:$0xf]
      %v595 = vld [vmem:[%s2 + $0x44] sm:$0xf]
      %v596 = vld [vmem:[%s2 + $0x48] sm:$0xf]
      %v597 = vld [vmem:[%s2 + $0x4c] sm:$0xf]
      %v598 = vld [vmem:[%s2 + $0x50] sm:$0xf]
      %v599 = vld [vmem:[%s2 + $0x54] sm:$0xf]
      %v600 = vld [vmem:[%s2 + $0x58] sm:$0xf]
      %v601 = vld [vmem:[%s2 + $0x5c] sm:$0xf]
      %v602 = vld [vmem:[%s2 + $0x60] sm:$0xf]
      %v603 = vld [vmem:[%s2 + $0x64] sm:$0xf]
      %v604 = vld [vmem:[%s2 + $0x68] sm:$0xf]
      %v605 = vld [vmem:[%s2 + $0x6c] sm:$0xf]
      %v606 = vld [vmem:[%s2 + $0x70] sm:$0xf]
      %v607 = vld [vmem:[%s2 + $0x74] sm:$0xf]
      %v608 = vld [vmem:[%s2 + $0x78] sm:$0xf]
      %v609 = vld [vmem:[%s2 + $0x7c] sm:$0xf]
      %v610 = vunpack.c.l.b16 %v495
      %v611 = vunpack.c.l.b16 %v509
      %v612 = vunpack.c.l.b16 %v523
      %v613 = vunpack.c.l.b16 %v537
      %v614 = vunpack.c.l.b16 %v551
      %v615 = vunpack.c.l.b16 %v565
      %v616 = vunpack.c.l.b16 %v579
      %v617 = vunpack.c.l.b16 %v593
      %v618 = vpack.c.b16 %v611, %v610
      %v619 = vpack.c.b16 %v613, %v612
      %v620 = vpack.c.b16 %v615, %v614
      %v621 = vpack.c.b16 %v617, %v616
      %v642 = vunpack.c.l.b16 %v594
      %v643 = vunpack.c.l.b16 %v595
      %v644 = vunpack.c.l.b16 %v596
      %v645 = vunpack.c.l.b16 %v597
      %v646 = vunpack.c.l.b16 %v598
      %v647 = vunpack.c.l.b16 %v599
      %v648 = vunpack.c.l.b16 %v600
      %v649 = vunpack.c.l.b16 %v601
      %v650 = vunpack.c.l.b16 %v602
      %v651 = vunpack.c.l.b16 %v603
      %v652 = vunpack.c.l.b16 %v604
      %v653 = vunpack.c.l.b16 %v605
      %v654 = vunpack.c.l.b16 %v606
      %v655 = vunpack.c.l.b16 %v607
      %v656 = vunpack.c.l.b16 %v608
      %v657 = vunpack.c.l.b16 %v609
      %v658 = vpack.c.b16 %v643, %v642
      %v659 = vpack.c.b16 %v645, %v644
      %v660 = vpack.c.b16 %v647, %v646
      %v661 = vpack.c.b16 %v649, %v648
      %v662 = vpack.c.b16 %v651, %v650
      %v663 = vpack.c.b16 %v653, %v652
      %v664 = vpack.c.b16 %v655, %v654
      %v665 = vpack.c.b16 %v657, %v656
      %674 = vmatprep.subr.bf16.mxu0 0
      %675 = vmatpush1.bf16.msra.mxu0 %v658
      %676 = vmatprep.subr.bf16.mxu0 0
      %677 = vmatpush1.bf16.msra.mxu0 %v659
      %678 = vmatprep.subr.bf16.mxu0 0
      %679 = vmatpush1.bf16.msra.mxu0 %v660
      %680 = vmatprep.subr.bf16.mxu0 0
      %681 = vmatpush1.bf16.msra.mxu0 %v661
      %682 = vmatprep.subr.bf16.mxu0 0
      %683 = vmatpush1.bf16.msra.mxu0 %v662
      %684 = vmatprep.subr.bf16.mxu0 0
      %685 = vmatpush1.bf16.msra.mxu0 %v663
      %686 = vmatprep.subr.bf16.mxu0 0
      %687 = vmatpush1.bf16.msra.mxu0 %v664
      %688 = vmatprep.subr.bf16.mxu0 0
      %689 = vmatpush1.bf16.msra.mxu0 %v665
      %690 = vmatprep.subr.bf16.mxu0 0
      %691 = vmatpush1.bf16.msra.mxu0 0
      %692 = vmatprep.subr.bf16.mxu0 0
      %693 = vmatpush1.bf16.msra.mxu0 0
      %694 = vmatprep.subr.bf16.mxu0 0
      %695 = vmatpush1.bf16.msra.mxu0 0
      %696 = vmatprep.subr.bf16.mxu0 0
      %697 = vmatpush1.bf16.msra.mxu0 0
      %698 = vmatprep.subr.bf16.mxu0 0
      %699 = vmatpush1.bf16.msra.mxu0 0
      %700 = vmatprep.subr.bf16.mxu0 0
      %701 = vmatpush1.bf16.msra.mxu0 0
      %702 = vmatprep.subr.bf16.mxu0 0
      %703 = vmatpush1.bf16.msra.mxu0 0
      %704 = vmatprep.subr.bf16.mxu0 0
      %705 = vmatpush1.bf16.msra.mxu0 0
      %706 = vmatprep.mubr.bf16.mxu0 0
      %707 = vmatmul.mubr.bf16.gmra.mrb[0].mxu0 %v618
      %v708 = vpop.f32.mrb[0].mxu0
      %v709 = vadd.f32 0.0, %v708
      %v710 = vpop.f32.mrb[0].mxu0
      %v711 = vpop.f32.mrb[0].mxu0
      %v712 = vadd.f32 0.0, %v711
      %v713 = vpop.f32.mrb[0].mxu0
      %714 = vmatprep.mubr.bf16.mxu0 0
      %715 = vmatmul.mubr.bf16.gmra.mrb[0].mxu0 %v619
      %v716 = vpop.f32.mrb[0].mxu0
      %v717 = vadd.f32 0.0, %v716
      %v718 = vpop.f32.mrb[0].mxu0
      %v719 = vpop.f32.mrb[0].mxu0
      %v720 = vadd.f32 0.0, %v719
      %v721 = vpop.f32.mrb[0].mxu0
      %722 = vmatprep.mubr.bf16.mxu0 0
      %723 = vmatmul.mubr.bf16.gmra.mrb[0].mxu0 %v620
      %v724 = vpop.f32.mrb[0].mxu0
      %v725 = vadd.f32 0.0, %v724
      %v726 = vpop.f32.mrb[0].mxu0
      %v727 = vpop.f32.mrb[0].mxu0
      %v728 = vadd.f32 0.0, %v727
      %v729 = vpop.f32.mrb[0].mxu0
      %730 = vmatprep.mubr.bf16.mxu0 0
      %731 = vmatmul.mubr.bf16.gmra.mrb[0].mxu0 %v621
      %v732 = vpop.f32.mrb[0].mxu0
      %v733 = vadd.f32 0.0, %v732
      %v734 = vpop.f32.mrb[0].mxu0
      %v735 = vpop.f32.mrb[0].mxu0
      %v736 = vadd.f32 0.0, %v735
      %v737 = vpop.f32.mrb[0].mxu0
      %738 = vdwg.mxu0
      %v747 = vunpack.c.l.b16 %v447
      %v748 = vunpack.c.l.b16 %v448
      %v749 = vunpack.c.l.b16 %v449
      %v750 = vunpack.c.l.b16 %v450
      %v751 = vunpack.c.l.b16 %v451
      %v752 = vunpack.c.l.b16 %v452
      %v753 = vunpack.c.l.b16 %v453
      %v754 = vunpack.c.l.b16 %v454
      %v755 = vpack.c.b16 %v748, %v747
      %v756 = vpack.c.b16 %v750, %v749
      %v757 = vpack.c.b16 %v752, %v751
      %v758 = vpack.c.b16 %v754, %v753
      %v779 = vunpack.c.l.b16 %v455
      %v780 = vunpack.c.l.b16 %v456
      %v781 = vunpack.c.l.b16 %v457
      %v782 = vunpack.c.l.b16 %v458
      %v783 = vunpack.c.l.b16 %v459
      %v784 = vunpack.c.l.b16 %v460
      %v785 = vunpack.c.l.b16 %v461
      %v786 = vunpack.c.l.b16 %v462
      %v787 = vunpack.c.l.b16 %v463
      %v788 = vunpack.c.l.b16 %v464
      %v789 = vunpack.c.l.b16 %v465
      %v790 = vunpack.c.l.b16 %v466
      %v791 = vunpack.c.l.b16 %v467
      %v792 = vunpack.c.l.b16 %v468
      %v793 = vunpack.c.l.b16 %v469
      %v794 = vunpack.c.l.b16 %v470
      %v795 = vpack.c.b16 %v780, %v779
      %v796 = vpack.c.b16 %v782, %v781
      %v797 = vpack.c.b16 %v784, %v783
      %v798 = vpack.c.b16 %v786, %v785
      %v799 = vpack.c.b16 %v788, %v787
      %v800 = vpack.c.b16 %v790, %v789
      %v801 = vpack.c.b16 %v792, %v791
      %v802 = vpack.c.b16 %v794, %v793
      %811 = vmatprep.subr.bf16.mxu0 0
      %812 = vmatpush1.bf16.msra.mxu0 %v795
      %813 = vmatprep.subr.bf16.mxu0 0
      %814 = vmatpush1.bf16.msra.mxu0 %v796
      %815 = vmatprep.subr.bf16.mxu0 0
      %816 = vmatpush1.bf16.msra.mxu0 %v797
      %817 = vmatprep.subr.bf16.mxu0 0
      %818 = vmatpush1.bf16.msra.mxu0 %v798
      %819 = vmatprep.subr.bf16.mxu0 0
      %820 = vmatpush1.bf16.msra.mxu0 %v799
      %821 = vmatprep.subr.bf16.mxu0 0
      %822 = vmatpush1.bf16.msra.mxu0 %v800
      %823 = vmatprep.subr.bf16.mxu0 0
      %824 = vmatpush1.bf16.msra.mxu0 %v801
      %825 = vmatprep.subr.bf16.mxu0 0
      %826 = vmatpush1.bf16.msra.mxu0 %v802
      %827 = vmatprep.subr.bf16.mxu0 0
      %828 = vmatpush1.bf16.msra.mxu0 0
      %829 = vmatprep.subr.bf16.mxu0 0
      %830 = vmatpush1.bf16.msra.mxu0 0
      %831 = vmatprep.subr.bf16.mxu0 0
      %832 = vmatpush1.bf16.msra.mxu0 0
      %833 = vmatprep.subr.bf16.mxu0 0
      %834 = vmatpush1.bf16.msra.mxu0 0
      %835 = vmatprep.subr.bf16.mxu0 0
      %836 = vmatpush1.bf16.msra.mxu0 0
      %837 = vmatprep.subr.bf16.mxu0 0
      %838 = vmatpush1.bf16.msra.mxu0 0
      %839 = vmatprep.subr.bf16.mxu0 0
      %840 = vmatpush1.bf16.msra.mxu0 0
      %841 = vmatprep.subr.bf16.mxu0 0
      %842 = vmatpush1.bf16.msra.mxu0 0
      %843 = vmatprep.mubr.bf16.mxu0 0
      %844 = vmatmul.mubr.bf16.gmra.mrb[0].mxu0 %v755
      %v845 = vpop.f32.mrb[0].mxu0
      %v846 = vadd.f32 %v709, %v845
      %v847 = vpop.f32.mrb[0].mxu0
      %v848 = vpop.f32.mrb[0].mxu0
      %v849 = vadd.f32 %v712, %v848
      %v850 = vpop.f32.mrb[0].mxu0
      %851 = vmatprep.mubr.bf16.mxu0 0
      %852 = vmatmul.mubr.bf16.gmra.mrb[0].mxu0 %v756
      %v853 = vpop.f32.mrb[0].mxu0
      %v854 = vadd.f32 %v717, %v853
      %v855 = vpop.f32.mrb[0].mxu0
      %v856 = vpop.f32.mrb[0].mxu0
      %v857 = vadd.f32 %v720, %v856
      %v858 = vpop.f32.mrb[0].mxu0
      %859 = vmatprep.mubr.bf16.mxu0 0
      %860 = vmatmul.mubr.bf16.gmra.mrb[0].mxu0 %v757
      %v861 = vpop.f32.mrb[0].mxu0
      %v862 = vadd.f32 %v725, %v861
      %v863 = vpop.f32.mrb[0].mxu0
      %v864 = vpop.f32.mrb[0].mxu0
      %v865 = vadd.f32 %v728, %v864
      %v866 = vpop.f32.mrb[0].mxu0
      %867 = vmatprep.mubr.bf16.mxu0 0
      %868 = vmatmul.mubr.bf16.gmra.mrb[0].mxu0 %v758
      %v869 = vpop.f32.mrb[0].mxu0
      %v870 = vadd.f32 %v733, %v869
      %v871 = vpop.f32.mrb[0].mxu0
      %v872 = vpop.f32.mrb[0].mxu0
      %v873 = vadd.f32 %v736, %v872
      %v874 = vpop.f32.mrb[0].mxu0
      %875 = vdwg.mxu0
      %v876 = vld [vmem:[#allocation2] sm:$0xe]
      %v877 = vld [vmem:[#allocation2 + $0x8] sm:$0xe]
      %v878 = vld [vmem:[#allocation2 + $0x10] sm:$0xe]
      %v879 = vld [vmem:[#allocation2 + $0x18] sm:$0xe]
      %v880 = vld [vmem:[#allocation2 + $0x20] sm:$0xe]
      %v881 = vld [vmem:[#allocation2 + $0x28] sm:$0xe]
      %v882 = vld [vmem:[#allocation2 + $0x30] sm:$0xe]
      %v883 = vld [vmem:[#allocation2 + $0x38] sm:$0xe]
      %vm900 = vcmask 1042432
      %vm901 = vcmask 1046532
      %vm902 = vmor %vm900, %vm901
      %v903 = vrot.slane %v876, 5
      %v904 = vrot.slane %v903, 4
      %v905 = vrot.slane %v471, 5
      %v906 = vsel %vm902, %v904, %v905
      %v907 = vrot.slane %v877, 5
      %v908 = vrot.slane %v907, 4
      %v909 = vrot.slane %v472, 5
      %v910 = vsel %vm902, %v908, %v909
      %v911 = vrot.slane %v878, 5
      %v912 = vrot.slane %v911, 4
      %v913 = vrot.slane %v473, 5
      %v914 = vsel %vm902, %v912, %v913
      %v915 = vrot.slane %v879, 5
      %v916 = vrot.slane %v915, 4
      %v917 = vrot.slane %v474, 5
      %v918 = vsel %vm902, %v916, %v917
      %v919 = vrot.slane %v880, 5
      %v920 = vrot.slane %v919, 4
      %v921 = vrot.slane %v475, 5
      %v922 = vsel %vm902, %v920, %v921
      %v923 = vrot.slane %v881, 5
      %v924 = vrot.slane %v923, 4
      %v925 = vrot.slane %v476, 5
      %v926 = vsel %vm902, %v924, %v925
      %v927 = vrot.slane %v882, 5
      %v928 = vrot.slane %v927, 4
      %v929 = vrot.slane %v477, 5
      %v930 = vsel %vm902, %v928, %v929
      %v931 = vrot.slane %v883, 5
      %v932 = vrot.slane %v931, 4
      %v933 = vrot.slane %v478, 5
      %v934 = vsel %vm902, %v932, %v933
      %v935 = vld [vmem:[%s2 + $0x80] sm:$0xf]
      %v936 = vld [vmem:[%s2 + $0x84] sm:$0xf]
      %v937 = vld [vmem:[%s2 + $0x88] sm:$0xf]
      %v938 = vld [vmem:[%s2 + $0x8c] sm:$0xf]
      %v939 = vld [vmem:[%s2 + $0x90] sm:$0xf]
      %v940 = vld [vmem:[%s2 + $0x94] sm:$0xf]
      %v941 = vld [vmem:[%s2 + $0x98] sm:$0xf]
      %v942 = vld [vmem:[%s2 + $0x9c] sm:$0xf]
      %v943 = vld [vmem:[%s2 + $0xa0] sm:$0xf]
      %v944 = vld [vmem:[%s2 + $0xa4] sm:$0xf]
      %v945 = vld [vmem:[%s2 + $0xa8] sm:$0xf]
      %v946 = vld [vmem:[%s2 + $0xac] sm:$0xf]
      %v947 = vld [vmem:[%s2 + $0xb0] sm:$0xf]
      %v948 = vld [vmem:[%s2 + $0xb4] sm:$0xf]
      %v949 = vld [vmem:[%s2 + $0xb8] sm:$0xf]
      %v950 = vld [vmem:[%s2 + $0xbc] sm:$0xf]
      %v951 = vunpack.c.l.b16 %v906
      %v952 = vunpack.c.l.b16 %v910
      %v953 = vunpack.c.l.b16 %v914
      %v954 = vunpack.c.l.b16 %v918
      %v955 = vunpack.c.l.b16 %v922
      %v956 = vunpack.c.l.b16 %v926
      %v957 = vunpack.c.l.b16 %v930
      %v958 = vunpack.c.l.b16 %v934
      %v959 = vpack.c.b16 %v952, %v951
      %v960 = vpack.c.b16 %v954, %v953
      %v961 = vpack.c.b16 %v956, %v955
      %v962 = vpack.c.b16 %v958, %v957
      %v983 = vunpack.c.l.b16 %v935
      %v984 = vunpack.c.l.b16 %v936
      %v985 = vunpack.c.l.b16 %v937
      %v986 = vunpack.c.l.b16 %v938
      %v987 = vunpack.c.l.b16 %v939
      %v988 = vunpack.c.l.b16 %v940
      %v989 = vunpack.c.l.b16 %v941
      %v990 = vunpack.c.l.b16 %v942
      %v991 = vunpack.c.l.b16 %v943
      %v992 = vunpack.c.l.b16 %v944
      %v993 = vunpack.c.l.b16 %v945
      %v994 = vunpack.c.l.b16 %v946
      %v995 = vunpack.c.l.b16 %v947
      %v996 = vunpack.c.l.b16 %v948
      %v997 = vunpack.c.l.b16 %v949
      %v998 = vunpack.c.l.b16 %v950
      %v999 = vpack.c.b16 %v984, %v983
      %v1000 = vpack.c.b16 %v986, %v985
      %v1001 = vpack.c.b16 %v988, %v987
      %v1002 = vpack.c.b16 %v990, %v989
      %v1003 = vpack.c.b16 %v992, %v991
      %v1004 = vpack.c.b16 %v994, %v993
      %v1005 = vpack.c.b16 %v996, %v995
      %v1006 = vpack.c.b16 %v998, %v997
      %1015 = vmatprep.subr.bf16.mxu0 0
      %1016 = vmatpush1.bf16.msra.mxu0 %v999
      %1017 = vmatprep.subr.bf16.mxu0 0
      %1018 = vmatpush1.bf16.msra.mxu0 %v1000
      %1019 = vmatprep.subr.bf16.mxu0 0
      %1020 = vmatpush1.bf16.msra.mxu0 %v1001
      %1021 = vmatprep.subr.bf16.mxu0 0
      %1022 = vmatpush1.bf16.msra.mxu0 %v1002
      %1023 = vmatprep.subr.bf16.mxu0 0
      %1024 = vmatpush1.bf16.msra.mxu0 %v1003
      %1025 = vmatprep.subr.bf16.mxu0 0
      %1026 = vmatpush1.bf16.msra.mxu0 %v1004
      %1027 = vmatprep.subr.bf16.mxu0 0
      %1028 = vmatpush1.bf16.msra.mxu0 %v1005
      %1029 = vmatprep.subr.bf16.mxu0 0
      %1030 = vmatpush1.bf16.msra.mxu0 %v1006
      %1031 = vmatprep.subr.bf16.mxu0 0
      %1032 = vmatpush1.bf16.msra.mxu0 0
      %1033 = vmatprep.subr.bf16.mxu0 0
      %1034 = vmatpush1.bf16.msra.mxu0 0
      %1035 = vmatprep.subr.bf16.mxu0 0
      %1036 = vmatpush1.bf16.msra.mxu0 0
      %1037 = vmatprep.subr.bf16.mxu0 0
      %1038 = vmatpush1.bf16.msra.mxu0 0
      %1039 = vmatprep.subr.bf16.mxu0 0
      %1040 = vmatpush1.bf16.msra.mxu0 0
      %1041 = vmatprep.subr.bf16.mxu0 0
      %1042 = vmatpush1.bf16.msra.mxu0 0
      %1043 = vmatprep.subr.bf16.mxu0 0
      %1044 = vmatpush1.bf16.msra.mxu0 0
      %1045 = vmatprep.subr.bf16.mxu0 0
      %1046 = vmatpush1.bf16.msra.mxu0 0
      %1047 = vmatprep.mubr.bf16.mxu0 0
      %1048 = vmatmul.mubr.bf16.gmra.mrb[0].mxu0 %v959
      %v1049 = vpop.f32.mrb[0].mxu0
      %v1050 = vadd.f32 0.0, %v1049
      %v1051 = vpop.f32.mrb[0].mxu0
      %v1052 = vpop.f32.mrb[0].mxu0
      %v1053 = vadd.f32 0.0, %v1052
      %v1054 = vpop.f32.mrb[0].mxu0
      %1055 = vmatprep.mubr.bf16.mxu0 0
      %1056 = vmatmul.mubr.bf16.gmra.mrb[0].mxu0 %v960
      %v1057 = vpop.f32.mrb[0].mxu0
      %v1058 = vadd.f32 0.0, %v1057
      %v1059 = vpop.f32.mrb[0].mxu0
      %v1060 = vpop.f32.mrb[0].mxu0
      %v1061 = vadd.f32 0.0, %v1060
      %v1062 = vpop.f32.mrb[0].mxu0
      %1063 = vmatprep.mubr.bf16.mxu0 0
      %1064 = vmatmul.mubr.bf16.gmra.mrb[0].mxu0 %v961
      %v1065 = vpop.f32.mrb[0].mxu0
      %v1066 = vadd.f32 0.0, %v1065
      %v1067 = vpop.f32.mrb[0].mxu0
      %v1068 = vpop.f32.mrb[0].mxu0
      %v1069 = vadd.f32 0.0, %v1068
      %v1070 = vpop.f32.mrb[0].mxu0
      %1071 = vmatprep.mubr.bf16.mxu0 0
      %1072 = vmatmul.mubr.bf16.gmra.mrb[0].mxu0 %v962
      %v1073 = vpop.f32.mrb[0].mxu0
      %v1074 = vadd.f32 0.0, %v1073
      %v1075 = vpop.f32.mrb[0].mxu0
      %v1076 = vpop.f32.mrb[0].mxu0
      %v1077 = vadd.f32 0.0, %v1076
      %v1078 = vpop.f32.mrb[0].mxu0
      %1079 = vdwg.mxu0
      %v1080 = vadd.f32 %v846, %v1050
      %v1081 = vadd.f32 %v849, %v1053
      %v1082 = vadd.f32 %v854, %v1058
      %v1083 = vadd.f32 %v857, %v1061
      %v1084 = vadd.f32 %v862, %v1066
      %v1085 = vadd.f32 %v865, %v1069
      %v1086 = vadd.f32 %v870, %v1074
      %v1087 = vadd.f32 %v873, %v1077
      %v1088 = vld [vmem:[%s392] sm:$0xf]
      %v1089 = vld [vmem:[%s392 + $0x8] sm:$0xf]
      %v1090 = vld [vmem:[%s392 + $0x10] sm:$0xf]
      %v1091 = vld [vmem:[%s392 + $0x18] sm:$0xf]
      %v1092 = vld [vmem:[%s392 + $0x20] sm:$0xf]
      %v1093 = vld [vmem:[%s392 + $0x28] sm:$0xf]
      %v1094 = vld [vmem:[%s392 + $0x30] sm:$0xf]
      %v1095 = vld [vmem:[%s392 + $0x38] sm:$0xf]
      %v1096 = vld [vmem:[%s2 + $0xc0] sm:$0xf]
      %v1097 = vld [vmem:[%s2 + $0xc4] sm:$0xf]
      %v1098 = vld [vmem:[%s2 + $0xc8] sm:$0xf]
      %v1099 = vld [vmem:[%s2 + $0xcc] sm:$0xf]
      %v1100 = vld [vmem:[%s2 + $0xd0] sm:$0xf]
      %v1101 = vld [vmem:[%s2 + $0xd4] sm:$0xf]
      %v1102 = vld [vmem:[%s2 + $0xd8] sm:$0xf]
      %v1103 = vld [vmem:[%s2 + $0xdc] sm:$0xf]
      %v1104 = vld [vmem:[%s2 + $0xe0] sm:$0xf]
      %v1105 = vld [vmem:[%s2 + $0xe4] sm:$0xf]
      %v1106 = vld [vmem:[%s2 + $0xe8] sm:$0xf]
      %v1107 = vld [vmem:[%s2 + $0xec] sm:$0xf]
      %v1108 = vld [vmem:[%s2 + $0xf0] sm:$0xf]
      %v1109 = vld [vmem:[%s2 + $0xf4] sm:$0xf]
      %v1110 = vld [vmem:[%s2 + $0xf8] sm:$0xf]
      %v1111 = vld [vmem:[%s2 + $0xfc] sm:$0xf]
      %v1120 = vunpack.c.l.b16 %v1088
      %v1121 = vunpack.c.l.b16 %v1089
      %v1122 = vunpack.c.l.b16 %v1090
      %v1123 = vunpack.c.l.b16 %v1091
      %v1124 = vunpack.c.l.b16 %v1092
      %v1125 = vunpack.c.l.b16 %v1093
      %v1126 = vunpack.c.l.b16 %v1094
      %v1127 = vunpack.c.l.b16 %v1095
      %v1128 = vpack.c.b16 %v1121, %v1120
      %v1129 = vpack.c.b16 %v1123, %v1122
      %v1130 = vpack.c.b16 %v1125, %v1124
      %v1131 = vpack.c.b16 %v1127, %v1126
      %v1152 = vunpack.c.l.b16 %v1096
      %v1153 = vunpack.c.l.b16 %v1097
      %v1154 = vunpack.c.l.b16 %v1098
      %v1155 = vunpack.c.l.b16 %v1099
      %v1156 = vunpack.c.l.b16 %v1100
      %v1157 = vunpack.c.l.b16 %v1101
      %v1158 = vunpack.c.l.b16 %v1102
      %v1159 = vunpack.c.l.b16 %v1103
      %v1160 = vunpack.c.l.b16 %v1104
      %v1161 = vunpack.c.l.b16 %v1105
      %v1162 = vunpack.c.l.b16 %v1106
      %v1163 = vunpack.c.l.b16 %v1107
      %v1164 = vunpack.c.l.b16 %v1108
      %v1165 = vunpack.c.l.b16 %v1109
      %v1166 = vunpack.c.l.b16 %v1110
      %v1167 = vunpack.c.l.b16 %v1111
      %v1168 = vpack.c.b16 %v1153, %v1152
      %v1169 = vpack.c.b16 %v1155, %v1154
      %v1170 = vpack.c.b16 %v1157, %v1156
      %v1171 = vpack.c.b16 %v1159, %v1158
      %v1172 = vpack.c.b16 %v1161, %v1160
      %v1173 = vpack.c.b16 %v1163, %v1162
      %v1174 = vpack.c.b16 %v1165, %v1164
      %v1175 = vpack.c.b16 %v1167, %v1166
      %1184 = vmatprep.subr.bf16.mxu0 0
      %1185 = vmatpush1.bf16.msra.mxu0 %v1168
      %1186 = vmatprep.subr.bf16.mxu0 0
      %1187 = vmatpush1.bf16.msra.mxu0 %v1169
      %1188 = vmatprep.subr.bf16.mxu0 0
      %1189 = vmatpush1.bf16.msra.mxu0 %v1170
      %1190 = vmatprep.subr.bf16.mxu0 0
      %1191 = vmatpush1.bf16.msra.mxu0 %v1171
      %1192 = vmatprep.subr.bf16.mxu0 0
      %1193 = vmatpush1.bf16.msra.mxu0 %v1172
      %1194 = vmatprep.subr.bf16.mxu0 0
      %1195 = vmatpush1.bf16.msra.mxu0 %v1173
      %1196 = vmatprep.subr.bf16.mxu0 0
      %1197 = vmatpush1.bf16.msra.mxu0 %v1174
      %1198 = vmatprep.subr.bf16.mxu0 0
      %1199 = vmatpush1.bf16.msra.mxu0 %v1175
      %1200 = vmatprep.subr.bf16.mxu0 0
      %1201 = vmatpush1.bf16.msra.mxu0 0
      %1202 = vmatprep.subr.bf16.mxu0 0
      %1203 = vmatpush1.bf16.msra.mxu0 0
      %1204 = vmatprep.subr.bf16.mxu0 0
      %1205 = vmatpush1.bf16.msra.mxu0 0
      %1206 = vmatprep.subr.bf16.mxu0 0
      %1207 = vmatpush1.bf16.msra.mxu0 0
      %1208 = vmatprep.subr.bf16.mxu0 0
      %1209 = vmatpush1.bf16.msra.mxu0 0
      %1210 = vmatprep.subr.bf16.mxu0 0
      %1211 = vmatpush1.bf16.msra.mxu0 0
      %1212 = vmatprep.subr.bf16.mxu0 0
      %1213 = vmatpush1.bf16.msra.mxu0 0
      %1214 = vmatprep.subr.bf16.mxu0 0
      %1215 = vmatpush1.bf16.msra.mxu0 0
      %1216 = vmatprep.mubr.bf16.mxu0 0
      %1217 = vmatmul.mubr.bf16.gmra.mrb[0].mxu0 %v1128
      %v1218 = vpop.f32.mrb[0].mxu0
      %v1219 = vadd.f32 0.0, %v1218
      %v1220 = vpop.f32.mrb[0].mxu0
      %v1221 = vpop.f32.mrb[0].mxu0
      %v1222 = vadd.f32 0.0, %v1221
      %v1223 = vpop.f32.mrb[0].mxu0
      %1224 = vmatprep.mubr.bf16.mxu0 0
      %1225 = vmatmul.mubr.bf16.gmra.mrb[0].mxu0 %v1129
      %v1226 = vpop.f32.mrb[0].mxu0
      %v1227 = vadd.f32 0.0, %v1226
      %v1228 = vpop.f32.mrb[0].mxu0
      %v1229 = vpop.f32.mrb[0].mxu0
      %v1230 = vadd.f32 0.0, %v1229
      %v1231 = vpop.f32.mrb[0].mxu0
      %1232 = vmatprep.mubr.bf16.mxu0 0
      %1233 = vmatmul.mubr.bf16.gmra.mrb[0].mxu0 %v1130
      %v1234 = vpop.f32.mrb[0].mxu0
      %v1235 = vadd.f32 0.0, %v1234
      %v1236 = vpop.f32.mrb[0].mxu0
      %v1237 = vpop.f32.mrb[0].mxu0
      %v1238 = vadd.f32 0.0, %v1237
      %v1239 = vpop.f32.mrb[0].mxu0
      %1240 = vmatprep.mubr.bf16.mxu0 0
      %1241 = vmatmul.mubr.bf16.gmra.mrb[0].mxu0 %v1131
      %v1242 = vpop.f32.mrb[0].mxu0
      %v1243 = vadd.f32 0.0, %v1242
      %v1244 = vpop.f32.mrb[0].mxu0
      %v1245 = vpop.f32.mrb[0].mxu0
      %v1246 = vadd.f32 0.0, %v1245
      %v1247 = vpop.f32.mrb[0].mxu0
      %1248 = vdwg.mxu0
      %v1249 = vadd.f32 %v1080, %v1219
      %v1250 = vadd.f32 %v1081, %v1222
      %v1251 = vadd.f32 %v1082, %v1227
      %v1252 = vadd.f32 %v1083, %v1230
      %v1253 = vadd.f32 %v1084, %v1235
      %v1254 = vadd.f32 %v1085, %v1238
      %v1255 = vadd.f32 %v1086, %v1243
      %v1256 = vadd.f32 %v1087, %v1246
      %v1257 = vld [vmem:[%s392] sm:$0xf]
      %v1258 = vld [vmem:[%s392 + $0x4] sm:$0x1]
      %v1259 = vld [vmem:[%s392 + $0x8] sm:$0xf]
      %v1260 = vld [vmem:[%s392 + $0xc] sm:$0x1]
      %v1261 = vld [vmem:[%s392 + $0x10] sm:$0xf]
      %v1262 = vld [vmem:[%s392 + $0x14] sm:$0x1]
      %v1263 = vld [vmem:[%s392 + $0x18] sm:$0xf]
      %v1264 = vld [vmem:[%s392 + $0x1c] sm:$0x1]
      %v1265 = vld [vmem:[%s392 + $0x20] sm:$0xf]
      %v1266 = vld [vmem:[%s392 + $0x24] sm:$0x1]
      %v1267 = vld [vmem:[%s392 + $0x28] sm:$0xf]
      %v1268 = vld [vmem:[%s392 + $0x2c] sm:$0x1]
      %v1269 = vld [vmem:[%s392 + $0x30] sm:$0xf]
      %v1270 = vld [vmem:[%s392 + $0x34] sm:$0x1]
      %v1271 = vld [vmem:[%s392 + $0x38] sm:$0xf]
      %v1272 = vld [vmem:[%s392 + $0x3c] sm:$0x1]
      %v1274 = vshrl.u32 %v1257, 16
      %v1276 = vrot.slane %v1274, 4
      %v1277 = vshll.u32 %v1257, 16
      %v1279 = vrot.slane %v1277, 5
      %v1280 = vor.u32 %v1276, %v1279
      %v1281 = vrot.slane %v1280, 4
      %v1283 = vshll.u32 %v1258, 16
      %v1285 = vrot.slane %v1283, 5
      %v1286 = vsel %vm481, %v1281, %v1285
      %v1288 = vshrl.u32 %v1259, 16
      %v1290 = vrot.slane %v1288, 4
      %v1291 = vshll.u32 %v1259, 16
      %v1293 = vrot.slane %v1291, 5
      %v1294 = vor.u32 %v1290, %v1293
      %v1295 = vrot.slane %v1294, 4
      %v1297 = vshll.u32 %v1260, 16
      %v1299 = vrot.slane %v1297, 5
      %v1300 = vsel %vm481, %v1295, %v1299
      %v1302 = vshrl.u32 %v1261, 16
      %v1304 = vrot.slane %v1302, 4
      %v1305 = vshll.u32 %v1261, 16
      %v1307 = vrot.slane %v1305, 5
      %v1308 = vor.u32 %v1304, %v1307
      %v1309 = vrot.slane %v1308, 4
      %v1311 = vshll.u32 %v1262, 16
      %v1313 = vrot.slane %v1311, 5
      %v1314 = vsel %vm481, %v1309, %v1313
      %v1316 = vshrl.u32 %v1263, 16
      %v1318 = vrot.slane %v1316, 4
      %v1319 = vshll.u32 %v1263, 16
      %v1321 = vrot.slane %v1319, 5
      %v1322 = vor.u32 %v1318, %v1321
      %v1323 = vrot.slane %v1322, 4
      %v1325 = vshll.u32 %v1264, 16
      %v1327 = vrot.slane %v1325, 5
      %v1328 = vsel %vm481, %v1323, %v1327
      %v1330 = vshrl.u32 %v1265, 16
      %v1332 = vrot.slane %v1330, 4
      %v1333 = vshll.u32 %v1265, 16
      %v1335 = vrot.slane %v1333, 5
      %v1336 = vor.u32 %v1332, %v1335
      %v1337 = vrot.slane %v1336, 4
      %v1339 = vshll.u32 %v1266, 16
      %v1341 = vrot.slane %v1339, 5
      %v1342 = vsel %vm481, %v1337, %v1341
      %v1344 = vshrl.u32 %v1267, 16
      %v1346 = vrot.slane %v1344, 4
      %v1347 = vshll.u32 %v1267, 16
      %v1349 = vrot.slane %v1347, 5
      %v1350 = vor.u32 %v1346, %v1349
      %v1351 = vrot.slane %v1350, 4
      %v1353 = vshll.u32 %v1268, 16
      %v1355 = vrot.slane %v1353, 5
      %v1356 = vsel %vm481, %v1351, %v1355
      %v1358 = vshrl.u32 %v1269, 16
      %v1360 = vrot.slane %v1358, 4
      %v1361 = vshll.u32 %v1269, 16
      %v1363 = vrot.slane %v1361, 5
      %v1364 = vor.u32 %v1360, %v1363
      %v1365 = vrot.slane %v1364, 4
      %v1367 = vshll.u32 %v1270, 16
      %v1369 = vrot.slane %v1367, 5
      %v1370 = vsel %vm481, %v1365, %v1369
      %v1372 = vshrl.u32 %v1271, 16
      %v1374 = vrot.slane %v1372, 4
      %v1375 = vshll.u32 %v1271, 16
      %v1377 = vrot.slane %v1375, 5
      %v1378 = vor.u32 %v1374, %v1377
      %v1379 = vrot.slane %v1378, 4
      %v1381 = vshll.u32 %v1272, 16
      %v1383 = vrot.slane %v1381, 5
      %v1384 = vsel %vm481, %v1379, %v1383
      %v1385 = vld [vmem:[%s2 + $0x100] sm:$0xf]
      %v1386 = vld [vmem:[%s2 + $0x104] sm:$0xf]
      %v1387 = vld [vmem:[%s2 + $0x108] sm:$0xf]
      %v1388 = vld [vmem:[%s2 + $0x10c] sm:$0xf]
      %v1389 = vld [vmem:[%s2 + $0x110] sm:$0xf]
      %v1390 = vld [vmem:[%s2 + $0x114] sm:$0xf]
      %v1391 = vld [vmem:[%s2 + $0x118] sm:$0xf]
      %v1392 = vld [vmem:[%s2 + $0x11c] sm:$0xf]
      %v1393 = vld [vmem:[%s2 + $0x120] sm:$0xf]
      %v1394 = vld [vmem:[%s2 + $0x124] sm:$0xf]
      %v1395 = vld [vmem:[%s2 + $0x128] sm:$0xf]
      %v1396 = vld [vmem:[%s2 + $0x12c] sm:$0xf]
      %v1397 = vld [vmem:[%s2 + $0x130] sm:$0xf]
      %v1398 = vld [vmem:[%s2 + $0x134] sm:$0xf]
      %v1399 = vld [vmem:[%s2 + $0x138] sm:$0xf]
      %v1400 = vld [vmem:[%s2 + $0x13c] sm:$0xf]
      %v1401 = vunpack.c.l.b16 %v1286
      %v1402 = vunpack.c.l.b16 %v1300
      %v1403 = vunpack.c.l.b16 %v1314
      %v1404 = vunpack.c.l.b16 %v1328
      %v1405 = vunpack.c.l.b16 %v1342
      %v1406 = vunpack.c.l.b16 %v1356
      %v1407 = vunpack.c.l.b16 %v1370
      %v1408 = vunpack.c.l.b16 %v1384
      %v1409 = vpack.c.b16 %v1402, %v1401
      %v1410 = vpack.c.b16 %v1404, %v1403
      %v1411 = vpack.c.b16 %v1406, %v1405
      %v1412 = vpack.c.b16 %v1408, %v1407
      %v1433 = vunpack.c.l.b16 %v1385
      %v1434 = vunpack.c.l.b16 %v1386
      %v1435 = vunpack.c.l.b16 %v1387
      %v1436 = vunpack.c.l.b16 %v1388
      %v1437 = vunpack.c.l.b16 %v1389
      %v1438 = vunpack.c.l.b16 %v1390
      %v1439 = vunpack.c.l.b16 %v1391
      %v1440 = vunpack.c.l.b16 %v1392
      %v1441 = vunpack.c.l.b16 %v1393
      %v1442 = vunpack.c.l.b16 %v1394
      %v1443 = vunpack.c.l.b16 %v1395
      %v1444 = vunpack.c.l.b16 %v1396
      %v1445 = vunpack.c.l.b16 %v1397
      %v1446 = vunpack.c.l.b16 %v1398
      %v1447 = vunpack.c.l.b16 %v1399
      %v1448 = vunpack.c.l.b16 %v1400
      %v1449 = vpack.c.b16 %v1434, %v1433
      %v1450 = vpack.c.b16 %v1436, %v1435
      %v1451 = vpack.c.b16 %v1438, %v1437
      %v1452 = vpack.c.b16 %v1440, %v1439
      %v1453 = vpack.c.b16 %v1442, %v1441
      %v1454 = vpack.c.b16 %v1444, %v1443
      %v1455 = vpack.c.b16 %v1446, %v1445
      %v1456 = vpack.c.b16 %v1448, %v1447
      %1465 = vmatprep.subr.bf16.mxu0 0
      %1466 = vmatpush1.bf16.msra.mxu0 %v1449
      %1467 = vmatprep.subr.bf16.mxu0 0
      %1468 = vmatpush1.bf16.msra.mxu0 %v1450
      %1469 = vmatprep.subr.bf16.mxu0 0
      %1470 = vmatpush1.bf16.msra.mxu0 %v1451
      %1471 = vmatprep.subr.bf16.mxu0 0
      %1472 = vmatpush1.bf16.msra.mxu0 %v1452
      %1473 = vmatprep.subr.bf16.mxu0 0
      %1474 = vmatpush1.bf16.msra.mxu0 %v1453
      %1475 = vmatprep.subr.bf16.mxu0 0
      %1476 = vmatpush1.bf16.msra.mxu0 %v1454
      %1477 = vmatprep.subr.bf16.mxu0 0
      %1478 = vmatpush1.bf16.msra.mxu0 %v1455
      %1479 = vmatprep.subr.bf16.mxu0 0
      %1480 = vmatpush1.bf16.msra.mxu0 %v1456
      %1481 = vmatprep.subr.bf16.mxu0 0
      %1482 = vmatpush1.bf16.msra.mxu0 0
      %1483 = vmatprep.subr.bf16.mxu0 0
      %1484 = vmatpush1.bf16.msra.mxu0 0
      %1485 = vmatprep.subr.bf16.mxu0 0
      %1486 = vmatpush1.bf16.msra.mxu0 0
      %1487 = vmatprep.subr.bf16.mxu0 0
      %1488 = vmatpush1.bf16.msra.mxu0 0
      %1489 = vmatprep.subr.bf16.mxu0 0
      %1490 = vmatpush1.bf16.msra.mxu0 0
      %1491 = vmatprep.subr.bf16.mxu0 0
      %1492 = vmatpush1.bf16.msra.mxu0 0
      %1493 = vmatprep.subr.bf16.mxu0 0
      %1494 = vmatpush1.bf16.msra.mxu0 0
      %1495 = vmatprep.subr.bf16.mxu0 0
      %1496 = vmatpush1.bf16.msra.mxu0 0
      %1497 = vmatprep.mubr.bf16.mxu0 0
      %1498 = vmatmul.mubr.bf16.gmra.mrb[0].mxu0 %v1409
      %v1499 = vpop.f32.mrb[0].mxu0
      %v1500 = vadd.f32 0.0, %v1499
      %v1501 = vpop.f32.mrb[0].mxu0
      %v1502 = vpop.f32.mrb[0].mxu0
      %v1503 = vadd.f32 0.0, %v1502
      %v1504 = vpop.f32.mrb[0].mxu0
      %1505 = vmatprep.mubr.bf16.mxu0 0
      %1506 = vmatmul.mubr.bf16.gmra.mrb[0].mxu0 %v1410
      %v1507 = vpop.f32.mrb[0].mxu0
      %v1508 = vadd.f32 0.0, %v1507
      %v1509 = vpop.f32.mrb[0].mxu0
      %v1510 = vpop.f32.mrb[0].mxu0
      %v1511 = vadd.f32 0.0, %v1510
      %v1512 = vpop.f32.mrb[0].mxu0
      %1513 = vmatprep.mubr.bf16.mxu0 0
      %1514 = vmatmul.mubr.bf16.gmra.mrb[0].mxu0 %v1411
      %v1515 = vpop.f32.mrb[0].mxu0
      %v1516 = vadd.f32 0.0, %v1515
      %v1517 = vpop.f32.mrb[0].mxu0
      %v1518 = vpop.f32.mrb[0].mxu0
      %v1519 = vadd.f32 0.0, %v1518
      %v1520 = vpop.f32.mrb[0].mxu0
      %1521 = vmatprep.mubr.bf16.mxu0 0
      %1522 = vmatmul.mubr.bf16.gmra.mrb[0].mxu0 %v1412
      %v1523 = vpop.f32.mrb[0].mxu0
      %v1524 = vadd.f32 0.0, %v1523
      %v1525 = vpop.f32.mrb[0].mxu0
      %v1526 = vpop.f32.mrb[0].mxu0
      %v1527 = vadd.f32 0.0, %v1526
      %v1528 = vpop.f32.mrb[0].mxu0
      %1529 = vdwg.mxu0
      %v1530 = vadd.f32 %v1249, %v1500
      %v1531 = vadd.f32 %v1250, %v1503
      %v1532 = vadd.f32 %v1251, %v1508
      %v1533 = vadd.f32 %v1252, %v1511
      %v1534 = vadd.f32 %v1253, %v1516
      %v1535 = vadd.f32 %v1254, %v1519
      %v1536 = vadd.f32 %v1255, %v1524
      %v1537 = vadd.f32 %v1256, %v1527
      %v1538 = vld [vmem:[%s392] sm:$0xe]
      %v1539 = vld [vmem:[%s392 + $0x8] sm:$0xe]
      %v1540 = vld [vmem:[%s392 + $0x10] sm:$0xe]
      %v1541 = vld [vmem:[%s392 + $0x18] sm:$0xe]
      %v1542 = vld [vmem:[%s392 + $0x20] sm:$0xe]
      %v1543 = vld [vmem:[%s392 + $0x28] sm:$0xe]
      %v1544 = vld [vmem:[%s392 + $0x30] sm:$0xe]
      %v1545 = vld [vmem:[%s392 + $0x38] sm:$0xe]
      %v1562 = vrot.slane %v1538, 5
      %v1563 = vrot.slane %v1562, 4
      %v1564 = vrot.slane %v1258, 5
      %v1565 = vsel %vm902, %v1563, %v1564
      %v1566 = vrot.slane %v1539, 5
      %v1567 = vrot.slane %v1566, 4
      %v1568 = vrot.slane %v1260, 5
      %v1569 = vsel %vm902, %v1567, %v1568
      %v1570 = vrot.slane %v1540, 5
      %v1571 = vrot.slane %v1570, 4
      %v1572 = vrot.slane %v1262, 5
      %v1573 = vsel %vm902, %v1571, %v1572
      %v1574 = vrot.slane %v1541, 5
      %v1575 = vrot.slane %v1574, 4
      %v1576 = vrot.slane %v1264, 5
      %v1577 = vsel %vm902, %v1575, %v1576
      %v1578 = vrot.slane %v1542, 5
      %v1579 = vrot.slane %v1578, 4
      %v1580 = vrot.slane %v1266, 5
      %v1581 = vsel %vm902, %v1579, %v1580
      %v1582 = vrot.slane %v1543, 5
      %v1583 = vrot.slane %v1582, 4
      %v1584 = vrot.slane %v1268, 5
      %v1585 = vsel %vm902, %v1583, %v1584
      %v1586 = vrot.slane %v1544, 5
      %v1587 = vrot.slane %v1586, 4
      %v1588 = vrot.slane %v1270, 5
      %v1589 = vsel %vm902, %v1587, %v1588
      %v1590 = vrot.slane %v1545, 5
      %v1591 = vrot.slane %v1590, 4
      %v1592 = vrot.slane %v1272, 5
      %v1593 = vsel %vm902, %v1591, %v1592
      %v1594 = vld [vmem:[%s2 + $0x140] sm:$0xf]
      %v1595 = vld [vmem:[%s2 + $0x144] sm:$0xf]
      %v1596 = vld [vmem:[%s2 + $0x148] sm:$0xf]
      %v1597 = vld [vmem:[%s2 + $0x14c] sm:$0xf]
      %v1598 = vld [vmem:[%s2 + $0x150] sm:$0xf]
      %v1599 = vld [vmem:[%s2 + $0x154] sm:$0xf]
      %v1600 = vld [vmem:[%s2 + $0x158] sm:$0xf]
      %v1601 = vld [vmem:[%s2 + $0x15c] sm:$0xf]
      %v1602 = vld [vmem:[%s2 + $0x160] sm:$0xf]
      %v1603 = vld [vmem:[%s2 + $0x164] sm:$0xf]
      %v1604 = vld [vmem:[%s2 + $0x168] sm:$0xf]
      %v1605 = vld [vmem:[%s2 + $0x16c] sm:$0xf]
      %v1606 = vld [vmem:[%s2 + $0x170] sm:$0xf]
      %v1607 = vld [vmem:[%s2 + $0x174] sm:$0xf]
      %v1608 = vld [vmem:[%s2 + $0x178] sm:$0xf]
      %v1609 = vld [vmem:[%s2 + $0x17c] sm:$0xf]
      %v1610 = vunpack.c.l.b16 %v1565
      %v1611 = vunpack.c.l.b16 %v1569
      %v1612 = vunpack.c.l.b16 %v1573
      %v1613 = vunpack.c.l.b16 %v1577
      %v1614 = vunpack.c.l.b16 %v1581
      %v1615 = vunpack.c.l.b16 %v1585
      %v1616 = vunpack.c.l.b16 %v1589
      %v1617 = vunpack.c.l.b16 %v1593
      %v1618 = vpack.c.b16 %v1611, %v1610
      %v1619 = vpack.c.b16 %v1613, %v1612
      %v1620 = vpack.c.b16 %v1615, %v1614
      %v1621 = vpack.c.b16 %v1617, %v1616
      %v1642 = vunpack.c.l.b16 %v1594
      %v1643 = vunpack.c.l.b16 %v1595
      %v1644 = vunpack.c.l.b16 %v1596
      %v1645 = vunpack.c.l.b16 %v1597
      %v1646 = vunpack.c.l.b16 %v1598
      %v1647 = vunpack.c.l.b16 %v1599
      %v1648 = vunpack.c.l.b16 %v1600
      %v1649 = vunpack.c.l.b16 %v1601
      %v1650 = vunpack.c.l.b16 %v1602
      %v1651 = vunpack.c.l.b16 %v1603
      %v1652 = vunpack.c.l.b16 %v1604
      %v1653 = vunpack.c.l.b16 %v1605
      %v1654 = vunpack.c.l.b16 %v1606
      %v1655 = vunpack.c.l.b16 %v1607
      %v1656 = vunpack.c.l.b16 %v1608
      %v1657 = vunpack.c.l.b16 %v1609
      %v1658 = vpack.c.b16 %v1643, %v1642
      %v1659 = vpack.c.b16 %v1645, %v1644
      %v1660 = vpack.c.b16 %v1647, %v1646
      %v1661 = vpack.c.b16 %v1649, %v1648
      %v1662 = vpack.c.b16 %v1651, %v1650
      %v1663 = vpack.c.b16 %v1653, %v1652
      %v1664 = vpack.c.b16 %v1655, %v1654
      %v1665 = vpack.c.b16 %v1657, %v1656
      %1674 = vmatprep.subr.bf16.mxu0 0
      %1675 = vmatpush1.bf16.msra.mxu0 %v1658
      %1676 = vmatprep.subr.bf16.mxu0 0
      %1677 = vmatpush1.bf16.msra.mxu0 %v1659
      %1678 = vmatprep.subr.bf16.mxu0 0
      %1679 = vmatpush1.bf16.msra.mxu0 %v1660
      %1680 = vmatprep.subr.bf16.mxu0 0
      %1681 = vmatpush1.bf16.msra.mxu0 %v1661
      %1682 = vmatprep.subr.bf16.mxu0 0
      %1683 = vmatpush1.bf16.msra.mxu0 %v1662
      %1684 = vmatprep.subr.bf16.mxu0 0
      %1685 = vmatpush1.bf16.msra.mxu0 %v1663
      %1686 = vmatprep.subr.bf16.mxu0 0
      %1687 = vmatpush1.bf16.msra.mxu0 %v1664
      %1688 = vmatprep.subr.bf16.mxu0 0
      %1689 = vmatpush1.bf16.msra.mxu0 %v1665
      %1690 = vmatprep.subr.bf16.mxu0 0
      %1691 = vmatpush1.bf16.msra.mxu0 0
      %1692 = vmatprep.subr.bf16.mxu0 0
      %1693 = vmatpush1.bf16.msra.mxu0 0
      %1694 = vmatprep.subr.bf16.mxu0 0
      %1695 = vmatpush1.bf16.msra.mxu0 0
      %1696 = vmatprep.subr.bf16.mxu0 0
      %1697 = vmatpush1.bf16.msra.mxu0 0
      %1698 = vmatprep.subr.bf16.mxu0 0
      %1699 = vmatpush1.bf16.msra.mxu0 0
      %1700 = vmatprep.subr.bf16.mxu0 0
      %1701 = vmatpush1.bf16.msra.mxu0 0
      %1702 = vmatprep.subr.bf16.mxu0 0
      %1703 = vmatpush1.bf16.msra.mxu0 0
      %1704 = vmatprep.subr.bf16.mxu0 0
      %1705 = vmatpush1.bf16.msra.mxu0 0
      %1706 = vmatprep.mubr.bf16.mxu0 0
      %1707 = vmatmul.mubr.bf16.gmra.mrb[0].mxu0 %v1618
      %v1708 = vpop.f32.mrb[0].mxu0
      %v1709 = vadd.f32 0.0, %v1708
      %v1710 = vpop.f32.mrb[0].mxu0
      %v1711 = vpop.f32.mrb[0].mxu0
      %v1712 = vadd.f32 0.0, %v1711
      %v1713 = vpop.f32.mrb[0].mxu0
      %1714 = vmatprep.mubr.bf16.mxu0 0
      %1715 = vmatmul.mubr.bf16.gmra.mrb[0].mxu0 %v1619
      %v1716 = vpop.f32.mrb[0].mxu0
      %v1717 = vadd.f32 0.0, %v1716
      %v1718 = vpop.f32.mrb[0].mxu0
      %v1719 = vpop.f32.mrb[0].mxu0
      %v1720 = vadd.f32 0.0, %v1719
      %v1721 = vpop.f32.mrb[0].mxu0
      %1722 = vmatprep.mubr.bf16.mxu0 0
      %1723 = vmatmul.mubr.bf16.gmra.mrb[0].mxu0 %v1620
      %v1724 = vpop.f32.mrb[0].mxu0
      %v1725 = vadd.f32 0.0, %v1724
      %v1726 = vpop.f32.mrb[0].mxu0
      %v1727 = vpop.f32.mrb[0].mxu0
      %v1728 = vadd.f32 0.0, %v1727
      %v1729 = vpop.f32.mrb[0].mxu0
      %1730 = vmatprep.mubr.bf16.mxu0 0
      %1731 = vmatmul.mubr.bf16.gmra.mrb[0].mxu0 %v1621
      %v1732 = vpop.f32.mrb[0].mxu0
      %v1733 = vadd.f32 0.0, %v1732
      %v1734 = vpop.f32.mrb[0].mxu0
      %v1735 = vpop.f32.mrb[0].mxu0
      %v1736 = vadd.f32 0.0, %v1735
      %v1737 = vpop.f32.mrb[0].mxu0
      %1738 = vdwg.mxu0
      %v1739 = vadd.f32 %v1530, %v1709
      %v1740 = vadd.f32 %v1531, %v1712
      %v1741 = vadd.f32 %v1532, %v1717
      %v1742 = vadd.f32 %v1533, %v1720
      %v1743 = vadd.f32 %v1534, %v1725
      %v1744 = vadd.f32 %v1535, %v1728
      %v1745 = vadd.f32 %v1536, %v1733
      %v1746 = vadd.f32 %v1537, %v1736
      %s1747 = scalar_lea.vmem [#allocation2], 16
      %v1748 = vld [vmem:[%s1747] sm:$0xf]
      %v1749 = vld [vmem:[%s1747 + $0x8] sm:$0xf]
      %v1750 = vld [vmem:[%s1747 + $0x10] sm:$0xf]
      %v1751 = vld [vmem:[%s1747 + $0x18] sm:$0xf]
      %v1752 = vld [vmem:[%s1747 + $0x20] sm:$0xf]
      %v1753 = vld [vmem:[%s1747 + $0x28] sm:$0xf]
      %v1754 = vld [vmem:[%s1747 + $0x30] sm:$0xf]
      %v1755 = vld [vmem:[%s1747 + $0x38] sm:$0xf]
      %v1756 = vld [vmem:[%s2 + $0x180] sm:$0xf]
      %v1757 = vld [vmem:[%s2 + $0x184] sm:$0xf]
      %v1758 = vld [vmem:[%s2 + $0x188] sm:$0xf]
      %v1759 = vld [vmem:[%s2 + $0x18c] sm:$0xf]
      %v1760 = vld [vmem:[%s2 + $0x190] sm:$0xf]
      %v1761 = vld [vmem:[%s2 + $0x194] sm:$0xf]
      %v1762 = vld [vmem:[%s2 + $0x198] sm:$0xf]
      %v1763 = vld [vmem:[%s2 + $0x19c] sm:$0xf]
      %v1764 = vld [vmem:[%s2 + $0x1a0] sm:$0xf]
      %v1765 = vld [vmem:[%s2 + $0x1a4] sm:$0xf]
      %v1766 = vld [vmem:[%s2 + $0x1a8] sm:$0xf]
      %v1767 = vld [vmem:[%s2 + $0x1ac] sm:$0xf]
      %v1768 = vld [vmem:[%s2 + $0x1b0] sm:$0xf]
      %v1769 = vld [vmem:[%s2 + $0x1b4] sm:$0xf]
      %v1770 = vld [vmem:[%s2 + $0x1b8] sm:$0xf]
      %v1771 = vld [vmem:[%s2 + $0x1bc] sm:$0xf]
      %v1780 = vunpack.c.l.b16 %v1748
      %v1781 = vunpack.c.l.b16 %v1749
      %v1782 = vunpack.c.l.b16 %v1750
      %v1783 = vunpack.c.l.b16 %v1751
      %v1784 = vunpack.c.l.b16 %v1752
      %v1785 = vunpack.c.l.b16 %v1753
      %v1786 = vunpack.c.l.b16 %v1754
      %v1787 = vunpack.c.l.b16 %v1755
      %v1788 = vpack.c.b16 %v1781, %v1780
      %v1789 = vpack.c.b16 %v1783, %v1782
      %v1790 = vpack.c.b16 %v1785, %v1784
      %v1791 = vpack.c.b16 %v1787, %v1786
      %v1812 = vunpack.c.l.b16 %v1756
      %v1813 = vunpack.c.l.b16 %v1757
      %v1814 = vunpack.c.l.b16 %v1758
      %v1815 = vunpack.c.l.b16 %v1759
      %v1816 = vunpack.c.l.b16 %v1760
      %v1817 = vunpack.c.l.b16 %v1761
      %v1818 = vunpack.c.l.b16 %v1762
      %v1819 = vunpack.c.l.b16 %v1763
      %v1820 = vunpack.c.l.b16 %v1764
      %v1821 = vunpack.c.l.b16 %v1765
      %v1822 = vunpack.c.l.b16 %v1766
      %v1823 = vunpack.c.l.b16 %v1767
      %v1824 = vunpack.c.l.b16 %v1768
      %v1825 = vunpack.c.l.b16 %v1769
      %v1826 = vunpack.c.l.b16 %v1770
      %v1827 = vunpack.c.l.b16 %v1771
      %v1828 = vpack.c.b16 %v1813, %v1812
      %v1829 = vpack.c.b16 %v1815, %v1814
      %v1830 = vpack.c.b16 %v1817, %v1816
      %v1831 = vpack.c.b16 %v1819, %v1818
      %v1832 = vpack.c.b16 %v1821, %v1820
      %v1833 = vpack.c.b16 %v1823, %v1822
      %v1834 = vpack.c.b16 %v1825, %v1824
      %v1835 = vpack.c.b16 %v1827, %v1826
      %1844 = vmatprep.subr.bf16.mxu0 0
      %1845 = vmatpush1.bf16.msra.mxu0 %v1828
      %1846 = vmatprep.subr.bf16.mxu0 0
      %1847 = vmatpush1.bf16.msra.mxu0 %v1829
      %1848 = vmatprep.subr.bf16.mxu0 0
      %1849 = vmatpush1.bf16.msra.mxu0 %v1830
      %1850 = vmatprep.subr.bf16.mxu0 0
      %1851 = vmatpush1.bf16.msra.mxu0 %v1831
      %1852 = vmatprep.subr.bf16.mxu0 0
      %1853 = vmatpush1.bf16.msra.mxu0 %v1832
      %1854 = vmatprep.subr.bf16.mxu0 0
      %1855 = vmatpush1.bf16.msra.mxu0 %v1833
      %1856 = vmatprep.subr.bf16.mxu0 0
      %1857 = vmatpush1.bf16.msra.mxu0 %v1834
      %1858 = vmatprep.subr.bf16.mxu0 0
      %1859 = vmatpush1.bf16.msra.mxu0 %v1835
      %1860 = vmatprep.subr.bf16.mxu0 0
      %1861 = vmatpush1.bf16.msra.mxu0 0
      %1862 = vmatprep.subr.bf16.mxu0 0
      %1863 = vmatpush1.bf16.msra.mxu0 0
      %1864 = vmatprep.subr.bf16.mxu0 0
      %1865 = vmatpush1.bf16.msra.mxu0 0
      %1866 = vmatprep.subr.bf16.mxu0 0
      %1867 = vmatpush1.bf16.msra.mxu0 0
      %1868 = vmatprep.subr.bf16.mxu0 0
      %1869 = vmatpush1.bf16.msra.mxu0 0
      %1870 = vmatprep.subr.bf16.mxu0 0
      %1871 = vmatpush1.bf16.msra.mxu0 0
      %1872 = vmatprep.subr.bf16.mxu0 0
      %1873 = vmatpush1.bf16.msra.mxu0 0
      %1874 = vmatprep.subr.bf16.mxu0 0
      %1875 = vmatpush1.bf16.msra.mxu0 0
      %1876 = vmatprep.mubr.bf16.mxu0 0
      %1877 = vmatmul.mubr.bf16.gmra.mrb[0].mxu0 %v1788
      %v1878 = vpop.f32.mrb[0].mxu0
      %v1879 = vadd.f32 0.0, %v1878
      %v1880 = vpop.f32.mrb[0].mxu0
      %v1881 = vpop.f32.mrb[0].mxu0
      %v1882 = vadd.f32 0.0, %v1881
      %v1883 = vpop.f32.mrb[0].mxu0
      %1884 = vmatprep.mubr.bf16.mxu0 0
      %1885 = vmatmul.mubr.bf16.gmra.mrb[0].mxu0 %v1789
      %v1886 = vpop.f32.mrb[0].mxu0
      %v1887 = vadd.f32 0.0, %v1886
      %v1888 = vpop.f32.mrb[0].mxu0
      %v1889 = vpop.f32.mrb[0].mxu0
      %v1890 = vadd.f32 0.0, %v1889
      %v1891 = vpop.f32.mrb[0].mxu0
      %1892 = vmatprep.mubr.bf16.mxu0 0
      %1893 = vmatmul.mubr.bf16.gmra.mrb[0].mxu0 %v1790
      %v1894 = vpop.f32.mrb[0].mxu0
      %v1895 = vadd.f32 0.0, %v1894
      %v1896 = vpop.f32.mrb[0].mxu0
      %v1897 = vpop.f32.mrb[0].mxu0
      %v1898 = vadd.f32 0.0, %v1897
      %v1899 = vpop.f32.mrb[0].mxu0
      %1900 = vmatprep.mubr.bf16.mxu0 0
      %1901 = vmatmul.mubr.bf16.gmra.mrb[0].mxu0 %v1791
      %v1902 = vpop.f32.mrb[0].mxu0
      %v1903 = vadd.f32 0.0, %v1902
      %v1904 = vpop.f32.mrb[0].mxu0
      %v1905 = vpop.f32.mrb[0].mxu0
      %v1906 = vadd.f32 0.0, %v1905
      %v1907 = vpop.f32.mrb[0].mxu0
      %1908 = vdwg.mxu0
      %v1909 = vadd.f32 %v1739, %v1879
      %v1910 = vadd.f32 %v1740, %v1882
      %v1911 = vadd.f32 %v1741, %v1887
      %v1912 = vadd.f32 %v1742, %v1890
      %v1913 = vadd.f32 %v1743, %v1895
      %v1914 = vadd.f32 %v1744, %v1898
      %v1915 = vadd.f32 %v1745, %v1903
      %v1916 = vadd.f32 %v1746, %v1906
      %v1917 = vld [vmem:[%s1747] sm:$0xf]
      %v1918 = vld [vmem:[%s1747 + $0x4] sm:$0x1]
      %v1919 = vld [vmem:[%s1747 + $0x8] sm:$0xf]
      %v1920 = vld [vmem:[%s1747 + $0xc] sm:$0x1]
      %v1921 = vld [vmem:[%s1747 + $0x10] sm:$0xf]
      %v1922 = vld [vmem:[%s1747 + $0x14] sm:$0x1]
      %v1923 = vld [vmem:[%s1747 + $0x18] sm:$0xf]
      %v1924 = vld [vmem:[%s1747 + $0x1c] sm:$0x1]
      %v1925 = vld [vmem:[%s1747 + $0x20] sm:$0xf]
      %v1926 = vld [vmem:[%s1747 + $0x24] sm:$0x1]
      %v1927 = vld [vmem:[%s1747 + $0x28] sm:$0xf]
      %v1928 = vld [vmem:[%s1747 + $0x2c] sm:$0x1]
      %v1929 = vld [vmem:[%s1747 + $0x30] sm:$0xf]
      %v1930 = vld [vmem:[%s1747 + $0x34] sm:$0x1]
      %v1931 = vld [vmem:[%s1747 + $0x38] sm:$0xf]
      %v1932 = vld [vmem:[%s1747 + $0x3c] sm:$0x1]
      %v1934 = vshrl.u32 %v1917, 16
      %v1936 = vrot.slane %v1934, 4
      %v1937 = vshll.u32 %v1917, 16
      %v1939 = vrot.slane %v1937, 5
      %v1940 = vor.u32 %v1936, %v1939
      %v1941 = vrot.slane %v1940, 4
      %v1943 = vshll.u32 %v1918, 16
      %v1945 = vrot.slane %v1943, 5
      %v1946 = vsel %vm481, %v1941, %v1945
      %v1948 = vshrl.u32 %v1919, 16
      %v1950 = vrot.slane %v1948, 4
      %v1951 = vshll.u32 %v1919, 16
      %v1953 = vrot.slane %v1951, 5
      %v1954 = vor.u32 %v1950, %v1953
      %v1955 = vrot.slane %v1954, 4
      %v1957 = vshll.u32 %v1920, 16
      %v1959 = vrot.slane %v1957, 5
      %v1960 = vsel %vm481, %v1955, %v1959
      %v1962 = vshrl.u32 %v1921, 16
      %v1964 = vrot.slane %v1962, 4
      %v1965 = vshll.u32 %v1921, 16
      %v1967 = vrot.slane %v1965, 5
      %v1968 = vor.u32 %v1964, %v1967
      %v1969 = vrot.slane %v1968, 4
      %v1971 = vshll.u32 %v1922, 16
      %v1973 = vrot.slane %v1971, 5
      %v1974 = vsel %vm481, %v1969, %v1973
      %v1976 = vshrl.u32 %v1923, 16
      %v1978 = vrot.slane %v1976, 4
      %v1979 = vshll.u32 %v1923, 16
      %v1981 = vrot.slane %v1979, 5
      %v1982 = vor.u32 %v1978, %v1981
      %v1983 = vrot.slane %v1982, 4
      %v1985 = vshll.u32 %v1924, 16
      %v1987 = vrot.slane %v1985, 5
      %v1988 = vsel %vm481, %v1983, %v1987
      %v1990 = vshrl.u32 %v1925, 16
      %v1992 = vrot.slane %v1990, 4
      %v1993 = vshll.u32 %v1925, 16
      %v1995 = vrot.slane %v1993, 5
      %v1996 = vor.u32 %v1992, %v1995
      %v1997 = vrot.slane %v1996, 4
      %v1999 = vshll.u32 %v1926, 16
      %v2001 = vrot.slane %v1999, 5
      %v2002 = vsel %vm481, %v1997, %v2001
      %v2004 = vshrl.u32 %v1927, 16
      %v2006 = vrot.slane %v2004, 4
      %v2007 = vshll.u32 %v1927, 16
      %v2009 = vrot.slane %v2007, 5
      %v2010 = vor.u32 %v2006, %v2009
      %v2011 = vrot.slane %v2010, 4
      %v2013 = vshll.u32 %v1928, 16
      %v2015 = vrot.slane %v2013, 5
      %v2016 = vsel %vm481, %v2011, %v2015
      %v2018 = vshrl.u32 %v1929, 16
      %v2020 = vrot.slane %v2018, 4
      %v2021 = vshll.u32 %v1929, 16
      %v2023 = vrot.slane %v2021, 5
      %v2024 = vor.u32 %v2020, %v2023
      %v2025 = vrot.slane %v2024, 4
      %v2027 = vshll.u32 %v1930, 16
      %v2029 = vrot.slane %v2027, 5
      %v2030 = vsel %vm481, %v2025, %v2029
      %v2032 = vshrl.u32 %v1931, 16
      %v2034 = vrot.slane %v2032, 4
      %v2035 = vshll.u32 %v1931, 16
      %v2037 = vrot.slane %v2035, 5
      %v2038 = vor.u32 %v2034, %v2037
      %v2039 = vrot.slane %v2038, 4
      %v2041 = vshll.u32 %v1932, 16
      %v2043 = vrot.slane %v2041, 5
      %v2044 = vsel %vm481, %v2039, %v2043
      %v2045 = vld [vmem:[%s2 + $0x1c0] sm:$0xf]
      %v2046 = vld [vmem:[%s2 + $0x1c4] sm:$0xf]
      %v2047 = vld [vmem:[%s2 + $0x1c8] sm:$0xf]
      %v2048 = vld [vmem:[%s2 + $0x1cc] sm:$0xf]
      %v2049 = vld [vmem:[%s2 + $0x1d0] sm:$0xf]
      %v2050 = vld [vmem:[%s2 + $0x1d4] sm:$0xf]
      %v2051 = vld [vmem:[%s2 + $0x1d8] sm:$0xf]
      %v2052 = vld [vmem:[%s2 + $0x1dc] sm:$0xf]
      %v2053 = vld [vmem:[%s2 + $0x1e0] sm:$0xf]
      %v2054 = vld [vmem:[%s2 + $0x1e4] sm:$0xf]
      %v2055 = vld [vmem:[%s2 + $0x1e8] sm:$0xf]
      %v2056 = vld [vmem:[%s2 + $0x1ec] sm:$0xf]
      %v2057 = vld [vmem:[%s2 + $0x1f0] sm:$0xf]
      %v2058 = vld [vmem:[%s2 + $0x1f4] sm:$0xf]
      %v2059 = vld [vmem:[%s2 + $0x1f8] sm:$0xf]
      %v2060 = vld [vmem:[%s2 + $0x1fc] sm:$0xf]
      %v2061 = vunpack.c.l.b16 %v1946
      %v2062 = vunpack.c.l.b16 %v1960
      %v2063 = vunpack.c.l.b16 %v1974
      %v2064 = vunpack.c.l.b16 %v1988
      %v2065 = vunpack.c.l.b16 %v2002
      %v2066 = vunpack.c.l.b16 %v2016
      %v2067 = vunpack.c.l.b16 %v2030
      %v2068 = vunpack.c.l.b16 %v2044
      %v2069 = vpack.c.b16 %v2062, %v2061
      %v2070 = vpack.c.b16 %v2064, %v2063
      %v2071 = vpack.c.b16 %v2066, %v2065
      %v2072 = vpack.c.b16 %v2068, %v2067
      %v2093 = vunpack.c.l.b16 %v2045
      %v2094 = vunpack.c.l.b16 %v2046
      %v2095 = vunpack.c.l.b16 %v2047
      %v2096 = vunpack.c.l.b16 %v2048
      %v2097 = vunpack.c.l.b16 %v2049
      %v2098 = vunpack.c.l.b16 %v2050
      %v2099 = vunpack.c.l.b16 %v2051
      %v2100 = vunpack.c.l.b16 %v2052
      %v2101 = vunpack.c.l.b16 %v2053
      %v2102 = vunpack.c.l.b16 %v2054
      %v2103 = vunpack.c.l.b16 %v2055
      %v2104 = vunpack.c.l.b16 %v2056
      %v2105 = vunpack.c.l.b16 %v2057
      %v2106 = vunpack.c.l.b16 %v2058
      %v2107 = vunpack.c.l.b16 %v2059
      %v2108 = vunpack.c.l.b16 %v2060
      %v2109 = vpack.c.b16 %v2094, %v2093
      %v2110 = vpack.c.b16 %v2096, %v2095
      %v2111 = vpack.c.b16 %v2098, %v2097
      %v2112 = vpack.c.b16 %v2100, %v2099
      %v2113 = vpack.c.b16 %v2102, %v2101
      %v2114 = vpack.c.b16 %v2104, %v2103
      %v2115 = vpack.c.b16 %v2106, %v2105
      %v2116 = vpack.c.b16 %v2108, %v2107
      %2125 = vmatprep.subr.bf16.mxu0 0
      %2126 = vmatpush1.bf16.msra.mxu0 %v2109
      %2127 = vmatprep.subr.bf16.mxu0 0
      %2128 = vmatpush1.bf16.msra.mxu0 %v2110
      %2129 = vmatprep.subr.bf16.mxu0 0
      %2130 = vmatpush1.bf16.msra.mxu0 %v2111
      %2131 = vmatprep.subr.bf16.mxu0 0
      %2132 = vmatpush1.bf16.msra.mxu0 %v2112
      %2133 = vmatprep.subr.bf16.mxu0 0
      %2134 = vmatpush1.bf16.msra.mxu0 %v2113
      %2135 = vmatprep.subr.bf16.mxu0 0
      %2136 = vmatpush1.bf16.msra.mxu0 %v2114
      %2137 = vmatprep.subr.bf16.mxu0 0
      %2138 = vmatpush1.bf16.msra.mxu0 %v2115
      %2139 = vmatprep.subr.bf16.mxu0 0
      %2140 = vmatpush1.bf16.msra.mxu0 %v2116
      %2141 = vmatprep.subr.bf16.mxu0 0
      %2142 = vmatpush1.bf16.msra.mxu0 0
      %2143 = vmatprep.subr.bf16.mxu0 0
      %2144 = vmatpush1.bf16.msra.mxu0 0
      %2145 = vmatprep.subr.bf16.mxu0 0
      %2146 = vmatpush1.bf16.msra.mxu0 0
      %2147 = vmatprep.subr.bf16.mxu0 0
      %2148 = vmatpush1.bf16.msra.mxu0 0
      %2149 = vmatprep.subr.bf16.mxu0 0
      %2150 = vmatpush1.bf16.msra.mxu0 0
      %2151 = vmatprep.subr.bf16.mxu0 0
      %2152 = vmatpush1.bf16.msra.mxu0 0
      %2153 = vmatprep.subr.bf16.mxu0 0
      %2154 = vmatpush1.bf16.msra.mxu0 0
      %2155 = vmatprep.subr.bf16.mxu0 0
      %2156 = vmatpush1.bf16.msra.mxu0 0
      %2157 = vmatprep.mubr.bf16.mxu0 0
      %2158 = vmatmul.mubr.bf16.gmra.mrb[0].mxu0 %v2069
      %v2159 = vpop.f32.mrb[0].mxu0
      %v2160 = vadd.f32 0.0, %v2159
      %v2161 = vpop.f32.mrb[0].mxu0
      %v2162 = vpop.f32.mrb[0].mxu0
      %v2163 = vadd.f32 0.0, %v2162
      %v2164 = vpop.f32.mrb[0].mxu0
      %2165 = vmatprep.mubr.bf16.mxu0 0
      %2166 = vmatmul.mubr.bf16.gmra.mrb[0].mxu0 %v2070
      %v2167 = vpop.f32.mrb[0].mxu0
      %v2168 = vadd.f32 0.0, %v2167
      %v2169 = vpop.f32.mrb[0].mxu0
      %v2170 = vpop.f32.mrb[0].mxu0
      %v2171 = vadd.f32 0.0, %v2170
      %v2172 = vpop.f32.mrb[0].mxu0
      %2173 = vmatprep.mubr.bf16.mxu0 0
      %2174 = vmatmul.mubr.bf16.gmra.mrb[0].mxu0 %v2071
      %v2175 = vpop.f32.mrb[0].mxu0
      %v2176 = vadd.f32 0.0, %v2175
      %v2177 = vpop.f32.mrb[0].mxu0
      %v2178 = vpop.f32.mrb[0].mxu0
      %v2179 = vadd.f32 0.0, %v2178
      %v2180 = vpop.f32.mrb[0].mxu0
      %2181 = vmatprep.mubr.bf16.mxu0 0
      %2182 = vmatmul.mubr.bf16.gmra.mrb[0].mxu0 %v2072
      %v2183 = vpop.f32.mrb[0].mxu0
      %v2184 = vadd.f32 0.0, %v2183
      %v2185 = vpop.f32.mrb[0].mxu0
      %v2186 = vpop.f32.mrb[0].mxu0
      %v2187 = vadd.f32 0.0, %v2186
      %v2188 = vpop.f32.mrb[0].mxu0
      %2189 = vdwg.mxu0
      %v2190 = vadd.f32 %v1909, %v2160
      %v2191 = vadd.f32 %v1910, %v2163
      %v2192 = vadd.f32 %v1911, %v2168
      %v2193 = vadd.f32 %v1912, %v2171
      %v2194 = vadd.f32 %v1913, %v2176
      %v2195 = vadd.f32 %v1914, %v2179
      %v2196 = vadd.f32 %v1915, %v2184
      %v2197 = vadd.f32 %v1916, %v2187
      %v2198 = vld [vmem:[%s1747] sm:$0xe]
      %v2199 = vld [vmem:[%s1747 + $0x8] sm:$0xe]
      %v2200 = vld [vmem:[%s1747 + $0x10] sm:$0xe]
      %v2201 = vld [vmem:[%s1747 + $0x18] sm:$0xe]
      %v2202 = vld [vmem:[%s1747 + $0x20] sm:$0xe]
      %v2203 = vld [vmem:[%s1747 + $0x28] sm:$0xe]
      %v2204 = vld [vmem:[%s1747 + $0x30] sm:$0xe]
      %v2205 = vld [vmem:[%s1747 + $0x38] sm:$0xe]
      %v2222 = vrot.slane %v2198, 5
      %v2223 = vrot.slane %v2222, 4
      %v2224 = vrot.slane %v1918, 5
      %v2225 = vsel %vm902, %v2223, %v2224
      %v2226 = vrot.slane %v2199, 5
      %v2227 = vrot.slane %v2226, 4
      %v2228 = vrot.slane %v1920, 5
      %v2229 = vsel %vm902, %v2227, %v2228
      %v2230 = vrot.slane %v2200, 5
      %v2231 = vrot.slane %v2230, 4
      %v2232 = vrot.slane %v1922, 5
      %v2233 = vsel %vm902, %v2231, %v2232
      %v2234 = vrot.slane %v2201, 5
      %v2235 = vrot.slane %v2234, 4
      %v2236 = vrot.slane %v1924, 5
      %v2237 = vsel %vm902, %v2235, %v2236
      %v2238 = vrot.slane %v2202, 5
      %v2239 = vrot.slane %v2238, 4
      %v2240 = vrot.slane %v1926, 5
      %v2241 = vsel %vm902, %v2239, %v2240
      %v2242 = vrot.slane %v2203, 5
      %v2243 = vrot.slane %v2242, 4
      %v2244 = vrot.slane %v1928, 5
      %v2245 = vsel %vm902, %v2243, %v2244
      %v2246 = vrot.slane %v2204, 5
      %v2247 = vrot.slane %v2246, 4
      %v2248 = vrot.slane %v1930, 5
      %v2249 = vsel %vm902, %v2247, %v2248
      %v2250 = vrot.slane %v2205, 5
      %v2251 = vrot.slane %v2250, 4
      %v2252 = vrot.slane %v1932, 5
      %v2253 = vsel %vm902, %v2251, %v2252
      %v2254 = vld [vmem:[%s2 + $0x200] sm:$0xf]
      %v2255 = vld [vmem:[%s2 + $0x204] sm:$0xf]
      %v2256 = vld [vmem:[%s2 + $0x208] sm:$0xf]
      %v2257 = vld [vmem:[%s2 + $0x20c] sm:$0xf]
      %v2258 = vld [vmem:[%s2 + $0x210] sm:$0xf]
      %v2259 = vld [vmem:[%s2 + $0x214] sm:$0xf]
      %v2260 = vld [vmem:[%s2 + $0x218] sm:$0xf]
      %v2261 = vld [vmem:[%s2 + $0x21c] sm:$0xf]
      %v2262 = vld [vmem:[%s2 + $0x220] sm:$0xf]
      %v2263 = vld [vmem:[%s2 + $0x224] sm:$0xf]
      %v2264 = vld [vmem:[%s2 + $0x228] sm:$0xf]
      %v2265 = vld [vmem:[%s2 + $0x22c] sm:$0xf]
      %v2266 = vld [vmem:[%s2 + $0x230] sm:$0xf]
      %v2267 = vld [vmem:[%s2 + $0x234] sm:$0xf]
      %v2268 = vld [vmem:[%s2 + $0x238] sm:$0xf]
      %v2269 = vld [vmem:[%s2 + $0x23c] sm:$0xf]
      %v2270 = vunpack.c.l.b16 %v2225
      %v2271 = vunpack.c.l.b16 %v2229
      %v2272 = vunpack.c.l.b16 %v2233
      %v2273 = vunpack.c.l.b16 %v2237
      %v2274 = vunpack.c.l.b16 %v2241
      %v2275 = vunpack.c.l.b16 %v2245
      %v2276 = vunpack.c.l.b16 %v2249
      %v2277 = vunpack.c.l.b16 %v2253
      %v2278 = vpack.c.b16 %v2271, %v2270
      %v2279 = vpack.c.b16 %v2273, %v2272
      %v2280 = vpack.c.b16 %v2275, %v2274
      %v2281 = vpack.c.b16 %v2277, %v2276
      %v2302 = vunpack.c.l.b16 %v2254
      %v2303 = vunpack.c.l.b16 %v2255
      %v2304 = vunpack.c.l.b16 %v2256
      %v2305 = vunpack.c.l.b16 %v2257
      %v2306 = vunpack.c.l.b16 %v2258
      %v2307 = vunpack.c.l.b16 %v2259
      %v2308 = vunpack.c.l.b16 %v2260
      %v2309 = vunpack.c.l.b16 %v2261
      %v2310 = vunpack.c.l.b16 %v2262
      %v2311 = vunpack.c.l.b16 %v2263
      %v2312 = vunpack.c.l.b16 %v2264
      %v2313 = vunpack.c.l.b16 %v2265
      %v2314 = vunpack.c.l.b16 %v2266
      %v2315 = vunpack.c.l.b16 %v2267
      %v2316 = vunpack.c.l.b16 %v2268
      %v2317 = vunpack.c.l.b16 %v2269
      %v2318 = vpack.c.b16 %v2303, %v2302
      %v2319 = vpack.c.b16 %v2305, %v2304
      %v2320 = vpack.c.b16 %v2307, %v2306
      %v2321 = vpack.c.b16 %v2309, %v2308
      %v2322 = vpack.c.b16 %v2311, %v2310
      %v2323 = vpack.c.b16 %v2313, %v2312
      %v2324 = vpack.c.b16 %v2315, %v2314
      %v2325 = vpack.c.b16 %v2317, %v2316
      %2334 = vmatprep.subr.bf16.mxu0 0
      %2335 = vmatpush1.bf16.msra.mxu0 %v2318
      %2336 = vmatprep.subr.bf16.mxu0 0
      %2337 = vmatpush1.bf16.msra.mxu0 %v2319
      %2338 = vmatprep.subr.bf16.mxu0 0
      %2339 = vmatpush1.bf16.msra.mxu0 %v2320
      %2340 = vmatprep.subr.bf16.mxu0 0
      %2341 = vmatpush1.bf16.msra.mxu0 %v2321
      %2342 = vmatprep.subr.bf16.mxu0 0
      %2343 = vmatpush1.bf16.msra.mxu0 %v2322
      %2344 = vmatprep.subr.bf16.mxu0 0
      %2345 = vmatpush1.bf16.msra.mxu0 %v2323
      %2346 = vmatprep.subr.bf16.mxu0 0
      %2347 = vmatpush1.bf16.msra.mxu0 %v2324
      %2348 = vmatprep.subr.bf16.mxu0 0
      %2349 = vmatpush1.bf16.msra.mxu0 %v2325
      %2350 = vmatprep.subr.bf16.mxu0 0
      %2351 = vmatpush1.bf16.msra.mxu0 0
      %2352 = vmatprep.subr.bf16.mxu0 0
      %2353 = vmatpush1.bf16.msra.mxu0 0
      %2354 = vmatprep.subr.bf16.mxu0 0
      %2355 = vmatpush1.bf16.msra.mxu0 0
      %2356 = vmatprep.subr.bf16.mxu0 0
      %2357 = vmatpush1.bf16.msra.mxu0 0
      %2358 = vmatprep.subr.bf16.mxu0 0
      %2359 = vmatpush1.bf16.msra.mxu0 0
      %2360 = vmatprep.subr.bf16.mxu0 0
      %2361 = vmatpush1.bf16.msra.mxu0 0
      %2362 = vmatprep.subr.bf16.mxu0 0
      %2363 = vmatpush1.bf16.msra.mxu0 0
      %2364 = vmatprep.subr.bf16.mxu0 0
      %2365 = vmatpush1.bf16.msra.mxu0 0
      %2366 = vmatprep.mubr.bf16.mxu0 0
      %2367 = vmatmul.mubr.bf16.gmra.mrb[0].mxu0 %v2278
      %v2368 = vpop.f32.mrb[0].mxu0
      %v2369 = vadd.f32 0.0, %v2368
      %v2370 = vpop.f32.mrb[0].mxu0
      %v2371 = vpop.f32.mrb[0].mxu0
      %v2372 = vadd.f32 0.0, %v2371
      %v2373 = vpop.f32.mrb[0].mxu0
      %2374 = vmatprep.mubr.bf16.mxu0 0
      %2375 = vmatmul.mubr.bf16.gmra.mrb[0].mxu0 %v2279
      %v2376 = vpop.f32.mrb[0].mxu0
      %v2377 = vadd.f32 0.0, %v2376
      %v2378 = vpop.f32.mrb[0].mxu0
      %v2379 = vpop.f32.mrb[0].mxu0
      %v2380 = vadd.f32 0.0, %v2379
      %v2381 = vpop.f32.mrb[0].mxu0
      %2382 = vmatprep.mubr.bf16.mxu0 0
      %2383 = vmatmul.mubr.bf16.gmra.mrb[0].mxu0 %v2280
      %v2384 = vpop.f32.mrb[0].mxu0
      %v2385 = vadd.f32 0.0, %v2384
      %v2386 = vpop.f32.mrb[0].mxu0
      %v2387 = vpop.f32.mrb[0].mxu0
      %v2388 = vadd.f32 0.0, %v2387
      %v2389 = vpop.f32.mrb[0].mxu0
      %2390 = vmatprep.mubr.bf16.mxu0 0
      %2391 = vmatmul.mubr.bf16.gmra.mrb[0].mxu0 %v2281
      %v2392 = vpop.f32.mrb[0].mxu0
      %v2393 = vadd.f32 0.0, %v2392
      %v2394 = vpop.f32.mrb[0].mxu0
      %v2395 = vpop.f32.mrb[0].mxu0
      %v2396 = vadd.f32 0.0, %v2395
      %v2397 = vpop.f32.mrb[0].mxu0
      %2398 = vdwg.mxu0
      %v2399 = vadd.f32 %v2190, %v2369
      %v2400 = vadd.f32 %v2191, %v2372
      %v2401 = vadd.f32 %v2192, %v2377
      %v2402 = vadd.f32 %v2193, %v2380
      %v2403 = vadd.f32 %v2194, %v2385
      %v2404 = vadd.f32 %v2195, %v2388
      %v2405 = vadd.f32 %v2196, %v2393
      %v2406 = vadd.f32 %v2197, %v2396
      %v2407 = vpack.c.bf16 %v2400, %v2399
      %v2408 = vpack.c.bf16 %v2402, %v2401
      %v2409 = vpack.c.bf16 %v2404, %v2403
      %v2410 = vpack.c.bf16 %v2406, %v2405
      %v2415 = vunpack.c.l.b16 %v2407
      %v2416 = vunpack.c.h.b16 %v2407
      %v2417 = vunpack.c.l.b16 %v2408
      %v2418 = vunpack.c.h.b16 %v2408
      %v2419 = vunpack.c.l.b16 %v2409
      %v2420 = vunpack.c.h.b16 %v2409
      %v2421 = vunpack.c.l.b16 %v2410
      %v2422 = vunpack.c.h.b16 %v2410
      %v2423 = vpack.c.b16 %v2415, %v2415
      %v2424 = vpack.c.b16 %v2416, %v2416
      %v2425 = vpack.c.b16 %v2417, %v2417
      %v2426 = vpack.c.b16 %v2418, %v2418
      %v2427 = vpack.c.b16 %v2419, %v2419
      %v2428 = vpack.c.b16 %v2420, %v2420
      %v2429 = vpack.c.b16 %v2421, %v2421
      %v2430 = vpack.c.b16 %v2422, %v2422
      %2439 = vst [vmem:[%s204] sm:$0xf] %v2423
      %2440 = vst [vmem:[%s204 + $0x4] sm:$0xf] %v2424
      %2441 = vst [vmem:[%s204 + $0x8] sm:$0xf] %v2425
      %2442 = vst [vmem:[%s204 + $0xc] sm:$0xf] %v2426
      %2443 = vst [vmem:[%s204 + $0x10] sm:$0xf] %v2427
      %2444 = vst [vmem:[%s204 + $0x14] sm:$0xf] %v2428
      %2445 = vst [vmem:[%s204 + $0x18] sm:$0xf] %v2429
      %2446 = vst [vmem:[%s204 + $0x1c] sm:$0xf] %v2430
      %v2447 = vadd.f32 %v2399, %v2400
      %v2448 = vadd.f32 %v2447, %v2401
      %v2449 = vadd.f32 %v2448, %v2402
      %v2450 = vadd.f32 %v2449, %v2403
      %v2451 = vadd.f32 %v2450, %v2404
      %v2452 = vadd.f32 %v2451, %v2405
      %v2453 = vadd.f32 %v2452, %v2406
      %v2454 = vrot.slane %v2453, 4
      %v2455 = vadd.f32 %v2453, %v2454
      %v2456 = vrot.slane %v2455, 2
      %v2457 = vadd.f32 %v2455, %v2456
      %v2458 = vrot.slane %v2457, 1
      %v2459 = vadd.f32 %v2457, %v2458
      %2460 = vst [vmem:[%s208] sm:$0x1] %v2459
      %v2461 = vmul.f32 %v2399, %v2399
      %v2462 = vmul.f32 %v2400, %v2400
      %v2463 = vmul.f32 %v2401, %v2401
      %v2464 = vmul.f32 %v2402, %v2402
      %v2465 = vmul.f32 %v2403, %v2403
      %v2466 = vmul.f32 %v2404, %v2404
      %v2467 = vmul.f32 %v2405, %v2405
      %v2468 = vmul.f32 %v2406, %v2406
      %v2469 = vadd.f32 %v2461, %v2462
      %v2470 = vadd.f32 %v2469, %v2463
      %v2471 = vadd.f32 %v2470, %v2464
      %v2472 = vadd.f32 %v2471, %v2465
      %v2473 = vadd.f32 %v2472, %v2466
      %v2474 = vadd.f32 %v2473, %v2467
      %v2475 = vadd.f32 %v2474, %v2468
      %v2476 = vrot.slane %v2475, 4
      %v2477 = vadd.f32 %v2475, %v2476
      %v2478 = vrot.slane %v2477, 2
      %v2479 = vadd.f32 %v2477, %v2478
      %v2480 = vrot.slane %v2479, 1
      %v2481 = vadd.f32 %v2479, %v2480
      %2482 = vst [vmem:[%s208 + $0x1] sm:$0x1] %v2481
      %p2483 = scmp.lt.s32.totalorder %s16, 1
      %s2484 = scalar_select %p2483, %s16, 1
      %s2485 = smul.addr %s2484, 8
      %s2486 = smul.addr %s2485, 4
      %s2487 = scalar_lea.vmem %s3, %s2486
      %p2488 = scmp.lt.s32.totalorder %s16, 1
      %s2489 = scalar_select %p2488, %s16, 1
      %s2490 = smul.addr %s2489, 2
      %s2491 = scalar_lea.vmem %s4, %s2490
      // Predicated region
      $region33: #{basic_block_sparse_forward.8} parent=31 // pred_check
        %p2492 = pneg %p102
      $region34: #{basic_block_sparse_forward.8} parent=31 // pred_check_branch
        %2494 = sbr.rel (%p2492) target = $region36
      $region35: #{basic_block_sparse_forward.8} parent=31 // pred_region
        _
      $region36: #{basic_block_sparse_forward.8} parent=31 // pred_fallthru
        _
      // Predicated region
      $region37: #{basic_block_sparse_forward.8} parent=31 // pred_check
        %p2495 = pneg %p128
      $region38: #{basic_block_sparse_forward.8} parent=31 // pred_check_branch
        %2497 = sbr.rel (%p2495) target = $region40
      $region39: #{basic_block_sparse_forward.8} parent=31 // pred_region
        _
      $region40: #{basic_block_sparse_forward.8} parent=31 // pred_fallthru
        _
    $region32: #{basic_block_sparse_forward.8} parent=5 // pred_fallthru
      _
    %p2498 = scmp.le.s32.totalorder 2, %s11
    // Predicated region
    $region41: #{basic_block_sparse_forward.8} parent=5 // pred_check
      %p2499 = pneg %p2498
    $region42: #{basic_block_sparse_forward.8} parent=5 // pred_check_branch
      %2501 = sbr.rel (%p2499) target = $region44
    $region43: #{basic_block_sparse_forward.8} parent=5 // pred_region
      %s2502 = ssub.s32 %s11, 2
      // Predicated region
      $region45: #{basic_block_sparse_forward.8} parent=43 // pred_check
        %p2503 = pneg %p108
      $region46: #{basic_block_sparse_forward.8} parent=43 // pred_check_branch
        %2505 = sbr.rel (%p2503) target = $region48
      $region47: #{basic_block_sparse_forward.8} parent=43 // pred_region
        %p2506 = scmp.lt.s32.totalorder %s17, 1
        %s2507 = scalar_select %p2506, %s17, 1
        %s2508 = smul.addr %s2507, 8
        %s2509 = smul.addr %s2508, 4
        %s2510 = scalar_lea.vmem %s3, %s2509
      $region48: #{basic_block_sparse_forward.8} parent=43 // pred_fallthru
        _
      // Predicated region
      $region49: #{basic_block_sparse_forward.8} parent=43 // pred_check
        %p2511 = pneg %p134
      $region50: #{basic_block_sparse_forward.8} parent=43 // pred_check_branch
        %2513 = sbr.rel (%p2511) target = $region52
      $region51: #{basic_block_sparse_forward.8} parent=43 // pred_region
        %p2514 = scmp.lt.s32.totalorder %s17, 1
        %s2515 = scalar_select %p2514, %s17, 1
        %s2516 = smul.addr %s2515, 2
        %s2517 = scalar_lea.vmem %s4, %s2516
      $region52: #{basic_block_sparse_forward.8} parent=43 // pred_fallthru
        _
    $region44: #{basic_block_sparse_forward.8} parent=5 // pred_fallthru
      _
  $region6: #{basic_block_sparse_forward.8} parent=0 // loop_footer
    %s15 = sadd.s32 1, %s11
  $region7: #{basic_block_sparse_forward.8} parent=0 // loop_footer_branch
    %10 = sbr.rel target = $region3
  $region8: #{basic_block_sparse_forward.8} parent=0 // loop_exit
    _

</llo_original>
